<compile_context>
chip_gen: v6e
topology: v6e:2x2x1
jax: 0.10.0
libtpu: 0.0.40
codegen_flags: <defaults>
</compile_context>

<pallas_src>
import math

import numpy as np
import jax
import jax.numpy as jnp
from jax.experimental import pallas as pl
from jax.experimental.pallas import tpu as pltpu

EPS = 1e-5  # nn.LayerNorm default


# ---------------- sincos positional embedding (numpy, same as reference) -----
def get_1d_sincos_pos_embed_from_grid(embed_dim, pos):
    assert embed_dim % 2 == 0
    omega = np.arange(embed_dim // 2, dtype=np.float32)
    omega /= embed_dim / 2.0
    omega = 1.0 / 10000 ** omega
    pos = pos.reshape(-1)
    out = np.einsum('m,d->md', pos, omega)
    return np.concatenate([np.sin(out), np.cos(out)], axis=1)


def get_2d_sincos_pos_embed_from_grid(embed_dim, grid):
    assert embed_dim % 2 == 0
    emb_h = get_1d_sincos_pos_embed_from_grid(embed_dim // 2, grid[0])
    emb_w = get_1d_sincos_pos_embed_from_grid(embed_dim // 2, grid[1])
    return np.concatenate([emb_h, emb_w], axis=1)


def get_2d_sincos_pos_embed(embed_dim, grid_size):
    grid_h = np.arange(grid_size, dtype=np.float32)
    grid_w = np.arange(grid_size, dtype=np.float32)
    grid = np.meshgrid(grid_w, grid_h)
    grid = np.stack(grid, axis=0).reshape([2, 1, grid_size, grid_size])
    return get_2d_sincos_pos_embed_from_grid(embed_dim, grid)


def get_abs_pos(pos_embed, tgt_len):
    """JAX analogue of the module's get_abs_pos (batch-invariant, wrapper-side).

    TODO(synk): jax.image.resize 'bicubic' is not bit-identical to
    torch F.interpolate(mode='bicubic', align_corners=False).
    """
    src = int(math.sqrt(pos_embed.shape[0]))
    tgt = int(math.sqrt(tgt_len))
    if src == tgt:
        return pos_embed
    p = pos_embed.reshape(1, src, src, -1).astype(jnp.float32)
    p = jax.image.resize(p, (1, tgt, tgt, p.shape[-1]), method="bicubic")
    return p.reshape(tgt * tgt, -1)


def _layer_norm(x, gamma, beta):
    mu = jnp.mean(x, axis=-1, keepdims=True)
    var = jnp.mean(jnp.square(x - mu), axis=-1, keepdims=True)
    return (x - mu) * jax.lax.rsqrt(var + EPS) * gamma + beta


def _pick_block_batch(B, L, target_rows=128):
    """Batch elements folded into one grid step.

    Smallest divisor of B giving >= target_rows MXU rows per step (amortizes
    the ~0.35us/step pipeline overhead, fills 8x128 tiles), while keeping the
    grid >= 2 whenever B >= 2 so the 'parallel' axis feeds both v7x cores.
    """
    divisors = [d for d in range(1, B + 1) if B % d == 0]
    if B >= 2:
        divisors = [d for d in divisors if B // d >= 2]
    for d in divisors:
        if d * L >= target_rows:
            return d
    return divisors[-1]


# ---------------------------- Pallas kernel ----------------------------------
def _make_resampler_kernel(compute_dtype, approx_recip):
    cdt = compute_dtype

    def kernel(x_ref, kvw_ref, g_ref, beta_ref, q_ref, wkv_ref, kpos_ref,
               bv_ref, wo_ref, bo_ref, o_ref):
        # Blocks: x (Bt, L, KV); kvw (KV, D); q (H, Lq, dh) pre-scaled;
        #         wkv (D, 2D); kpos (L, D); bv (1, D); wo (H, dh, D);
        #         bo (1, D); out (Bt, Lq, D).
        Bt, L, KV = x_ref.shape
        H, Lq, dh = q_ref.shape
        D = H * dh

        # ---- kv_proj: ONE flat matmul over all Bt*L rows (f32 MXU acc) ----
        xf = x_ref[...].reshape(Bt * L, KV)            # leading-dim merge (free)
        kv = jnp.dot(xf, kvw_ref[...],
                     preferred_element_type=jnp.float32)          # (Bt*L, D)

        # ---- ln_kv (f32) ----
        mu = jnp.mean(kv, axis=-1, keepdims=True)
        var = jnp.mean(jnp.square(kv - mu), axis=-1, keepdims=True)
        kv = (kv - mu) * jax.lax.rsqrt(var + EPS) * g_ref[...] + beta_ref[...]

        # ---- K|V in-projection: ONE wide matmul (Bt*L, D) @ (D, 2D) ----
        kv2 = jnp.dot(kv.astype(cdt), wkv_ref[...],
                      preferred_element_type=jnp.float32)         # (Bt*L, 2D)
        kv2 = kv2.reshape(Bt, L, 2 * D)                # leading-dim split (free)
        # kpos already holds pos_embed @ Wk + bk; V-side bias is plain bv.
        # Both are broadcast-added here (no (H, L, 2dh) bias block shipped).
        k = (kv2[..., :D] + kpos_ref[...]).astype(cdt)            # (Bt, L, D)
        v = (kv2[..., D:] + bv_ref[...]).astype(cdt)              # (Bt, L, D)

        q = q_ref[...]                         # (H, Lq, dh), pre-scaled by rsqrt(dh)
        merge_heads_on_lanes = (dh % 128 == 0)
        if merge_heads_on_lanes:
            wo_flat = wo_ref[...].reshape(D, D)        # leading-dim merge (free)

        for b in range(Bt):                    # Bt is a small static constant
            # Per-head lane slices -> (H, L, dh); tile-aligned when dh % 128 == 0.
            kh = jnp.stack([k[b, :, h * dh:(h + 1) * dh] for h in range(H)], 0)
            vh = jnp.stack([v[b, :, h * dh:(h + 1) * dh] for h in range(H)], 0)

            # ---- head-batched attention; softmax in f32 ----
            s = jnp.einsum('hqd,hkd->hqk', q, kh,
                           preferred_element_type=jnp.float32)    # (H, Lq, L)
            s = s - jnp.max(s, axis=-1, keepdims=True)
            p = jnp.exp(s)
            denom = jnp.sum(p, axis=-1, keepdims=True)
            if approx_recip:
                p = p * pl.reciprocal(denom, approx=True)         # EUP slot
            else:
                p = p / denom                                     # exact path
            o = jnp.einsum('hqk,hkd->hqd', p.astype(cdt), vh,
                           preferred_element_type=jnp.float32)    # (H, Lq, dh)

            # ---- output projection ----
            if merge_heads_on_lanes:
                # Merge heads back onto lanes (tile-aligned), then ONE
                # (Lq, D) @ (D, D) matmul with full-D MXU contraction.
                o_flat = jnp.concatenate([o[h] for h in range(H)], axis=-1)
                out = jnp.dot(o_flat.astype(cdt), wo_flat,
                              preferred_element_type=jnp.float32)
            else:
                # dh < 128 (test-sized heads): avoid an unaligned lane concat;
                # accumulate per-head partial projections in place -- still no
                # (H, Lq, D) intermediate and no head-sum pass over it.
                out = jnp.dot(o[0].astype(cdt), wo_ref[0],
                              preferred_element_type=jnp.float32)
                for h in range(1, H):
                    out = out + jnp.dot(o[h].astype(cdt), wo_ref[h],
                                        preferred_element_type=jnp.float32)
            out = out + bo_ref[...]                               # (Lq, D)
            o_ref[b] = out.astype(o_ref.dtype)

    return kernel


def resampler_forward(x, params, num_heads, *, compute_dtype=jnp.float32,
                      approx_softmax_recip=None, single_buffer_weights=True):
    """x: (B, L, kv_dim) -> (B, num_queries, embed_dim) float32.

    params = (query, kv_w, ln_kv_g, ln_kv_b, ln_q_g, ln_q_b, pos_embed,
              wq, bq, wk, bk, wv, bv, wo, bo), all in y = x @ W + b layout.
    """
    # TODO(synk): attn_mask of nn.MultiheadAttention is not implemented (the
    # resampler is used without a mask here).
    (query, kv_w, ln_kv_g, ln_kv_b, ln_q_g, ln_q_b, pos_embed,
     wq, bq, wk, bk, wv, bv, wo, bo) = params
    B, L, KV = x.shape
    Lq, D = query.shape
    H = num_heads
    assert D % H == 0, "embed_dim must be divisible by num_heads"
    dh = D // H

    f32 = jnp.float32
    cdt = compute_dtype
    if approx_softmax_recip is None:
        approx_softmax_recip = (cdt != jnp.float32)
    scale = 1.0 / math.sqrt(dh)

    # -------- batch-invariant glue, hoisted out of the kernel (done once) ----
    # Key positional embedding (bicubically resized when L != pos rows).
    pos_k = get_abs_pos(pos_embed, L)
    assert pos_k.shape[0] == L, "L must match the (resized) pos_embed rows"

    # Q path: ln_q + pos embed + Wq/bq + 1/sqrt(dh), reshaped per head.
    q_ln = _layer_norm(query.astype(f32), ln_q_g, ln_q_b)
    q_proj = ((q_ln + pos_embed) @ wq + bq) * scale                 # (Lq, D)
    q3 = q_proj.reshape(Lq, H, dh).transpose(1, 0, 2)               # (H, Lq, dh)

    # Flat fused K|V weight (D, 2D): columns [Wk | Wv] in natural head order.
    wkv = jnp.concatenate([wk, wv], axis=1)                         # (D, 2D)
    # K-side additive bias with the positional term folded in; V-side bias bv.
    kpos = (pos_k @ wk + bk).astype(f32)                            # (L, D)
    bv_r = jnp.reshape(bv, (1, D)).astype(f32)
    # Per-head rows of Wo; the kernel flattens it back to (D, D) for free.
    wo3 = wo.reshape(H, dh, D)

    # Matmul operands in compute_dtype (bf16 recommended on v5e/v6e/v7x:
    # halves weight DMA/VMEM, f32 MXU accumulation). LN/softmax/bias stay f32.
    x_c = x.astype(cdt)
    kvw_c = kv_w.astype(cdt)
    q3_c = q3.astype(cdt)
    wkv_c = wkv.astype(cdt)
    wo3_c = wo3.astype(cdt)
    ln_g = jnp.reshape(ln_kv_g, (1, D)).astype(f32)
    ln_b = jnp.reshape(ln_kv_b, (1, D)).astype(f32)
    bo_r = jnp.reshape(bo, (1, D)).astype(f32)

    Bt = _pick_block_batch(B, L)
    grid = (B // Bt,)
    kernel = _make_resampler_kernel(cdt, approx_softmax_recip)

    def build(single_buffer):
        def const_spec(shape):
            kw = {}
            if single_buffer:
                # Constant index map -> double-buffering is pure VMEM waste.
                kw["pipeline_mode"] = pl.Buffered(1)
            return pl.BlockSpec(shape, lambda b: (0,) * len(shape), **kw)

        in_specs = [
            pl.BlockSpec((Bt, L, KV), lambda b: (b, 0, 0)),  # x
            const_spec((KV, D)),                             # kv_proj weight
            const_spec((1, D)), const_spec((1, D)),          # ln_kv gamma/beta
            const_spec((H, Lq, dh)),                         # pre-scaled Q
            const_spec((D, 2 * D)),                          # fused [Wk|Wv]
            const_spec((L, D)),                              # K bias (pos@Wk+bk)
            const_spec((1, D)),                              # V bias bv
            const_spec((H, dh, D)),                          # Wo (per-head rows)
            const_spec((1, D)),                              # bo
        ]
        out_spec = pl.BlockSpec((Bt, Lq, D), lambda b: (b, 0, 0))
        return pl.pallas_call(
            kernel,
            out_shape=jax.ShapeDtypeStruct((B, Lq, D), jnp.float32),
            grid=grid,
            in_specs=in_specs,
            out_specs=out_spec,
            compiler_params=pltpu.CompilerParams(
                dimension_semantics=("parallel",)),
        )

    args = (x_c, kvw_c, ln_g, ln_b, q3_c, wkv_c, kpos, bv_r, wo3_c, bo_r)
    if not single_buffer_weights:
        return build(False)(*args)
    try:
        return build(True)(*args)
    except Exception:
        # Fallback for JAX versions without BlockSpec.pipeline_mode /
        # Buffered(1): default double-buffered weight blocks, same numerics.
        return build(False)(*args)


# ---------------------------- pure-JAX reference ------------------------------
def reference_forward(x, params, num_heads):
    (query, kv_w, ln_kv_g, ln_kv_b, ln_q_g, ln_q_b, pos_embed,
     wq, bq, wk, bk, wv, bv, wo, bo) = params
    kv = jnp.einsum('blk,kd->bld', x, kv_w)
    kv = _layer_norm(kv, ln_kv_g, ln_kv_b)
    k_in = kv + pos_embed[None]
    v_in = kv
    q_in = _layer_norm(query, ln_q_g, ln_q_b) + pos_embed
    q = q_in @ wq + bq
    k = jnp.einsum('bld,de->ble', k_in, wk) + bk
    v = jnp.einsum('bld,de->ble', v_in, wv) + bv
    B, L, D = k.shape
    Lq = q.shape[0]
    H, dh = num_heads, D // num_heads
    qh = q.reshape(Lq, H, dh)
    kh = k.reshape(B, L, H, dh)
    vh = v.reshape(B, L, H, dh)
    s = jnp.einsum('qhd,blhd->bhql', qh, kh) / math.sqrt(dh)
    p = jax.nn.softmax(s, axis=-1)
    o = jnp.einsum('bhql,blhd->bqhd', p, vh).reshape(B, Lq, D)
    return jnp.einsum('bqd,de->bqe', o, wo) + bo


# ------------------------------------ main ------------------------------------
if __name__ == "__main__":
    grid_size = 4
    embed_dim = 32
    num_heads = 4
    kv_dim = 48
    batch = 2

    num_queries = grid_size ** 2          # 16 learned queries
    L = grid_size ** 2                    # source seq len (identity pos path)

    key = jax.random.PRNGKey(0)
    ks = jax.random.split(key, 12)

    # Parameters (deterministic synthetic init; shapes follow the module).
    query = 0.02 * jax.random.normal(ks[0], (num_queries, embed_dim), jnp.float32)
    kv_w = 0.02 * jax.random.normal(ks[1], (kv_dim, embed_dim), jnp.float32)   # x @ W
    ln_kv_g = jnp.ones((embed_dim,), jnp.float32)
    ln_kv_b = jnp.zeros((embed_dim,), jnp.float32)
    ln_q_g = jnp.ones((embed_dim,), jnp.float32)
    ln_q_b = jnp.zeros((embed_dim,), jnp.float32)

    sc = 1.0 / math.sqrt(embed_dim)
    wq = sc * jax.random.normal(ks[2], (embed_dim, embed_dim), jnp.float32)
    wk = sc * jax.random.normal(ks[3], (embed_dim, embed_dim), jnp.float32)
    wv = sc * jax.random.normal(ks[4], (embed_dim, embed_dim), jnp.float32)
    wo = sc * jax.random.normal(ks[5], (embed_dim, embed_dim), jnp.float32)
    bq = 0.01 * jax.random.normal(ks[6], (embed_dim,), jnp.float32)
    bk = 0.01 * jax.random.normal(ks[7], (embed_dim,), jnp.float32)
    bv = 0.01 * jax.random.normal(ks[8], (embed_dim,), jnp.float32)
    bo = 0.01 * jax.random.normal(ks[9], (embed_dim,), jnp.float32)

    pos_embed = jnp.asarray(get_2d_sincos_pos_embed(embed_dim, grid_size),
                            dtype=jnp.float32)                          # (L, D)

    params = (query, kv_w, ln_kv_g, ln_kv_b, ln_q_g, ln_q_b, pos_embed,
              wq, bq, wk, bk, wv, bv, wo, bo)

    # Input: (B, L, kv_dim)
    x = jax.random.normal(ks[10], (batch, L, kv_dim), jnp.float32)

    ref = reference_forward(x, params, num_heads)

    # f32 matmul operands, exact softmax reciprocal.
    out_f32 = jax.block_until_ready(resampler_forward(x, params, num_heads))
    assert out_f32.shape == (batch, num_queries, embed_dim)
    np.testing.assert_allclose(np.asarray(out_f32), np.asarray(ref),
                               rtol=5e-3, atol=5e-3)

    # bf16 matmul operands with f32 accumulation + EUP approx reciprocal
    # (recommended fast path on v5e / v6e / v7x).
    out_bf16 = jax.block_until_ready(
        resampler_forward(x, params, num_heads, compute_dtype=jnp.bfloat16))
    np.testing.assert_allclose(np.asarray(out_bf16), np.asarray(ref),
                               rtol=5e-2, atol=5e-2)

    print("KERNEL_OK")
</pallas_src>

<mosaic_0001>
module attributes {stable_mosaic.version = 11 : i64} {
  func.func @kernel(%arg0: i32, %arg1: memref<1x16x48xf32, #tpu.memory_space<vmem>>, %arg2: memref<48x32xf32, #tpu.memory_space<vmem>>, %arg3: memref<1x32xf32, #tpu.memory_space<vmem>>, %arg4: memref<1x32xf32, #tpu.memory_space<vmem>>, %arg5: memref<4x16x8xf32, #tpu.memory_space<vmem>>, %arg6: memref<32x64xf32, #tpu.memory_space<vmem>>, %arg7: memref<16x32xf32, #tpu.memory_space<vmem>>, %arg8: memref<1x32xf32, #tpu.memory_space<vmem>>, %arg9: memref<4x8x32xf32, #tpu.memory_space<vmem>>, %arg10: memref<1x32xf32, #tpu.memory_space<vmem>>, %arg11: memref<1x16x32xf32, #tpu.memory_space<vmem>>) attributes {dimension_semantics = [#tpu.dimension_semantics<parallel>], iteration_bounds = array<i64: 2>, scalar_prefetch = 0 : i64, scratch_operands = 0 : i64, tpu.core_type = #tpu.core_type<tc>, window_params = [{transform_indices = @transform_0, window_bounds = array<i64: 1, 16, 48>}, {pipeline_mode = #tpu.pipeline_mode<synchronous>, transform_indices = @transform_1, window_bounds = array<i64: 48, 32>}, {pipeline_mode = #tpu.pipeline_mode<synchronous>, transform_indices = @transform_2, window_bounds = array<i64: 1, 32>}, {pipeline_mode = #tpu.pipeline_mode<synchronous>, transform_indices = @transform_3, window_bounds = array<i64: 1, 32>}, {pipeline_mode = #tpu.pipeline_mode<synchronous>, transform_indices = @transform_4, window_bounds = array<i64: 4, 16, 8>}, {pipeline_mode = #tpu.pipeline_mode<synchronous>, transform_indices = @transform_5, window_bounds = array<i64: 32, 64>}, {pipeline_mode = #tpu.pipeline_mode<synchronous>, transform_indices = @transform_6, window_bounds = array<i64: 16, 32>}, {pipeline_mode = #tpu.pipeline_mode<synchronous>, transform_indices = @transform_7, window_bounds = array<i64: 1, 32>}, {pipeline_mode = #tpu.pipeline_mode<synchronous>, transform_indices = @transform_8, window_bounds = array<i64: 4, 8, 32>}, {pipeline_mode = #tpu.pipeline_mode<synchronous>, transform_indices = @transform_9, window_bounds = array<i64: 1, 32>}, {transform_indices = @transform_10, window_bounds = array<i64: 1, 16, 32>}]} {
    %c0 = arith.constant 0 : index
    %c0_0 = arith.constant 0 : index
    %c0_1 = arith.constant 0 : index
    %0 = vector.load %arg1[%c0, %c0_0, %c0_1] : memref<1x16x48xf32, #tpu.memory_space<vmem>>, vector<1x16x48xf32>
    %1 = vector.shape_cast %0 : vector<1x16x48xf32> to vector<16x48xf32>
    %c0_2 = arith.constant 0 : index
    %c0_3 = arith.constant 0 : index
    %2 = vector.load %arg2[%c0_2, %c0_3] : memref<48x32xf32, #tpu.memory_space<vmem>>, vector<48x32xf32>
    %cst = arith.constant dense<0.000000e+00> : vector<16x32xf32>
    %3 = tpu.matmul %1, %2, %cst {dimension_numbers = #tpu.dot_dimension_numbers<[1], [0], [0], [1], [0, 0, 1, 1], [], []>} : vector<16x48xf32>, vector<48x32xf32>, vector<16x32xf32> -> vector<16x32xf32>
    %cst_4 = arith.constant dense<0.000000e+00> : vector<16xf32>
    %4 = vector.multi_reduction <add>, %3, %cst_4 [1] : vector<16x32xf32> to vector<16xf32>
    %5 = vector.shape_cast %4 : vector<16xf32> to vector<16x1xf32>
    %cst_5 = arith.constant 3.200000e+01 : f32
    %6 = vector.broadcast %cst_5 : f32 to vector<16x1xf32>
    %7 = arith.divf %5, %6 : vector<16x1xf32>
    %8 = vector.broadcast %7 : vector<16x1xf32> to vector<16x32xf32>
    %9 = arith.subf %3, %8 : vector<16x32xf32>
    %10 = arith.mulf %9, %9 : vector<16x32xf32>
    %cst_6 = arith.constant dense<0.000000e+00> : vector<16xf32>
    %11 = vector.multi_reduction <add>, %10, %cst_6 [1] : vector<16x32xf32> to vector<16xf32>
    %12 = vector.shape_cast %11 : vector<16xf32> to vector<16x1xf32>
    %cst_7 = arith.constant 3.200000e+01 : f32
    %13 = vector.broadcast %cst_7 : f32 to vector<16x1xf32>
    %14 = arith.divf %12, %13 : vector<16x1xf32>
    %15 = vector.broadcast %7 : vector<16x1xf32> to vector<16x32xf32>
    %16 = arith.subf %3, %15 : vector<16x32xf32>
    %cst_8 = arith.constant 9.99999974E-6 : f32
    %17 = vector.broadcast %cst_8 : f32 to vector<16x1xf32>
    %18 = arith.addf %14, %17 : vector<16x1xf32>
    %19 = math.rsqrt %18 : vector<16x1xf32>
    %20 = vector.broadcast %19 : vector<16x1xf32> to vector<16x32xf32>
    %21 = arith.mulf %16, %20 : vector<16x32xf32>
    %c0_9 = arith.constant 0 : index
    %c0_10 = arith.constant 0 : index
    %22 = vector.load %arg3[%c0_9, %c0_10] : memref<1x32xf32, #tpu.memory_space<vmem>>, vector<1x32xf32>
    %23 = vector.broadcast %22 : vector<1x32xf32> to vector<16x32xf32>
    %24 = arith.mulf %21, %23 : vector<16x32xf32>
    %c0_11 = arith.constant 0 : index
    %c0_12 = arith.constant 0 : index
    %25 = vector.load %arg4[%c0_11, %c0_12] : memref<1x32xf32, #tpu.memory_space<vmem>>, vector<1x32xf32>
    %26 = vector.broadcast %25 : vector<1x32xf32> to vector<16x32xf32>
    %27 = arith.addf %24, %26 : vector<16x32xf32>
    %c0_13 = arith.constant 0 : index
    %c0_14 = arith.constant 0 : index
    %28 = vector.load %arg6[%c0_13, %c0_14] : memref<32x64xf32, #tpu.memory_space<vmem>>, vector<32x64xf32>
    %cst_15 = arith.constant dense<0.000000e+00> : vector<16x64xf32>
    %29 = tpu.matmul %27, %28, %cst_15 {dimension_numbers = #tpu.dot_dimension_numbers<[1], [0], [0], [1], [0, 0, 1, 1], [], []>} : vector<16x32xf32>, vector<32x64xf32>, vector<16x64xf32> -> vector<16x64xf32>
    %30 = vector.shape_cast %29 : vector<16x64xf32> to vector<1x16x64xf32>
    %31 = vector.extract_strided_slice %30 {offsets = [0, 0, 0], sizes = [1, 16, 32], strides = [1, 1, 1]} : vector<1x16x64xf32> to vector<1x16x32xf32>
    %c0_16 = arith.constant 0 : index
    %c0_17 = arith.constant 0 : index
    %32 = vector.load %arg7[%c0_16, %c0_17] : memref<16x32xf32, #tpu.memory_space<vmem>>, vector<16x32xf32>
    %33 = vector.shape_cast %32 : vector<16x32xf32> to vector<1x16x32xf32>
    %34 = arith.addf %31, %33 : vector<1x16x32xf32>
    %35 = vector.extract_strided_slice %30 {offsets = [0, 0, 32], sizes = [1, 16, 32], strides = [1, 1, 1]} : vector<1x16x64xf32> to vector<1x16x32xf32>
    %c0_18 = arith.constant 0 : index
    %c0_19 = arith.constant 0 : index
    %36 = vector.load %arg8[%c0_18, %c0_19] : memref<1x32xf32, #tpu.memory_space<vmem>>, vector<1x32xf32>
    %37 = vector.shape_cast %36 : vector<1x32xf32> to vector<1x1x32xf32>
    %38 = vector.broadcast %37 : vector<1x1x32xf32> to vector<1x16x32xf32>
    %39 = arith.addf %35, %38 : vector<1x16x32xf32>
    %c0_20 = arith.constant 0 : index
    %c0_21 = arith.constant 0 : index
    %c0_22 = arith.constant 0 : index
    %40 = vector.load %arg5[%c0_20, %c0_21, %c0_22] : memref<4x16x8xf32, #tpu.memory_space<vmem>>, vector<4x16x8xf32>
    %41 = vector.extract_strided_slice %34 {offsets = [0, 0, 0], sizes = [1, 16, 8], strides = [1, 1, 1]} : vector<1x16x32xf32> to vector<1x16x8xf32>
    %42 = vector.shape_cast %41 : vector<1x16x8xf32> to vector<16x8xf32>
    %43 = vector.extract_strided_slice %34 {offsets = [0, 0, 8], sizes = [1, 16, 8], strides = [1, 1, 1]} : vector<1x16x32xf32> to vector<1x16x8xf32>
    %44 = vector.shape_cast %43 : vector<1x16x8xf32> to vector<16x8xf32>
    %45 = vector.extract_strided_slice %34 {offsets = [0, 0, 16], sizes = [1, 16, 8], strides = [1, 1, 1]} : vector<1x16x32xf32> to vector<1x16x8xf32>
    %46 = vector.shape_cast %45 : vector<1x16x8xf32> to vector<16x8xf32>
    %47 = vector.extract_strided_slice %34 {offsets = [0, 0, 24], sizes = [1, 16, 8], strides = [1, 1, 1]} : vector<1x16x32xf32> to vector<1x16x8xf32>
    %48 = vector.shape_cast %47 : vector<1x16x8xf32> to vector<16x8xf32>
    %49 = vector.shape_cast %42 : vector<16x8xf32> to vector<1x16x8xf32>
    %50 = vector.shape_cast %44 : vector<16x8xf32> to vector<1x16x8xf32>
    %51 = vector.shape_cast %46 : vector<16x8xf32> to vector<1x16x8xf32>
    %52 = vector.shape_cast %48 : vector<16x8xf32> to vector<1x16x8xf32>
    %53 = tpu.concatenate %49, %50, %51, %52 in 0 : vector<1x16x8xf32>, vector<1x16x8xf32>, vector<1x16x8xf32>, vector<1x16x8xf32> -> vector<4x16x8xf32>
    %54 = vector.extract_strided_slice %39 {offsets = [0, 0, 0], sizes = [1, 16, 8], strides = [1, 1, 1]} : vector<1x16x32xf32> to vector<1x16x8xf32>
    %55 = vector.shape_cast %54 : vector<1x16x8xf32> to vector<16x8xf32>
    %56 = vector.extract_strided_slice %39 {offsets = [0, 0, 8], sizes = [1, 16, 8], strides = [1, 1, 1]} : vector<1x16x32xf32> to vector<1x16x8xf32>
    %57 = vector.shape_cast %56 : vector<1x16x8xf32> to vector<16x8xf32>
    %58 = vector.extract_strided_slice %39 {offsets = [0, 0, 16], sizes = [1, 16, 8], strides = [1, 1, 1]} : vector<1x16x32xf32> to vector<1x16x8xf32>
    %59 = vector.shape_cast %58 : vector<1x16x8xf32> to vector<16x8xf32>
    %60 = vector.extract_strided_slice %39 {offsets = [0, 0, 24], sizes = [1, 16, 8], strides = [1, 1, 1]} : vector<1x16x32xf32> to vector<1x16x8xf32>
    %61 = vector.shape_cast %60 : vector<1x16x8xf32> to vector<16x8xf32>
    %62 = vector.shape_cast %55 : vector<16x8xf32> to vector<1x16x8xf32>
    %63 = vector.shape_cast %57 : vector<16x8xf32> to vector<1x16x8xf32>
    %64 = vector.shape_cast %59 : vector<16x8xf32> to vector<1x16x8xf32>
    %65 = vector.shape_cast %61 : vector<16x8xf32> to vector<1x16x8xf32>
    %66 = tpu.concatenate %62, %63, %64, %65 in 0 : vector<1x16x8xf32>, vector<1x16x8xf32>, vector<1x16x8xf32>, vector<1x16x8xf32> -> vector<4x16x8xf32>
    "tpu.trace_start"() <{level = 10 : i32, message = "hqd,hkd->hqk"}> : () -> ()
    %cst_23 = arith.constant dense<0.000000e+00> : vector<4x16x16xf32>
    %67 = tpu.matmul %40, %53, %cst_23 {dimension_numbers = #tpu.dot_dimension_numbers<[2], [2], [1], [1], [0, 0, 0, 1, 1, 1], [0], [0]>} : vector<4x16x8xf32>, vector<4x16x8xf32>, vector<4x16x16xf32> -> vector<4x16x16xf32>
    "tpu.trace_stop"() : () -> ()
    %cst_24 = arith.constant dense<0xFF800000> : vector<4x16xf32>
    %68 = vector.multi_reduction <maximumf>, %67, %cst_24 [2] : vector<4x16x16xf32> to vector<4x16xf32>
    %69 = vector.shape_cast %68 : vector<4x16xf32> to vector<4x16x1xf32>
    %70 = vector.broadcast %69 : vector<4x16x1xf32> to vector<4x16x16xf32>
    %71 = arith.subf %67, %70 : vector<4x16x16xf32>
    %72 = math.exp %71 : vector<4x16x16xf32>
    %cst_25 = arith.constant dense<0.000000e+00> : vector<4x16xf32>
    %73 = vector.multi_reduction <add>, %72, %cst_25 [2] : vector<4x16x16xf32> to vector<4x16xf32>
    %74 = vector.shape_cast %73 : vector<4x16xf32> to vector<4x16x1xf32>
    %75 = vector.broadcast %74 : vector<4x16x1xf32> to vector<4x16x16xf32>
    %76 = arith.divf %72, %75 : vector<4x16x16xf32>
    "tpu.trace_start"() <{level = 10 : i32, message = "hqk,hkd->hqd"}> : () -> ()
    %cst_26 = arith.constant dense<0.000000e+00> : vector<4x16x8xf32>
    %77 = tpu.matmul %76, %66, %cst_26 {dimension_numbers = #tpu.dot_dimension_numbers<[2], [1], [1], [2], [0, 0, 0, 1, 1, 2], [0], [0]>} : vector<4x16x16xf32>, vector<4x16x8xf32>, vector<4x16x8xf32> -> vector<4x16x8xf32>
    "tpu.trace_stop"() : () -> ()
    %78 = vector.extract_strided_slice %77 {offsets = [0, 0, 0], sizes = [1, 16, 8], strides = [1, 1, 1]} : vector<4x16x8xf32> to vector<1x16x8xf32>
    %79 = vector.shape_cast %78 : vector<1x16x8xf32> to vector<16x8xf32>
    %c0_27 = arith.constant 0 : index
    %c0_28 = arith.constant 0 : index
    %c0_29 = arith.constant 0 : index
    %80 = vector.load %arg9[%c0_27, %c0_28, %c0_29] : memref<4x8x32xf32, #tpu.memory_space<vmem>>, vector<1x8x32xf32>
    %81 = vector.shape_cast %80 : vector<1x8x32xf32> to vector<8x32xf32>
    %cst_30 = arith.constant dense<0.000000e+00> : vector<16x32xf32>
    %82 = tpu.matmul %79, %81, %cst_30 {dimension_numbers = #tpu.dot_dimension_numbers<[1], [0], [0], [1], [0, 0, 1, 1], [], []>} : vector<16x8xf32>, vector<8x32xf32>, vector<16x32xf32> -> vector<16x32xf32>
    %83 = vector.extract_strided_slice %77 {offsets = [1, 0, 0], sizes = [1, 16, 8], strides = [1, 1, 1]} : vector<4x16x8xf32> to vector<1x16x8xf32>
    %84 = vector.shape_cast %83 : vector<1x16x8xf32> to vector<16x8xf32>
    %c1 = arith.constant 1 : index
    %c0_31 = arith.constant 0 : index
    %c0_32 = arith.constant 0 : index
    %85 = vector.load %arg9[%c1, %c0_31, %c0_32] : memref<4x8x32xf32, #tpu.memory_space<vmem>>, vector<1x8x32xf32>
    %86 = vector.shape_cast %85 : vector<1x8x32xf32> to vector<8x32xf32>
    %cst_33 = arith.constant dense<0.000000e+00> : vector<16x32xf32>
    %87 = tpu.matmul %84, %86, %cst_33 {dimension_numbers = #tpu.dot_dimension_numbers<[1], [0], [0], [1], [0, 0, 1, 1], [], []>} : vector<16x8xf32>, vector<8x32xf32>, vector<16x32xf32> -> vector<16x32xf32>
    %88 = arith.addf %82, %87 : vector<16x32xf32>
    %89 = vector.extract_strided_slice %77 {offsets = [2, 0, 0], sizes = [1, 16, 8], strides = [1, 1, 1]} : vector<4x16x8xf32> to vector<1x16x8xf32>
    %90 = vector.shape_cast %89 : vector<1x16x8xf32> to vector<16x8xf32>
    %c2 = arith.constant 2 : index
    %c0_34 = arith.constant 0 : index
    %c0_35 = arith.constant 0 : index
    %91 = vector.load %arg9[%c2, %c0_34, %c0_35] : memref<4x8x32xf32, #tpu.memory_space<vmem>>, vector<1x8x32xf32>
    %92 = vector.shape_cast %91 : vector<1x8x32xf32> to vector<8x32xf32>
    %cst_36 = arith.constant dense<0.000000e+00> : vector<16x32xf32>
    %93 = tpu.matmul %90, %92, %cst_36 {dimension_numbers = #tpu.dot_dimension_numbers<[1], [0], [0], [1], [0, 0, 1, 1], [], []>} : vector<16x8xf32>, vector<8x32xf32>, vector<16x32xf32> -> vector<16x32xf32>
    %94 = arith.addf %88, %93 : vector<16x32xf32>
    %95 = vector.extract_strided_slice %77 {offsets = [3, 0, 0], sizes = [1, 16, 8], strides = [1, 1, 1]} : vector<4x16x8xf32> to vector<1x16x8xf32>
    %96 = vector.shape_cast %95 : vector<1x16x8xf32> to vector<16x8xf32>
    %c3 = arith.constant 3 : index
    %c0_37 = arith.constant 0 : index
    %c0_38 = arith.constant 0 : index
    %97 = vector.load %arg9[%c3, %c0_37, %c0_38] : memref<4x8x32xf32, #tpu.memory_space<vmem>>, vector<1x8x32xf32>
    %98 = vector.shape_cast %97 : vector<1x8x32xf32> to vector<8x32xf32>
    %cst_39 = arith.constant dense<0.000000e+00> : vector<16x32xf32>
    %99 = tpu.matmul %96, %98, %cst_39 {dimension_numbers = #tpu.dot_dimension_numbers<[1], [0], [0], [1], [0, 0, 1, 1], [], []>} : vector<16x8xf32>, vector<8x32xf32>, vector<16x32xf32> -> vector<16x32xf32>
    %100 = arith.addf %94, %99 : vector<16x32xf32>
    %c0_40 = arith.constant 0 : index
    %c0_41 = arith.constant 0 : index
    %101 = vector.load %arg10[%c0_40, %c0_41] : memref<1x32xf32, #tpu.memory_space<vmem>>, vector<1x32xf32>
    %102 = vector.broadcast %101 : vector<1x32xf32> to vector<16x32xf32>
    %103 = arith.addf %100, %102 : vector<16x32xf32>
    %c0_42 = arith.constant 0 : index
    %c0_43 = arith.constant 0 : index
    %c0_44 = arith.constant 0 : index
    %104 = vector.load %arg11[%c0_42, %c0_43, %c0_44] : memref<1x16x32xf32, #tpu.memory_space<vmem>>, vector<1x16x32xf32>
    %105 = vector.shape_cast %104 : vector<1x16x32xf32> to vector<16x32xf32>
    %106 = vector.shape_cast %103 : vector<16x32xf32> to vector<1x16x32xf32>
    tpu.vector_store %arg11[%c0_42, %c0_43, %c0_44], %106 {strides = array<i32>} : memref<1x16x32xf32, #tpu.memory_space<vmem>>, vector<1x16x32xf32>,
    return
  }
  func.func @transform_0(%arg0: i32) -> (i32, i32, i32) {
    %c0_i32 = arith.constant 0 : i32
    %c0_i32_0 = arith.constant 0 : i32
    %c0_i32_1 = arith.constant 0 : i32
    return %arg0, %c0_i32, %c0_i32_0 : i32, i32, i32
  }
  func.func @transform_1(%arg0: i32) -> (i32, i32) {
    %c0_i32 = arith.constant 0 : i32
    %c0_i32_0 = arith.constant 0 : i32
    %c0_i32_1 = arith.constant 0 : i32
    return %c0_i32, %c0_i32_0 : i32, i32
  }
  func.func @transform_2(%arg0: i32) -> (i32, i32) {
    %c0_i32 = arith.constant 0 : i32
    %c0_i32_0 = arith.constant 0 : i32
    %c0_i32_1 = arith.constant 0 : i32
    return %c0_i32, %c0_i32_0 : i32, i32
  }
  func.func @transform_3(%arg0: i32) -> (i32, i32) {
    %c0_i32 = arith.constant 0 : i32
    %c0_i32_0 = arith.constant 0 : i32
    %c0_i32_1 = arith.constant 0 : i32
    return %c0_i32, %c0_i32_0 : i32, i32
  }
  func.func @transform_4(%arg0: i32) -> (i32, i32, i32) {
    %c0_i32 = arith.constant 0 : i32
    %c0_i32_0 = arith.constant 0 : i32
    %c0_i32_1 = arith.constant 0 : i32
    %c0_i32_2 = arith.constant 0 : i32
    return %c0_i32, %c0_i32_0, %c0_i32_1 : i32, i32, i32
  }
  func.func @transform_5(%arg0: i32) -> (i32, i32) {
    %c0_i32 = arith.constant 0 : i32
    %c0_i32_0 = arith.constant 0 : i32
    %c0_i32_1 = arith.constant 0 : i32
    return %c0_i32, %c0_i32_0 : i32, i32
  }
  func.func @transform_6(%arg0: i32) -> (i32, i32) {
    %c0_i32 = arith.constant 0 : i32
    %c0_i32_0 = arith.constant 0 : i32
    %c0_i32_1 = arith.constant 0 : i32
    return %c0_i32, %c0_i32_0 : i32, i32
  }
  func.func @transform_7(%arg0: i32) -> (i32, i32) {
    %c0_i32 = arith.constant 0 : i32
    %c0_i32_0 = arith.constant 0 : i32
    %c0_i32_1 = arith.constant 0 : i32
    return %c0_i32, %c0_i32_0 : i32, i32
  }
  func.func @transform_8(%arg0: i32) -> (i32, i32, i32) {
    %c0_i32 = arith.constant 0 : i32
    %c0_i32_0 = arith.constant 0 : i32
    %c0_i32_1 = arith.constant 0 : i32
    %c0_i32_2 = arith.constant 0 : i32
    return %c0_i32, %c0_i32_0, %c0_i32_1 : i32, i32, i32
  }
  func.func @transform_9(%arg0: i32) -> (i32, i32) {
    %c0_i32 = arith.constant 0 : i32
    %c0_i32_0 = arith.constant 0 : i32
    %c0_i32_1 = arith.constant 0 : i32
    return %c0_i32, %c0_i32_0 : i32, i32
  }
  func.func @transform_10(%arg0: i32) -> (i32, i32, i32) {
    %c0_i32 = arith.constant 0 : i32
    %c0_i32_0 = arith.constant 0 : i32
    %c0_i32_1 = arith.constant 0 : i32
    return %arg0, %c0_i32, %c0_i32_0 : i32, i32, i32
  }
}

module attributes {stable_mosaic.version = 11 : i64} {
  func.func @kernel(%arg0: i32, %arg1: memref<1x16x48xf32, #tpu.memory_space<vmem>>, %arg2: memref<48x32xf32, #tpu.memory_space<vmem>>, %arg3: memref<1x32xf32, #tpu.memory_space<vmem>>, %arg4: memref<1x32xf32, #tpu.memory_space<vmem>>, %arg5: memref<4x16x8xf32, #tpu.memory_space<vmem>>, %arg6: memref<32x64xf32, #tpu.memory_space<vmem>>, %arg7: memref<16x32xf32, #tpu.memory_space<vmem>>, %arg8: memref<1x32xf32, #tpu.memory_space<vmem>>, %arg9: memref<4x8x32xf32, #tpu.memory_space<vmem>>, %arg10: memref<1x32xf32, #tpu.memory_space<vmem>>, %arg11: memref<1x16x32xf32, #tpu.memory_space<vmem>>) attributes {dimension_semantics = [#tpu.dimension_semantics<parallel>], iteration_bounds = array<i64: 2>, scalar_prefetch = 0 : i64, scratch_operands = 0 : i64, tpu.core_type = #tpu.core_type<tc>, window_params = [{transform_indices = @transform_0, window_bounds = array<i64: 1, 16, 48>}, {pipeline_mode = #tpu.pipeline_mode<synchronous>, transform_indices = @transform_1, window_bounds = array<i64: 48, 32>}, {pipeline_mode = #tpu.pipeline_mode<synchronous>, transform_indices = @transform_2, window_bounds = array<i64: 1, 32>}, {pipeline_mode = #tpu.pipeline_mode<synchronous>, transform_indices = @transform_3, window_bounds = array<i64: 1, 32>}, {pipeline_mode = #tpu.pipeline_mode<synchronous>, transform_indices = @transform_4, window_bounds = array<i64: 4, 16, 8>}, {pipeline_mode = #tpu.pipeline_mode<synchronous>, transform_indices = @transform_5, window_bounds = array<i64: 32, 64>}, {pipeline_mode = #tpu.pipeline_mode<synchronous>, transform_indices = @transform_6, window_bounds = array<i64: 16, 32>}, {pipeline_mode = #tpu.pipeline_mode<synchronous>, transform_indices = @transform_7, window_bounds = array<i64: 1, 32>}, {pipeline_mode = #tpu.pipeline_mode<synchronous>, transform_indices = @transform_8, window_bounds = array<i64: 4, 8, 32>}, {pipeline_mode = #tpu.pipeline_mode<synchronous>, transform_indices = @transform_9, window_bounds = array<i64: 1, 32>}, {transform_indices = @transform_10, window_bounds = array<i64: 1, 16, 32>}]} {
    %c0 = arith.constant 0 : index
    %c0_0 = arith.constant 0 : index
    %c0_1 = arith.constant 0 : index
    %0 = vector.load %arg1[%c0, %c0_0, %c0_1] : memref<1x16x48xf32, #tpu.memory_space<vmem>>, vector<1x16x48xf32>
    %1 = vector.shape_cast %0 : vector<1x16x48xf32> to vector<16x48xf32>
    %c0_2 = arith.constant 0 : index
    %c0_3 = arith.constant 0 : index
    %2 = vector.load %arg2[%c0_2, %c0_3] : memref<48x32xf32, #tpu.memory_space<vmem>>, vector<48x32xf32>
    %cst = arith.constant dense<0.000000e+00> : vector<16x32xf32>
    %3 = tpu.matmul %1, %2, %cst {dimension_numbers = #tpu.dot_dimension_numbers<[1], [0], [0], [1], [0, 0, 1, 1], [], []>} : vector<16x48xf32>, vector<48x32xf32>, vector<16x32xf32> -> vector<16x32xf32>
    %cst_4 = arith.constant dense<0.000000e+00> : vector<16xf32>
    %4 = vector.multi_reduction <add>, %3, %cst_4 [1] : vector<16x32xf32> to vector<16xf32>
    %5 = vector.shape_cast %4 : vector<16xf32> to vector<16x1xf32>
    %cst_5 = arith.constant 3.200000e+01 : f32
    %6 = vector.broadcast %cst_5 : f32 to vector<16x1xf32>
    %7 = arith.divf %5, %6 : vector<16x1xf32>
    %8 = vector.broadcast %7 : vector<16x1xf32> to vector<16x32xf32>
    %9 = arith.subf %3, %8 : vector<16x32xf32>
    %10 = arith.mulf %9, %9 : vector<16x32xf32>
    %cst_6 = arith.constant dense<0.000000e+00> : vector<16xf32>
    %11 = vector.multi_reduction <add>, %10, %cst_6 [1] : vector<16x32xf32> to vector<16xf32>
    %12 = vector.shape_cast %11 : vector<16xf32> to vector<16x1xf32>
    %cst_7 = arith.constant 3.200000e+01 : f32
    %13 = vector.broadcast %cst_7 : f32 to vector<16x1xf32>
    %14 = arith.divf %12, %13 : vector<16x1xf32>
    %15 = vector.broadcast %7 : vector<16x1xf32> to vector<16x32xf32>
    %16 = arith.subf %3, %15 : vector<16x32xf32>
    %cst_8 = arith.constant 9.99999974E-6 : f32
    %17 = vector.broadcast %cst_8 : f32 to vector<16x1xf32>
    %18 = arith.addf %14, %17 : vector<16x1xf32>
    %19 = math.rsqrt %18 : vector<16x1xf32>
    %20 = vector.broadcast %19 : vector<16x1xf32> to vector<16x32xf32>
    %21 = arith.mulf %16, %20 : vector<16x32xf32>
    %c0_9 = arith.constant 0 : index
    %c0_10 = arith.constant 0 : index
    %22 = vector.load %arg3[%c0_9, %c0_10] : memref<1x32xf32, #tpu.memory_space<vmem>>, vector<1x32xf32>
    %23 = vector.broadcast %22 : vector<1x32xf32> to vector<16x32xf32>
    %24 = arith.mulf %21, %23 : vector<16x32xf32>
    %c0_11 = arith.constant 0 : index
    %c0_12 = arith.constant 0 : index
    %25 = vector.load %arg4[%c0_11, %c0_12] : memref<1x32xf32, #tpu.memory_space<vmem>>, vector<1x32xf32>
    %26 = vector.broadcast %25 : vector<1x32xf32> to vector<16x32xf32>
    %27 = arith.addf %24, %26 : vector<16x32xf32>
    %c0_13 = arith.constant 0 : index
    %c0_14 = arith.constant 0 : index
    %28 = vector.load %arg6[%c0_13, %c0_14] : memref<32x64xf32, #tpu.memory_space<vmem>>, vector<32x64xf32>
    %cst_15 = arith.constant dense<0.000000e+00> : vector<16x64xf32>
    %29 = tpu.matmul %27, %28, %cst_15 {dimension_numbers = #tpu.dot_dimension_numbers<[1], [0], [0], [1], [0, 0, 1, 1], [], []>} : vector<16x32xf32>, vector<32x64xf32>, vector<16x64xf32> -> vector<16x64xf32>
    %30 = vector.shape_cast %29 : vector<16x64xf32> to vector<1x16x64xf32>
    %31 = vector.extract_strided_slice %30 {offsets = [0, 0, 0], sizes = [1, 16, 32], strides = [1, 1, 1]} : vector<1x16x64xf32> to vector<1x16x32xf32>
    %c0_16 = arith.constant 0 : index
    %c0_17 = arith.constant 0 : index
    %32 = vector.load %arg7[%c0_16, %c0_17] : memref<16x32xf32, #tpu.memory_space<vmem>>, vector<16x32xf32>
    %33 = vector.shape_cast %32 : vector<16x32xf32> to vector<1x16x32xf32>
    %34 = arith.addf %31, %33 : vector<1x16x32xf32>
    %35 = vector.extract_strided_slice %30 {offsets = [0, 0, 32], sizes = [1, 16, 32], strides = [1, 1, 1]} : vector<1x16x64xf32> to vector<1x16x32xf32>
    %c0_18 = arith.constant 0 : index
    %c0_19 = arith.constant 0 : index
    %36 = vector.load %arg8[%c0_18, %c0_19] : memref<1x32xf32, #tpu.memory_space<vmem>>, vector<1x32xf32>
    %37 = vector.shape_cast %36 : vector<1x32xf32> to vector<1x1x32xf32>
    %38 = vector.broadcast %37 : vector<1x1x32xf32> to vector<1x16x32xf32>
    %39 = arith.addf %35, %38 : vector<1x16x32xf32>
    %c0_20 = arith.constant 0 : index
    %c0_21 = arith.constant 0 : index
    %c0_22 = arith.constant 0 : index
    %40 = vector.load %arg5[%c0_20, %c0_21, %c0_22] : memref<4x16x8xf32, #tpu.memory_space<vmem>>, vector<4x16x8xf32>
    %41 = vector.extract_strided_slice %34 {offsets = [0, 0, 0], sizes = [1, 16, 8], strides = [1, 1, 1]} : vector<1x16x32xf32> to vector<1x16x8xf32>
    %42 = vector.shape_cast %41 : vector<1x16x8xf32> to vector<16x8xf32>
    %43 = vector.extract_strided_slice %34 {offsets = [0, 0, 8], sizes = [1, 16, 8], strides = [1, 1, 1]} : vector<1x16x32xf32> to vector<1x16x8xf32>
    %44 = vector.shape_cast %43 : vector<1x16x8xf32> to vector<16x8xf32>
    %45 = vector.extract_strided_slice %34 {offsets = [0, 0, 16], sizes = [1, 16, 8], strides = [1, 1, 1]} : vector<1x16x32xf32> to vector<1x16x8xf32>
    %46 = vector.shape_cast %45 : vector<1x16x8xf32> to vector<16x8xf32>
    %47 = vector.extract_strided_slice %34 {offsets = [0, 0, 24], sizes = [1, 16, 8], strides = [1, 1, 1]} : vector<1x16x32xf32> to vector<1x16x8xf32>
    %48 = vector.shape_cast %47 : vector<1x16x8xf32> to vector<16x8xf32>
    %49 = vector.shape_cast %42 : vector<16x8xf32> to vector<1x16x8xf32>
    %50 = vector.shape_cast %44 : vector<16x8xf32> to vector<1x16x8xf32>
    %51 = vector.shape_cast %46 : vector<16x8xf32> to vector<1x16x8xf32>
    %52 = vector.shape_cast %48 : vector<16x8xf32> to vector<1x16x8xf32>
    %53 = tpu.concatenate %49, %50, %51, %52 in 0 : vector<1x16x8xf32>, vector<1x16x8xf32>, vector<1x16x8xf32>, vector<1x16x8xf32> -> vector<4x16x8xf32>
    %54 = vector.extract_strided_slice %39 {offsets = [0, 0, 0], sizes = [1, 16, 8], strides = [1, 1, 1]} : vector<1x16x32xf32> to vector<1x16x8xf32>
    %55 = vector.shape_cast %54 : vector<1x16x8xf32> to vector<16x8xf32>
    %56 = vector.extract_strided_slice %39 {offsets = [0, 0, 8], sizes = [1, 16, 8], strides = [1, 1, 1]} : vector<1x16x32xf32> to vector<1x16x8xf32>
    %57 = vector.shape_cast %56 : vector<1x16x8xf32> to vector<16x8xf32>
    %58 = vector.extract_strided_slice %39 {offsets = [0, 0, 16], sizes = [1, 16, 8], strides = [1, 1, 1]} : vector<1x16x32xf32> to vector<1x16x8xf32>
    %59 = vector.shape_cast %58 : vector<1x16x8xf32> to vector<16x8xf32>
    %60 = vector.extract_strided_slice %39 {offsets = [0, 0, 24], sizes = [1, 16, 8], strides = [1, 1, 1]} : vector<1x16x32xf32> to vector<1x16x8xf32>
    %61 = vector.shape_cast %60 : vector<1x16x8xf32> to vector<16x8xf32>
    %62 = vector.shape_cast %55 : vector<16x8xf32> to vector<1x16x8xf32>
    %63 = vector.shape_cast %57 : vector<16x8xf32> to vector<1x16x8xf32>
    %64 = vector.shape_cast %59 : vector<16x8xf32> to vector<1x16x8xf32>
    %65 = vector.shape_cast %61 : vector<16x8xf32> to vector<1x16x8xf32>
    %66 = tpu.concatenate %62, %63, %64, %65 in 0 : vector<1x16x8xf32>, vector<1x16x8xf32>, vector<1x16x8xf32>, vector<1x16x8xf32> -> vector<4x16x8xf32>
    "tpu.trace_start"() <{level = 10 : i32, message = "hqd,hkd->hqk"}> : () -> ()
    %cst_23 = arith.constant dense<0.000000e+00> : vector<4x16x16xf32>
    %67 = tpu.matmul %40, %53, %cst_23 {dimension_numbers = #tpu.dot_dimension_numbers<[2], [2], [1], [1], [0, 0, 0, 1, 1, 1], [0], [0]>} : vector<4x16x8xf32>, vector<4x16x8xf32>, vector<4x16x16xf32> -> vector<4x16x16xf32>
    "tpu.trace_stop"() : () -> ()
    %cst_24 = arith.constant dense<0xFF800000> : vector<4x16xf32>
    %68 = vector.multi_reduction <maximumf>, %67, %cst_24 [2] : vector<4x16x16xf32> to vector<4x16xf32>
    %69 = vector.shape_cast %68 : vector<4x16xf32> to vector<4x16x1xf32>
    %70 = vector.broadcast %69 : vector<4x16x1xf32> to vector<4x16x16xf32>
    %71 = arith.subf %67, %70 : vector<4x16x16xf32>
    %72 = math.exp %71 : vector<4x16x16xf32>
    %cst_25 = arith.constant dense<0.000000e+00> : vector<4x16xf32>
    %73 = vector.multi_reduction <add>, %72, %cst_25 [2] : vector<4x16x16xf32> to vector<4x16xf32>
    %74 = vector.shape_cast %73 : vector<4x16xf32> to vector<4x16x1xf32>
    %75 = vector.broadcast %74 : vector<4x16x1xf32> to vector<4x16x16xf32>
    %76 = arith.divf %72, %75 : vector<4x16x16xf32>
    "tpu.trace_start"() <{level = 10 : i32, message = "hqk,hkd->hqd"}> : () -> ()
    %cst_26 = arith.constant dense<0.000000e+00> : vector<4x16x8xf32>
    %77 = tpu.matmul %76, %66, %cst_26 {dimension_numbers = #tpu.dot_dimension_numbers<[2], [1], [1], [2], [0, 0, 0, 1, 1, 2], [0], [0]>} : vector<4x16x16xf32>, vector<4x16x8xf32>, vector<4x16x8xf32> -> vector<4x16x8xf32>
    "tpu.trace_stop"() : () -> ()
    %78 = vector.extract_strided_slice %77 {offsets = [0, 0, 0], sizes = [1, 16, 8], strides = [1, 1, 1]} : vector<4x16x8xf32> to vector<1x16x8xf32>
    %79 = vector.shape_cast %78 : vector<1x16x8xf32> to vector<16x8xf32>
    %c0_27 = arith.constant 0 : index
    %c0_28 = arith.constant 0 : index
    %c0_29 = arith.constant 0 : index
    %80 = vector.load %arg9[%c0_27, %c0_28, %c0_29] : memref<4x8x32xf32, #tpu.memory_space<vmem>>, vector<1x8x32xf32>
    %81 = vector.shape_cast %80 : vector<1x8x32xf32> to vector<8x32xf32>
    %cst_30 = arith.constant dense<0.000000e+00> : vector<16x32xf32>
    %82 = tpu.matmul %79, %81, %cst_30 {dimension_numbers = #tpu.dot_dimension_numbers<[1], [0], [0], [1], [0, 0, 1, 1], [], []>} : vector<16x8xf32>, vector<8x32xf32>, vector<16x32xf32> -> vector<16x32xf32>
    %83 = vector.extract_strided_slice %77 {offsets = [1, 0, 0], sizes = [1, 16, 8], strides = [1, 1, 1]} : vector<4x16x8xf32> to vector<1x16x8xf32>
    %84 = vector.shape_cast %83 : vector<1x16x8xf32> to vector<16x8xf32>
    %c1 = arith.constant 1 : index
    %c0_31 = arith.constant 0 : index
    %c0_32 = arith.constant 0 : index
    %85 = vector.load %arg9[%c1, %c0_31, %c0_32] : memref<4x8x32xf32, #tpu.memory_space<vmem>>, vector<1x8x32xf32>
    %86 = vector.shape_cast %85 : vector<1x8x32xf32> to vector<8x32xf32>
    %cst_33 = arith.constant dense<0.000000e+00> : vector<16x32xf32>
    %87 = tpu.matmul %84, %86, %cst_33 {dimension_numbers = #tpu.dot_dimension_numbers<[1], [0], [0], [1], [0, 0, 1, 1], [], []>} : vector<16x8xf32>, vector<8x32xf32>, vector<16x32xf32> -> vector<16x32xf32>
    %88 = arith.addf %82, %87 : vector<16x32xf32>
    %89 = vector.extract_strided_slice %77 {offsets = [2, 0, 0], sizes = [1, 16, 8], strides = [1, 1, 1]} : vector<4x16x8xf32> to vector<1x16x8xf32>
    %90 = vector.shape_cast %89 : vector<1x16x8xf32> to vector<16x8xf32>
    %c2 = arith.constant 2 : index
    %c0_34 = arith.constant 0 : index
    %c0_35 = arith.constant 0 : index
    %91 = vector.load %arg9[%c2, %c0_34, %c0_35] : memref<4x8x32xf32, #tpu.memory_space<vmem>>, vector<1x8x32xf32>
    %92 = vector.shape_cast %91 : vector<1x8x32xf32> to vector<8x32xf32>
    %cst_36 = arith.constant dense<0.000000e+00> : vector<16x32xf32>
    %93 = tpu.matmul %90, %92, %cst_36 {dimension_numbers = #tpu.dot_dimension_numbers<[1], [0], [0], [1], [0, 0, 1, 1], [], []>} : vector<16x8xf32>, vector<8x32xf32>, vector<16x32xf32> -> vector<16x32xf32>
    %94 = arith.addf %88, %93 : vector<16x32xf32>
    %95 = vector.extract_strided_slice %77 {offsets = [3, 0, 0], sizes = [1, 16, 8], strides = [1, 1, 1]} : vector<4x16x8xf32> to vector<1x16x8xf32>
    %96 = vector.shape_cast %95 : vector<1x16x8xf32> to vector<16x8xf32>
    %c3 = arith.constant 3 : index
    %c0_37 = arith.constant 0 : index
    %c0_38 = arith.constant 0 : index
    %97 = vector.load %arg9[%c3, %c0_37, %c0_38] : memref<4x8x32xf32, #tpu.memory_space<vmem>>, vector<1x8x32xf32>
    %98 = vector.shape_cast %97 : vector<1x8x32xf32> to vector<8x32xf32>
    %cst_39 = arith.constant dense<0.000000e+00> : vector<16x32xf32>
    %99 = tpu.matmul %96, %98, %cst_39 {dimension_numbers = #tpu.dot_dimension_numbers<[1], [0], [0], [1], [0, 0, 1, 1], [], []>} : vector<16x8xf32>, vector<8x32xf32>, vector<16x32xf32> -> vector<16x32xf32>
    %100 = arith.addf %94, %99 : vector<16x32xf32>
    %c0_40 = arith.constant 0 : index
    %c0_41 = arith.constant 0 : index
    %101 = vector.load %arg10[%c0_40, %c0_41] : memref<1x32xf32, #tpu.memory_space<vmem>>, vector<1x32xf32>
    %102 = vector.broadcast %101 : vector<1x32xf32> to vector<16x32xf32>
    %103 = arith.addf %100, %102 : vector<16x32xf32>
    %c0_42 = arith.constant 0 : index
    %c0_43 = arith.constant 0 : index
    %c0_44 = arith.constant 0 : index
    %104 = vector.load %arg11[%c0_42, %c0_43, %c0_44] : memref<1x16x32xf32, #tpu.memory_space<vmem>>, vector<1x16x32xf32>
    %105 = vector.shape_cast %104 : vector<1x16x32xf32> to vector<16x32xf32>
    %106 = vector.shape_cast %103 : vector<16x32xf32> to vector<1x16x32xf32>
    tpu.vector_store %arg11[%c0_42, %c0_43, %c0_44], %106 {strides = array<i32>} : memref<1x16x32xf32, #tpu.memory_space<vmem>>, vector<1x16x32xf32>,
    return
  }
  func.func @transform_0(%arg0: i32) -> (i32, i32, i32) {
    %c0_i32 = arith.constant 0 : i32
    %c0_i32_0 = arith.constant 0 : i32
    %c0_i32_1 = arith.constant 0 : i32
    return %arg0, %c0_i32, %c0_i32_0 : i32, i32, i32
  }
  func.func @transform_1(%arg0: i32) -> (i32, i32) {
    %c0_i32 = arith.constant 0 : i32
    %c0_i32_0 = arith.constant 0 : i32
    %c0_i32_1 = arith.constant 0 : i32
    return %c0_i32, %c0_i32_0 : i32, i32
  }
  func.func @transform_2(%arg0: i32) -> (i32, i32) {
    %c0_i32 = arith.constant 0 : i32
    %c0_i32_0 = arith.constant 0 : i32
    %c0_i32_1 = arith.constant 0 : i32
    return %c0_i32, %c0_i32_0 : i32, i32
  }
  func.func @transform_3(%arg0: i32) -> (i32, i32) {
    %c0_i32 = arith.constant 0 : i32
    %c0_i32_0 = arith.constant 0 : i32
    %c0_i32_1 = arith.constant 0 : i32
    return %c0_i32, %c0_i32_0 : i32, i32
  }
  func.func @transform_4(%arg0: i32) -> (i32, i32, i32) {
    %c0_i32 = arith.constant 0 : i32
    %c0_i32_0 = arith.constant 0 : i32
    %c0_i32_1 = arith.constant 0 : i32
    %c0_i32_2 = arith.constant 0 : i32
    return %c0_i32, %c0_i32_0, %c0_i32_1 : i32, i32, i32
  }
  func.func @transform_5(%arg0: i32) -> (i32, i32) {
    %c0_i32 = arith.constant 0 : i32
    %c0_i32_0 = arith.constant 0 : i32
    %c0_i32_1 = arith.constant 0 : i32
    return %c0_i32, %c0_i32_0 : i32, i32
  }
  func.func @transform_6(%arg0: i32) -> (i32, i32) {
    %c0_i32 = arith.constant 0 : i32
    %c0_i32_0 = arith.constant 0 : i32
    %c0_i32_1 = arith.constant 0 : i32
    return %c0_i32, %c0_i32_0 : i32, i32
  }
  func.func @transform_7(%arg0: i32) -> (i32, i32) {
    %c0_i32 = arith.constant 0 : i32
    %c0_i32_0 = arith.constant 0 : i32
    %c0_i32_1 = arith.constant 0 : i32
    return %c0_i32, %c0_i32_0 : i32, i32
  }
  func.func @transform_8(%arg0: i32) -> (i32, i32, i32) {
    %c0_i32 = arith.constant 0 : i32
    %c0_i32_0 = arith.constant 0 : i32
    %c0_i32_1 = arith.constant 0 : i32
    %c0_i32_2 = arith.constant 0 : i32
    return %c0_i32, %c0_i32_0, %c0_i32_1 : i32, i32, i32
  }
  func.func @transform_9(%arg0: i32) -> (i32, i32) {
    %c0_i32 = arith.constant 0 : i32
    %c0_i32_0 = arith.constant 0 : i32
    %c0_i32_1 = arith.constant 0 : i32
    return %c0_i32, %c0_i32_0 : i32, i32
  }
  func.func @transform_10(%arg0: i32) -> (i32, i32, i32) {
    %c0_i32 = arith.constant 0 : i32
    %c0_i32_0 = arith.constant 0 : i32
    %c0_i32_1 = arith.constant 0 : i32
    return %arg0, %c0_i32, %c0_i32_0 : i32, i32, i32
  }
}

</mosaic_0001>

<llo_original>
// kernel: tpu_custom_call.1
$region0: #{tpu_custom_call.1}
  #allocation0 [shape = 'u32[]', space=smem, size = 0x4, offset = 0x4, fixed_abs, tag = 'smem constant byte address 0x4 - core index']
  #allocation1 [shape = 'u32[144,128]{1,0:T(1,128)}', space=vmem, size = 0x12000, scoped, tag = 'internal scratch']
  %s0 = inlined_call_operand.vmem [shape: f32[2,16,48], index: 0, kind: input, shape index: {}]
  %s1 = inlined_call_operand.vmem [shape: f32[48,32], index: 1, kind: input, shape index: {}]
  %s2 = inlined_call_operand.vmem [shape: f32[1,32], index: 2, kind: input, shape index: {}]
  %s3 = inlined_call_operand.vmem [shape: f32[1,32], index: 3, kind: input, shape index: {}]
  %s4 = inlined_call_operand.vmem [shape: f32[4,16,8], index: 4, kind: input, shape index: {}]
  %s5 = inlined_call_operand.vmem [shape: f32[32,64], index: 5, kind: input, shape index: {}]
  %s6 = inlined_call_operand.vmem [shape: f32[16,32], index: 6, kind: input, shape index: {}]
  %s7 = inlined_call_operand.vmem [shape: f32[1,32], index: 7, kind: input, shape index: {}]
  %s8 = inlined_call_operand.vmem [shape: f32[4,8,32], index: 8, kind: input, shape index: {}]
  %s9 = inlined_call_operand.vmem [shape: f32[1,32], index: 9, kind: input, shape index: {}]
  %s10 = inlined_call_operand.hbm [shape: f32[2,16,32], index: 10, kind: output, shape index: {}]
  %s11 = sld [smem:[#allocation0]]
  $region73: #{tpu_custom_call.1} parent=0
    _
  %s13 = ssub.s32 1, %s11
  %s14 = scalar_select 0, %s13, %s11
  $region1: #{tpu_custom_call.1} parent=0
    #allocation2 [shape = 'u8[16384]{0}', space=vmem, size = 0x4000, scoped, tag = 'output window, operand 0']
    #allocation3 [shape = 's32[2]{0}', space=sflag, size = 0x8, scoped, tag = 'scoped memory for tpu_custom_call.1']
    %15 = vsyncpa [#allocation3], 0
    %s16 = scalar_lea.sflag [#allocation3], 1
    %17 = vsyncpa %s16, 0
    loop: start=0, step=1, limit=4
    $region2: #{tpu_custom_call.1} parent=1 // loop_pre_header
      _
    $region3: #{tpu_custom_call.1} parent=1 // loop_header
      %s19 = sphi 0, %s23
      %p20 = scmp.ge.s32.totalorder %s19, 4
      %s29 = sphi 0, %s31
      %s32 = sphi 0, %s29
      %s33 = sphi 0, %s32
      %s49 = sphi 0, %s33
      %s53 = sphi 0, %s53
      %s55 = sphi 0, %s53
      %s56 = sphi 0, %s55
      %s70 = sphi 0, %s56
      %s74 = sphi 0, %s74
      %s76 = sphi 0, %s74
      %s77 = sphi 0, %s76
      %s91 = sphi 0, %s77
      %s95 = sphi 0, %s95
      %s97 = sphi 0, %s95
      %s98 = sphi 0, %s97
      %s112 = sphi 0, %s98
      %s116 = sphi 0, %s116
      %s118 = sphi 0, %s116
      %s119 = sphi 0, %s118
      %s133 = sphi 0, %s119
      %s137 = sphi 0, %s137
      %s139 = sphi 0, %s137
      %s140 = sphi 0, %s139
      %s154 = sphi 0, %s140
      %s158 = sphi 0, %s158
      %s160 = sphi 0, %s158
      %s161 = sphi 0, %s160
      %s175 = sphi 0, %s161
      %s179 = sphi 0, %s179
      %s181 = sphi 0, %s179
      %s182 = sphi 0, %s181
      %s196 = sphi 0, %s182
      %s200 = sphi 0, %s200
      %s202 = sphi 0, %s200
      %s203 = sphi 0, %s202
      %s217 = sphi 0, %s203
      %s221 = sphi 0, %s221
      %s223 = sphi 0, %s221
      %s224 = sphi 0, %s223
      %s238 = sphi 0, %s224
      %s244 = sphi 0, %s246
      %s247 = sphi 0, %s244
      %s248 = sphi 0, %s247
      %s264 = sphi 0, %s248
    $region4: #{tpu_custom_call.1} parent=1 // loop_header_branch
      %22 = sbr.rel (%p20) target = $region8
    $region5: #{tpu_custom_call.1} parent=1 // loop_body
      %s24 = ssub.s32 %s19, 1
      %s25 = ssub.s32 %s19, 2
      %s26 = sadd.s32 %s19, 1
      %s27 = ssub.s32 %s19, %s26
      %p28 = scmp.eq.s32.totalorder %s27, 0
      %s30 = sadd.s32 %s29, 1
      %s31 = scalar_select %p28, %s29, %s30
      %p34 = pneg %p28
      %p35 = scmp.eq.s32.totalorder %s19, 1
      %p36 = por %p34, %p35
      %p37 = scmp.ne.s32.totalorder %s29, %s32
      %p38 = scmp.eq.s32.totalorder %s19, 0
      %p39 = por %p37, %p38
      %p40 = scmp.ne.s32.totalorder %s29, %s32
      %p41 = scmp.eq.s32.totalorder %s24, 1
      %p42 = por %p40, %p41
      %p43 = scmp.ne.s32.totalorder %s32, %s33
      %p44 = scmp.eq.s32.totalorder %s24, 0
      %p45 = por %p43, %p44
      %p46 = scmp.ne.s32.totalorder %s32, %s33
      %p47 = scmp.eq.s32.totalorder %s25, 1
      %p48 = por %p46, %p47
      %p50 = scmp.ne.s32.totalorder %s33, %s49
      %p51 = scmp.eq.s32.totalorder %s25, 0
      %p52 = por %p50, %p51
      %s54 = sadd.s32 %s53, 1
      %p57 = scmp.eq.s32.totalorder %s19, 1
      %p58 = scmp.ne.s32.totalorder %s53, %s55
      %p59 = scmp.eq.s32.totalorder %s19, 0
      %p60 = por %p58, %p59
      %p61 = scmp.ne.s32.totalorder %s53, %s55
      %p62 = scmp.eq.s32.totalorder %s24, 1
      %p63 = por %p61, %p62
      %p64 = scmp.ne.s32.totalorder %s55, %s56
      %p65 = scmp.eq.s32.totalorder %s24, 0
      %p66 = por %p64, %p65
      %p67 = scmp.ne.s32.totalorder %s55, %s56
      %p68 = scmp.eq.s32.totalorder %s25, 1
      %p69 = por %p67, %p68
      %p71 = scmp.ne.s32.totalorder %s56, %s70
      %p72 = scmp.eq.s32.totalorder %s25, 0
      %p73 = por %p71, %p72
      %s75 = sadd.s32 %s74, 1
      %p78 = scmp.eq.s32.totalorder %s19, 1
      %p79 = scmp.ne.s32.totalorder %s74, %s76
      %p80 = scmp.eq.s32.totalorder %s19, 0
      %p81 = por %p79, %p80
      %p82 = scmp.ne.s32.totalorder %s74, %s76
      %p83 = scmp.eq.s32.totalorder %s24, 1
      %p84 = por %p82, %p83
      %p85 = scmp.ne.s32.totalorder %s76, %s77
      %p86 = scmp.eq.s32.totalorder %s24, 0
      %p87 = por %p85, %p86
      %p88 = scmp.ne.s32.totalorder %s76, %s77
      %p89 = scmp.eq.s32.totalorder %s25, 1
      %p90 = por %p88, %p89
      %p92 = scmp.ne.s32.totalorder %s77, %s91
      %p93 = scmp.eq.s32.totalorder %s25, 0
      %p94 = por %p92, %p93
      %s96 = sadd.s32 %s95, 1
      %p99 = scmp.eq.s32.totalorder %s19, 1
      %p100 = scmp.ne.s32.totalorder %s95, %s97
      %p101 = scmp.eq.s32.totalorder %s19, 0
      %p102 = por %p100, %p101
      %p103 = scmp.ne.s32.totalorder %s95, %s97
      %p104 = scmp.eq.s32.totalorder %s24, 1
      %p105 = por %p103, %p104
      %p106 = scmp.ne.s32.totalorder %s97, %s98
      %p107 = scmp.eq.s32.totalorder %s24, 0
      %p108 = por %p106, %p107
      %p109 = scmp.ne.s32.totalorder %s97, %s98
      %p110 = scmp.eq.s32.totalorder %s25, 1
      %p111 = por %p109, %p110
      %p113 = scmp.ne.s32.totalorder %s98, %s112
      %p114 = scmp.eq.s32.totalorder %s25, 0
      %p115 = por %p113, %p114
      %s117 = sadd.s32 %s116, 1
      %p120 = scmp.eq.s32.totalorder %s19, 1
      %p121 = scmp.ne.s32.totalorder %s116, %s118
      %p122 = scmp.eq.s32.totalorder %s19, 0
      %p123 = por %p121, %p122
      %p124 = scmp.ne.s32.totalorder %s116, %s118
      %p125 = scmp.eq.s32.totalorder %s24, 1
      %p126 = por %p124, %p125
      %p127 = scmp.ne.s32.totalorder %s118, %s119
      %p128 = scmp.eq.s32.totalorder %s24, 0
      %p129 = por %p127, %p128
      %p130 = scmp.ne.s32.totalorder %s118, %s119
      %p131 = scmp.eq.s32.totalorder %s25, 1
      %p132 = por %p130, %p131
      %p134 = scmp.ne.s32.totalorder %s119, %s133
      %p135 = scmp.eq.s32.totalorder %s25, 0
      %p136 = por %p134, %p135
      %s138 = sadd.s32 %s137, 1
      %p141 = scmp.eq.s32.totalorder %s19, 1
      %p142 = scmp.ne.s32.totalorder %s137, %s139
      %p143 = scmp.eq.s32.totalorder %s19, 0
      %p144 = por %p142, %p143
      %p145 = scmp.ne.s32.totalorder %s137, %s139
      %p146 = scmp.eq.s32.totalorder %s24, 1
      %p147 = por %p145, %p146
      %p148 = scmp.ne.s32.totalorder %s139, %s140
      %p149 = scmp.eq.s32.totalorder %s24, 0
      %p150 = por %p148, %p149
      %p151 = scmp.ne.s32.totalorder %s139, %s140
      %p152 = scmp.eq.s32.totalorder %s25, 1
      %p153 = por %p151, %p152
      %p155 = scmp.ne.s32.totalorder %s140, %s154
      %p156 = scmp.eq.s32.totalorder %s25, 0
      %p157 = por %p155, %p156
      %s159 = sadd.s32 %s158, 1
      %p162 = scmp.eq.s32.totalorder %s19, 1
      %p163 = scmp.ne.s32.totalorder %s158, %s160
      %p164 = scmp.eq.s32.totalorder %s19, 0
      %p165 = por %p163, %p164
      %p166 = scmp.ne.s32.totalorder %s158, %s160
      %p167 = scmp.eq.s32.totalorder %s24, 1
      %p168 = por %p166, %p167
      %p169 = scmp.ne.s32.totalorder %s160, %s161
      %p170 = scmp.eq.s32.totalorder %s24, 0
      %p171 = por %p169, %p170
      %p172 = scmp.ne.s32.totalorder %s160, %s161
      %p173 = scmp.eq.s32.totalorder %s25, 1
      %p174 = por %p172, %p173
      %p176 = scmp.ne.s32.totalorder %s161, %s175
      %p177 = scmp.eq.s32.totalorder %s25, 0
      %p178 = por %p176, %p177
      %s180 = sadd.s32 %s179, 1
      %p183 = scmp.eq.s32.totalorder %s19, 1
      %p184 = scmp.ne.s32.totalorder %s179, %s181
      %p185 = scmp.eq.s32.totalorder %s19, 0
      %p186 = por %p184, %p185
      %p187 = scmp.ne.s32.totalorder %s179, %s181
      %p188 = scmp.eq.s32.totalorder %s24, 1
      %p189 = por %p187, %p188
      %p190 = scmp.ne.s32.totalorder %s181, %s182
      %p191 = scmp.eq.s32.totalorder %s24, 0
      %p192 = por %p190, %p191
      %p193 = scmp.ne.s32.totalorder %s181, %s182
      %p194 = scmp.eq.s32.totalorder %s25, 1
      %p195 = por %p193, %p194
      %p197 = scmp.ne.s32.totalorder %s182, %s196
      %p198 = scmp.eq.s32.totalorder %s25, 0
      %p199 = por %p197, %p198
      %s201 = sadd.s32 %s200, 1
      %p204 = scmp.eq.s32.totalorder %s19, 1
      %p205 = scmp.ne.s32.totalorder %s200, %s202
      %p206 = scmp.eq.s32.totalorder %s19, 0
      %p207 = por %p205, %p206
      %p208 = scmp.ne.s32.totalorder %s200, %s202
      %p209 = scmp.eq.s32.totalorder %s24, 1
      %p210 = por %p208, %p209
      %p211 = scmp.ne.s32.totalorder %s202, %s203
      %p212 = scmp.eq.s32.totalorder %s24, 0
      %p213 = por %p211, %p212
      %p214 = scmp.ne.s32.totalorder %s202, %s203
      %p215 = scmp.eq.s32.totalorder %s25, 1
      %p216 = por %p214, %p215
      %p218 = scmp.ne.s32.totalorder %s203, %s217
      %p219 = scmp.eq.s32.totalorder %s25, 0
      %p220 = por %p218, %p219
      %s222 = sadd.s32 %s221, 1
      %p225 = scmp.eq.s32.totalorder %s19, 1
      %p226 = scmp.ne.s32.totalorder %s221, %s223
      %p227 = scmp.eq.s32.totalorder %s19, 0
      %p228 = por %p226, %p227
      %p229 = scmp.ne.s32.totalorder %s221, %s223
      %p230 = scmp.eq.s32.totalorder %s24, 1
      %p231 = por %p229, %p230
      %p232 = scmp.ne.s32.totalorder %s223, %s224
      %p233 = scmp.eq.s32.totalorder %s24, 0
      %p234 = por %p232, %p233
      %p235 = scmp.ne.s32.totalorder %s223, %s224
      %p236 = scmp.eq.s32.totalorder %s25, 1
      %p237 = por %p235, %p236
      %p239 = scmp.ne.s32.totalorder %s224, %s238
      %p240 = scmp.eq.s32.totalorder %s25, 0
      %p241 = por %p239, %p240
      %s242 = ssub.s32 %s19, %s26
      %p243 = scmp.eq.s32.totalorder %s242, 0
      %s245 = sadd.s32 %s244, 1
      %s246 = scalar_select %p243, %s244, %s245
      %p249 = pneg %p243
      %p250 = scmp.eq.s32.totalorder %s19, 1
      %p251 = por %p249, %p250
      %p252 = scmp.ne.s32.totalorder %s244, %s247
      %p253 = scmp.eq.s32.totalorder %s19, 0
      %p254 = por %p252, %p253
      %p255 = scmp.ne.s32.totalorder %s244, %s247
      %p256 = scmp.eq.s32.totalorder %s24, 1
      %p257 = por %p255, %p256
      %p258 = scmp.ne.s32.totalorder %s247, %s248
      %p259 = scmp.eq.s32.totalorder %s24, 0
      %p260 = por %p258, %p259
      %p261 = scmp.ne.s32.totalorder %s247, %s248
      %p262 = scmp.eq.s32.totalorder %s25, 1
      %p263 = por %p261, %p262
      %p265 = scmp.ne.s32.totalorder %s248, %s264
      %p266 = scmp.eq.s32.totalorder %s25, 0
      %p267 = por %p265, %p266
      %p268 = scmp.le.s32.totalorder 1, %s19
      %p269 = scmp.lt.s32.totalorder %s19, 3
      %p270 = pnand %p268, %p269
      %p271 = pneg %p270
      // Predicated region
      $region9: #{tpu_custom_call.1} parent=5 // pred_check
        _
      $region10: #{tpu_custom_call.1} parent=5 // pred_check_branch
        %273 = sbr.rel (%p270) target = $region12
      $region11: #{tpu_custom_call.1} parent=5 // pred_region
        %s274 = ssub.s32 %s19, 1
        // Predicated region
        $region13: #{tpu_custom_call.1} parent=11 // pred_check
          %p275 = pneg %p66
        $region14: #{tpu_custom_call.1} parent=11 // pred_check_branch
          %277 = sbr.rel (%p275) target = $region16
        $region15: #{tpu_custom_call.1} parent=11 // pred_region
          _
        $region16: #{tpu_custom_call.1} parent=11 // pred_fallthru
          _
        // Predicated region
        $region17: #{tpu_custom_call.1} parent=11 // pred_check
          %p278 = pneg %p87
        $region18: #{tpu_custom_call.1} parent=11 // pred_check_branch
          %280 = sbr.rel (%p278) target = $region20
        $region19: #{tpu_custom_call.1} parent=11 // pred_region
          _
        $region20: #{tpu_custom_call.1} parent=11 // pred_fallthru
          _
        // Predicated region
        $region21: #{tpu_custom_call.1} parent=11 // pred_check
          %p281 = pneg %p108
        $region22: #{tpu_custom_call.1} parent=11 // pred_check_branch
          %283 = sbr.rel (%p281) target = $region24
        $region23: #{tpu_custom_call.1} parent=11 // pred_region
          _
        $region24: #{tpu_custom_call.1} parent=11 // pred_fallthru
          _
        // Predicated region
        $region25: #{tpu_custom_call.1} parent=11 // pred_check
          %p284 = pneg %p129
        $region26: #{tpu_custom_call.1} parent=11 // pred_check_branch
          %286 = sbr.rel (%p284) target = $region28
        $region27: #{tpu_custom_call.1} parent=11 // pred_region
          _
        $region28: #{tpu_custom_call.1} parent=11 // pred_fallthru
          _
        // Predicated region
        $region29: #{tpu_custom_call.1} parent=11 // pred_check
          %p287 = pneg %p150
        $region30: #{tpu_custom_call.1} parent=11 // pred_check_branch
          %289 = sbr.rel (%p287) target = $region32
        $region31: #{tpu_custom_call.1} parent=11 // pred_region
          _
        $region32: #{tpu_custom_call.1} parent=11 // pred_fallthru
          _
        // Predicated region
        $region33: #{tpu_custom_call.1} parent=11 // pred_check
          %p290 = pneg %p171
        $region34: #{tpu_custom_call.1} parent=11 // pred_check_branch
          %292 = sbr.rel (%p290) target = $region36
        $region35: #{tpu_custom_call.1} parent=11 // pred_region
          _
        $region36: #{tpu_custom_call.1} parent=11 // pred_fallthru
          _
        // Predicated region
        $region37: #{tpu_custom_call.1} parent=11 // pred_check
          %p293 = pneg %p192
        $region38: #{tpu_custom_call.1} parent=11 // pred_check_branch
          %295 = sbr.rel (%p293) target = $region40
        $region39: #{tpu_custom_call.1} parent=11 // pred_region
          _
        $region40: #{tpu_custom_call.1} parent=11 // pred_fallthru
          _
        // Predicated region
        $region41: #{tpu_custom_call.1} parent=11 // pred_check
          %p296 = pneg %p213
        $region42: #{tpu_custom_call.1} parent=11 // pred_check_branch
          %298 = sbr.rel (%p296) target = $region44
        $region43: #{tpu_custom_call.1} parent=11 // pred_region
          _
        $region44: #{tpu_custom_call.1} parent=11 // pred_fallthru
          _
        // Predicated region
        $region45: #{tpu_custom_call.1} parent=11 // pred_check
          %p299 = pneg %p234
        $region46: #{tpu_custom_call.1} parent=11 // pred_check_branch
          %301 = sbr.rel (%p299) target = $region48
        $region47: #{tpu_custom_call.1} parent=11 // pred_region
          _
        $region48: #{tpu_custom_call.1} parent=11 // pred_fallthru
          _
      $region12: #{tpu_custom_call.1} parent=5 // pred_fallthru
        _
      %p302 = scmp.lt.s32.totalorder %s19, 2
      // Predicated region
      $region49: #{tpu_custom_call.1} parent=5 // pred_check
        %p303 = pneg %p302
      $region50: #{tpu_custom_call.1} parent=5 // pred_check_branch
        %305 = sbr.rel (%p303) target = $region52
      $region51: #{tpu_custom_call.1} parent=5 // pred_region
        // Predicated region
        $region53: #{tpu_custom_call.1} parent=51 // pred_check
          %p306 = pneg %p39
        $region54: #{tpu_custom_call.1} parent=51 // pred_check_branch
          %308 = sbr.rel (%p306) target = $region56
        $region55: #{tpu_custom_call.1} parent=51 // pred_region
          %p309 = scmp.lt.s32.totalorder %s19, 1
          %s310 = scalar_select %p309, %s19, 1
          %s311 = smul.addr %s310, 2
          %s312 = smul.addr %s311, 8
          %s313 = scalar_lea.vmem %s0, %s312
        $region56: #{tpu_custom_call.1} parent=51 // pred_fallthru
          _
      $region52: #{tpu_custom_call.1} parent=5 // pred_fallthru
        _
      %p314 = scmp.le.s32.totalorder 1, %s19
      %p315 = scmp.lt.s32.totalorder %s19, 3
      %p316 = pnand %p314, %p315
      %p317 = pneg %p316
      // Predicated region
      $region57: #{tpu_custom_call.1} parent=5 // pred_check
        _
      $region58: #{tpu_custom_call.1} parent=5 // pred_check_branch
        %319 = sbr.rel (%p316) target = $region60
      $region59: #{tpu_custom_call.1} parent=5 // pred_region
        %s320 = ssub.s32 %s19, 1
        %p321 = scmp.lt.s32.totalorder %s24, 1
        %s322 = scalar_select %p321, %s24, 1
        %s323 = smul.addr %s322, 2
        %s324 = smul.addr %s323, 8
        %s325 = scalar_lea.vmem %s0, %s324
        %p326 = pneg %p45
        %p327 = pneg %p42
        %p328 = pneg %p66
        %p329 = pneg %p63
        %p330 = pneg %p87
        %p331 = pneg %p84
        %p332 = pneg %p108
        %p333 = pneg %p105
        %p334 = pneg %p129
        %p335 = pneg %p126
        %p336 = pneg %p150
        %p337 = pneg %p147
        %p338 = pneg %p171
        %p339 = pneg %p168
        %p340 = pneg %p192
        %p341 = pneg %p189
        %p342 = pneg %p213
        %p343 = pneg %p210
        %p344 = pneg %p234
        %p345 = pneg %p231
        %p346 = pneg %p260
        %p347 = pneg %p257
        %s348 = sand.u32 %s247, 1
        %s349 = scalar_lea.sflag [#allocation3], %s348
        %s350 = sand.u32 %s247, 1
        %s351 = smul.addr %s350, 16
        %s352 = scalar_lea.vmem [#allocation2], %s351
        %p353 = scmp.lt.s32.totalorder %s24, 1
        %s354 = scalar_select %p353, %s24, 1
        %s355 = smul.addr %s354, 2
        %s356 = smul.addr %s355, 8
        %s357 = scalar_lea.vmem %s0, %s356
        %v358 = vld [vmem:[%s357] sm:$0xff]
        %v359 = vld [vmem:[%s357 + $0x8] sm:$0xff]
        %v360 = vld [vmem:[%s1] sm:$0xff]
        %v361 = vld [vmem:[%s1 + $0x8] sm:$0xff]
        %v362 = vld [vmem:[%s1 + $0x10] sm:$0xff]
        %v363 = vld [vmem:[%s1 + $0x18] sm:$0xff]
        %v364 = vld [vmem:[%s1 + $0x20] sm:$0xff]
        %v365 = vld [vmem:[%s1 + $0x28] sm:$0xff]
        %vm366 = vcmask 392192
        %v368 = vsel %vm366, %v358, 0
        %v371 = vsel %vm366, %v359, 0
        %373 = vmatprep.subr.mxu0 0.0
        %374 = vmatpush1.msra.mxu0 0.0
        %375 = vmatprep.subr.mxu0 0.0
        %376 = vmatpush1.msra.mxu0 0.0
        %377 = vmatprep.subr.mxu0 0.0
        %378 = vmatpush1.msra.mxu0 0.0
        %379 = vmatprep.subr.mxu0 0.0
        %380 = vmatpush1.msra.mxu0 0.0
        %381 = vmatprep.subr.mxu0 0.0
        %382 = vmatpush1.msra.mxu0 0.0
        %383 = vmatprep.subr.mxu0 0.0
        %384 = vmatpush1.msra.mxu0 0.0
        %385 = vmatprep.subr.mxu0 0.0
        %386 = vmatpush1.msra.mxu0 0.0
        %387 = vmatprep.subr.mxu0 0.0
        %388 = vmatpush1.msra.mxu0 0.0
        %389 = vmatprep.subr.mxu0 0.0
        %390 = vmatpush1.msra.mxu0 0.0
        %391 = vmatprep.subr.mxu0 0.0
        %392 = vmatpush1.msra.mxu0 0.0
        %393 = vmatprep.subr.mxu0 0.0
        %394 = vmatpush1.msra.mxu0 %v365
        %395 = vmatprep.subr.mxu0 0.0
        %396 = vmatpush1.msra.mxu0 %v364
        %397 = vmatprep.subr.mxu0 0.0
        %398 = vmatpush1.msra.mxu0 %v363
        %399 = vmatprep.subr.mxu0 0.0
        %400 = vmatpush1.msra.mxu0 %v362
        %401 = vmatprep.subr.mxu0 0.0
        %402 = vmatpush1.msra.mxu0 %v361
        %403 = vmatprep.subr.mxu0 0.0
        %404 = vmatpush1.msra.mxu0 %v360
        %405 = vmatprep.subr.mxu0 0.0
        %406 = vmatpush2.msra.mxu0 0.0
        %407 = vmatprep.subr.mxu0 0.0
        %408 = vmatpush2.msra.mxu0 0.0
        %409 = vmatprep.subr.mxu0 0.0
        %410 = vmatpush2.msra.mxu0 0.0
        %411 = vmatprep.subr.mxu0 0.0
        %412 = vmatpush2.msra.mxu0 0.0
        %413 = vmatprep.subr.mxu0 0.0
        %414 = vmatpush2.msra.mxu0 0.0
        %415 = vmatprep.subr.mxu0 0.0
        %416 = vmatpush2.msra.mxu0 0.0
        %417 = vmatprep.subr.mxu0 0.0
        %418 = vmatpush2.msra.mxu0 0.0
        %419 = vmatprep.subr.mxu0 0.0
        %420 = vmatpush2.msra.mxu0 0.0
        %421 = vmatprep.subr.mxu0 0.0
        %422 = vmatpush2.msra.mxu0 0.0
        %423 = vmatprep.subr.mxu0 0.0
        %424 = vmatpush2.msra.mxu0 0.0
        %425 = vmatprep.subr.mxu0 0.0
        %426 = vmatpush2.msra.mxu0 0.0
        %427 = vmatprep.subr.mxu0 0.0
        %428 = vmatpush2.msra.mxu0 0.0
        %429 = vmatprep.subr.mxu0 0.0
        %430 = vmatpush2.msra.mxu0 0.0
        %431 = vmatprep.subr.mxu0 0.0
        %432 = vmatpush2.msra.mxu0 0.0
        %433 = vmatprep.subr.mxu0 0.0
        %434 = vmatpush2.msra.mxu0 0.0
        %435 = vmatprep.subr.mxu0 0.0
        %436 = vmatpush2.msra.mxu0 0.0
        %437 = vmatprep.mubr.f32.mxu0 0.0
        %438 = vmatmul.mubr.f32.gmra.mxu0 %v368
        %v439 = vpop.f32.mrf.mxu0
        %v440 = vadd.f32 0.0, %v439
        %v441 = vpop.f32.mrf.mxu0
        %442 = vmatprep.mubr.f32.mxu0 0.0
        %443 = vmatmul.mubr.f32.gmra.mxu0 %v371
        %v444 = vpop.f32.mrf.mxu0
        %v445 = vadd.f32 0.0, %v444
        %v446 = vpop.f32.mrf.mxu0
        %447 = vdwg.mxu0
        %vm448 = vcmask 261120
        %v449 = vsel %vm448, %v440, 0.0
        %450 = vadd.xlane.f32.xlu0 %v449
        %v451 = vpop.xlane.xlu0 %450
        %v452 = vsel %vm448, %v445, 0.0
        %453 = vadd.xlane.f32.xlu0 %v452
        %v454 = vpop.xlane.xlu0 %453
        %v455 = vrcp.pop 32.0
        %v456 = vmul.f32 %v451, %v455
        %v457 = vmul.f32 %v454, %v455
        %v458 = vsub.f32 %v440, %v456
        %v459 = vsub.f32 %v445, %v457
        %v460 = vmul.f32 %v458, %v458
        %v461 = vmul.f32 %v459, %v459
        %v462 = vsel %vm448, %v460, 0.0
        %463 = vadd.xlane.f32.xlu0 %v462
        %v464 = vpop.xlane.xlu0 %463
        %v465 = vsel %vm448, %v461, 0.0
        %466 = vadd.xlane.f32.xlu0 %v465
        %v467 = vpop.xlane.xlu0 %466
        %v468 = vmul.f32 %v464, %v455
        %v469 = vmul.f32 %v467, %v455
        %v470 = vadd.f32 %v468, 1e-05
        %v471 = vadd.f32 %v469, 1e-05
        %v472 = vrsqrt.pop %v470
        %v473 = vrsqrt.pop %v471
        %v474 = vmul.f32 %v458, %v472
        %v475 = vmul.f32 %v459, %v473
        %v476 = vld [vmem:[%s2] sm:$0x1]
        %v478 = vlaneseq
        %v479 = vshrl.u32 %v478, 7
        %v480 = vsub.s32 0, %v479
        %v481 = vrot.slane %v476, %v480
        %v483 = vmul.f32 %v474, %v481
        %v484 = vmul.f32 %v475, %v481
        %v485 = vld [vmem:[%s3] sm:$0x1]
        %v487 = vlaneseq
        %v488 = vshrl.u32 %v487, 7
        %v489 = vsub.s32 0, %v488
        %v490 = vrot.slane %v485, %v489
        %v492 = vadd.f32 %v483, %v490
        %v493 = vadd.f32 %v484, %v490
        %v494 = vld [vmem:[%s5] sm:$0xff]
        %v495 = vld [vmem:[%s5 + $0x8] sm:$0xff]
        %v496 = vld [vmem:[%s5 + $0x10] sm:$0xff]
        %v497 = vld [vmem:[%s5 + $0x18] sm:$0xff]
        %v499 = vsel %vm448, %v492, 0
        %v502 = vsel %vm448, %v493, 0
        %504 = vmatprep.subr.mxu0 0.0
        %505 = vmatpush1.msra.mxu0 0.0
        %506 = vmatprep.subr.mxu0 0.0
        %507 = vmatpush1.msra.mxu0 0.0
        %508 = vmatprep.subr.mxu0 0.0
        %509 = vmatpush1.msra.mxu0 0.0
        %510 = vmatprep.subr.mxu0 0.0
        %511 = vmatpush1.msra.mxu0 0.0
        %512 = vmatprep.subr.mxu0 0.0
        %513 = vmatpush1.msra.mxu0 0.0
        %514 = vmatprep.subr.mxu0 0.0
        %515 = vmatpush1.msra.mxu0 0.0
        %516 = vmatprep.subr.mxu0 0.0
        %517 = vmatpush1.msra.mxu0 0.0
        %518 = vmatprep.subr.mxu0 0.0
        %519 = vmatpush1.msra.mxu0 0.0
        %520 = vmatprep.subr.mxu0 0.0
        %521 = vmatpush1.msra.mxu0 0.0
        %522 = vmatprep.subr.mxu0 0.0
        %523 = vmatpush1.msra.mxu0 0.0
        %524 = vmatprep.subr.mxu0 0.0
        %525 = vmatpush1.msra.mxu0 0.0
        %526 = vmatprep.subr.mxu0 0.0
        %527 = vmatpush1.msra.mxu0 0.0
        %528 = vmatprep.subr.mxu0 0.0
        %529 = vmatpush1.msra.mxu0 %v497
        %530 = vmatprep.subr.mxu0 0.0
        %531 = vmatpush1.msra.mxu0 %v496
        %532 = vmatprep.subr.mxu0 0.0
        %533 = vmatpush1.msra.mxu0 %v495
        %534 = vmatprep.subr.mxu0 0.0
        %535 = vmatpush1.msra.mxu0 %v494
        %536 = vmatprep.subr.mxu0 0.0
        %537 = vmatpush2.msra.mxu0 0.0
        %538 = vmatprep.subr.mxu0 0.0
        %539 = vmatpush2.msra.mxu0 0.0
        %540 = vmatprep.subr.mxu0 0.0
        %541 = vmatpush2.msra.mxu0 0.0
        %542 = vmatprep.subr.mxu0 0.0
        %543 = vmatpush2.msra.mxu0 0.0
        %544 = vmatprep.subr.mxu0 0.0
        %545 = vmatpush2.msra.mxu0 0.0
        %546 = vmatprep.subr.mxu0 0.0
        %547 = vmatpush2.msra.mxu0 0.0
        %548 = vmatprep.subr.mxu0 0.0
        %549 = vmatpush2.msra.mxu0 0.0
        %550 = vmatprep.subr.mxu0 0.0
        %551 = vmatpush2.msra.mxu0 0.0
        %552 = vmatprep.subr.mxu0 0.0
        %553 = vmatpush2.msra.mxu0 0.0
        %554 = vmatprep.subr.mxu0 0.0
        %555 = vmatpush2.msra.mxu0 0.0
        %556 = vmatprep.subr.mxu0 0.0
        %557 = vmatpush2.msra.mxu0 0.0
        %558 = vmatprep.subr.mxu0 0.0
        %559 = vmatpush2.msra.mxu0 0.0
        %560 = vmatprep.subr.mxu0 0.0
        %561 = vmatpush2.msra.mxu0 0.0
        %562 = vmatprep.subr.mxu0 0.0
        %563 = vmatpush2.msra.mxu0 0.0
        %564 = vmatprep.subr.mxu0 0.0
        %565 = vmatpush2.msra.mxu0 0.0
        %566 = vmatprep.subr.mxu0 0.0
        %567 = vmatpush2.msra.mxu0 0.0
        %568 = vmatprep.mubr.f32.mxu0 0.0
        %569 = vmatmul.mubr.f32.gmra.mxu0 %v499
        %v570 = vpop.f32.mrf.mxu0
        %v571 = vadd.f32 0.0, %v570
        %v572 = vpop.f32.mrf.mxu0
        %573 = vmatprep.mubr.f32.mxu0 0.0
        %574 = vmatmul.mubr.f32.gmra.mxu0 %v502
        %v575 = vpop.f32.mrf.mxu0
        %v576 = vadd.f32 0.0, %v575
        %v577 = vpop.f32.mrf.mxu0
        %578 = vdwg.mxu0
        %v579 = vld [vmem:[%s6] sm:$0xff]
        %v580 = vld [vmem:[%s6 + $0x8] sm:$0xff]
        %v581 = vadd.f32 %v571, %v579
        %v582 = vadd.f32 %v576, %v580
        %v583 = vld [vmem:[%s7] sm:$0x1]
        %v585 = vlaneseq
        %v586 = vshrl.u32 %v585, 7
        %v587 = vsub.s32 0, %v586
        %v588 = vrot.slane %v583, %v587
        %589 = vrot.lane.b32.xlu0 %v588, 32
        %v590 = vpop.permute.xlu0 %589
        %v592 = vadd.f32 %v571, %v590
        %v593 = vadd.f32 %v576, %v590
        %v594 = vld [vmem:[%s4] sm:$0xff]
        %v595 = vld [vmem:[%s4 + $0x8] sm:$0xff]
        %v596 = vld [vmem:[%s4 + $0x10] sm:$0xff]
        %v597 = vld [vmem:[%s4 + $0x18] sm:$0xff]
        %v598 = vld [vmem:[%s4 + $0x20] sm:$0xff]
        %v599 = vld [vmem:[%s4 + $0x28] sm:$0xff]
        %v600 = vld [vmem:[%s4 + $0x30] sm:$0xff]
        %v601 = vld [vmem:[%s4 + $0x38] sm:$0xff]
        %604 = vrot.lane.b32.xlu0 %v581, 120
        %v605 = vpop.permute.xlu0 %604
        %606 = vrot.lane.b32.xlu0 %v582, 120
        %v607 = vpop.permute.xlu0 %606
        %608 = vrot.lane.b32.xlu0 %v581, 112
        %v609 = vpop.permute.xlu0 %608
        %610 = vrot.lane.b32.xlu0 %v582, 112
        %v611 = vpop.permute.xlu0 %610
        %612 = vrot.lane.b32.xlu0 %v581, 104
        %v613 = vpop.permute.xlu0 %612
        %614 = vrot.lane.b32.xlu0 %v582, 104
        %v615 = vpop.permute.xlu0 %614
        %618 = vrot.lane.b32.xlu0 %v592, 120
        %v619 = vpop.permute.xlu0 %618
        %620 = vrot.lane.b32.xlu0 %v593, 120
        %v621 = vpop.permute.xlu0 %620
        %622 = vrot.lane.b32.xlu0 %v592, 112
        %v623 = vpop.permute.xlu0 %622
        %624 = vrot.lane.b32.xlu0 %v593, 112
        %v625 = vpop.permute.xlu0 %624
        %626 = vrot.lane.b32.xlu0 %v592, 104
        %v627 = vpop.permute.xlu0 %626
        %628 = vrot.lane.b32.xlu0 %v593, 104
        %v629 = vpop.permute.xlu0 %628
        %vm630 = vcmask 64512
        %v632 = vsel %vm630, %v594, 0
        %v635 = vsel %vm630, %v595, 0
        %v637 = vsel %vm630, %v581, 0
        %v639 = vsel %vm630, %v582, 0
        %641 = vmatprep.subr.mxu0 0.0
        %642 = vmatpush1.xpose.msra.mxu0 0.0
        %643 = vmatprep.subr.mxu0 0.0
        %644 = vmatpush1.xpose.msra.mxu0 0.0
        %645 = vmatprep.subr.mxu0 0.0
        %646 = vmatpush1.xpose.msra.mxu0 0.0
        %647 = vmatprep.subr.mxu0 0.0
        %648 = vmatpush1.xpose.msra.mxu0 0.0
        %649 = vmatprep.subr.mxu0 0.0
        %650 = vmatpush1.xpose.msra.mxu0 0.0
        %651 = vmatprep.subr.mxu0 0.0
        %652 = vmatpush1.xpose.msra.mxu0 0.0
        %653 = vmatprep.subr.mxu0 0.0
        %654 = vmatpush1.xpose.msra.mxu0 0.0
        %655 = vmatprep.subr.mxu0 0.0
        %656 = vmatpush1.xpose.msra.mxu0 0.0
        %657 = vmatprep.subr.mxu0 0.0
        %658 = vmatpush1.xpose.msra.mxu0 0.0
        %659 = vmatprep.subr.mxu0 0.0
        %660 = vmatpush1.xpose.msra.mxu0 0.0
        %661 = vmatprep.subr.mxu0 0.0
        %662 = vmatpush1.xpose.msra.mxu0 0.0
        %663 = vmatprep.subr.mxu0 0.0
        %664 = vmatpush1.xpose.msra.mxu0 0.0
        %665 = vmatprep.subr.mxu0 0.0
        %666 = vmatpush1.xpose.msra.mxu0 0.0
        %667 = vmatprep.subr.mxu0 0.0
        %668 = vmatpush1.xpose.msra.mxu0 0.0
        %669 = vmatprep.subr.mxu0 0.0
        %670 = vmatpush1.xpose.msra.mxu0 %v639
        %671 = vmatprep.subr.mxu0 0.0
        %672 = vmatpush1.xpose.msra.mxu0 %v637
        %673 = vmatprep.subr.mxu0 0.0
        %674 = vmatpush2.xpose.msra.mxu0 0.0
        %675 = vmatprep.subr.mxu0 0.0
        %676 = vmatpush2.xpose.msra.mxu0 0.0
        %677 = vmatprep.subr.mxu0 0.0
        %678 = vmatpush2.xpose.msra.mxu0 0.0
        %679 = vmatprep.subr.mxu0 0.0
        %680 = vmatpush2.xpose.msra.mxu0 0.0
        %681 = vmatprep.subr.mxu0 0.0
        %682 = vmatpush2.xpose.msra.mxu0 0.0
        %683 = vmatprep.subr.mxu0 0.0
        %684 = vmatpush2.xpose.msra.mxu0 0.0
        %685 = vmatprep.subr.mxu0 0.0
        %686 = vmatpush2.xpose.msra.mxu0 0.0
        %687 = vmatprep.subr.mxu0 0.0
        %688 = vmatpush2.xpose.msra.mxu0 0.0
        %689 = vmatprep.subr.mxu0 0.0
        %690 = vmatpush2.xpose.msra.mxu0 0.0
        %691 = vmatprep.subr.mxu0 0.0
        %692 = vmatpush2.xpose.msra.mxu0 0.0
        %693 = vmatprep.subr.mxu0 0.0
        %694 = vmatpush2.xpose.msra.mxu0 0.0
        %695 = vmatprep.subr.mxu0 0.0
        %696 = vmatpush2.xpose.msra.mxu0 0.0
        %697 = vmatprep.subr.mxu0 0.0
        %698 = vmatpush2.xpose.msra.mxu0 0.0
        %699 = vmatprep.subr.mxu0 0.0
        %700 = vmatpush2.xpose.msra.mxu0 0.0
        %701 = vmatprep.subr.mxu0 0.0
        %702 = vmatpush2.xpose.msra.mxu0 0.0
        %703 = vmatprep.subr.mxu0 0.0
        %704 = vmatpush2.xpose.msra.mxu0 0.0
        %705 = vmatprep.mubr.f32.mxu0 0.0
        %706 = vmatmul.mubr.f32.gmra.mxu0 %v632
        %v707 = vpop.f32.mrf.mxu0
        %v708 = vadd.f32 0.0, %v707
        %v709 = vpop.f32.mrf.mxu0
        %710 = vmatprep.mubr.f32.mxu0 0.0
        %711 = vmatmul.mubr.f32.gmra.mxu0 %v635
        %v712 = vpop.f32.mrf.mxu0
        %v713 = vadd.f32 0.0, %v712
        %v714 = vpop.f32.mrf.mxu0
        %715 = vdwg.mxu0
        %v717 = vsel %vm630, %v596, 0
        %v720 = vsel %vm630, %v597, 0
        %v722 = vsel %vm630, %v605, 0
        %v724 = vsel %vm630, %v607, 0
        %726 = vmatprep.subr.mxu0 0.0
        %727 = vmatpush1.xpose.msra.mxu0 0.0
        %728 = vmatprep.subr.mxu0 0.0
        %729 = vmatpush1.xpose.msra.mxu0 0.0
        %730 = vmatprep.subr.mxu0 0.0
        %731 = vmatpush1.xpose.msra.mxu0 0.0
        %732 = vmatprep.subr.mxu0 0.0
        %733 = vmatpush1.xpose.msra.mxu0 0.0
        %734 = vmatprep.subr.mxu0 0.0
        %735 = vmatpush1.xpose.msra.mxu0 0.0
        %736 = vmatprep.subr.mxu0 0.0
        %737 = vmatpush1.xpose.msra.mxu0 0.0
        %738 = vmatprep.subr.mxu0 0.0
        %739 = vmatpush1.xpose.msra.mxu0 0.0
        %740 = vmatprep.subr.mxu0 0.0
        %741 = vmatpush1.xpose.msra.mxu0 0.0
        %742 = vmatprep.subr.mxu0 0.0
        %743 = vmatpush1.xpose.msra.mxu0 0.0
        %744 = vmatprep.subr.mxu0 0.0
        %745 = vmatpush1.xpose.msra.mxu0 0.0
        %746 = vmatprep.subr.mxu0 0.0
        %747 = vmatpush1.xpose.msra.mxu0 0.0
        %748 = vmatprep.subr.mxu0 0.0
        %749 = vmatpush1.xpose.msra.mxu0 0.0
        %750 = vmatprep.subr.mxu0 0.0
        %751 = vmatpush1.xpose.msra.mxu0 0.0
        %752 = vmatprep.subr.mxu0 0.0
        %753 = vmatpush1.xpose.msra.mxu0 0.0
        %754 = vmatprep.subr.mxu0 0.0
        %755 = vmatpush1.xpose.msra.mxu0 %v724
        %756 = vmatprep.subr.mxu0 0.0
        %757 = vmatpush1.xpose.msra.mxu0 %v722
        %758 = vmatprep.subr.mxu0 0.0
        %759 = vmatpush2.xpose.msra.mxu0 0.0
        %760 = vmatprep.subr.mxu0 0.0
        %761 = vmatpush2.xpose.msra.mxu0 0.0
        %762 = vmatprep.subr.mxu0 0.0
        %763 = vmatpush2.xpose.msra.mxu0 0.0
        %764 = vmatprep.subr.mxu0 0.0
        %765 = vmatpush2.xpose.msra.mxu0 0.0
        %766 = vmatprep.subr.mxu0 0.0
        %767 = vmatpush2.xpose.msra.mxu0 0.0
        %768 = vmatprep.subr.mxu0 0.0
        %769 = vmatpush2.xpose.msra.mxu0 0.0
        %770 = vmatprep.subr.mxu0 0.0
        %771 = vmatpush2.xpose.msra.mxu0 0.0
        %772 = vmatprep.subr.mxu0 0.0
        %773 = vmatpush2.xpose.msra.mxu0 0.0
        %774 = vmatprep.subr.mxu0 0.0
        %775 = vmatpush2.xpose.msra.mxu0 0.0
        %776 = vmatprep.subr.mxu0 0.0
        %777 = vmatpush2.xpose.msra.mxu0 0.0
        %778 = vmatprep.subr.mxu0 0.0
        %779 = vmatpush2.xpose.msra.mxu0 0.0
        %780 = vmatprep.subr.mxu0 0.0
        %781 = vmatpush2.xpose.msra.mxu0 0.0
        %782 = vmatprep.subr.mxu0 0.0
        %783 = vmatpush2.xpose.msra.mxu0 0.0
        %784 = vmatprep.subr.mxu0 0.0
        %785 = vmatpush2.xpose.msra.mxu0 0.0
        %786 = vmatprep.subr.mxu0 0.0
        %787 = vmatpush2.xpose.msra.mxu0 0.0
        %788 = vmatprep.subr.mxu0 0.0
        %789 = vmatpush2.xpose.msra.mxu0 0.0
        %790 = vmatprep.mubr.f32.mxu0 0.0
        %791 = vmatmul.mubr.f32.gmra.mxu0 %v717
        %v792 = vpop.f32.mrf.mxu0
        %v793 = vadd.f32 0.0, %v792
        %v794 = vpop.f32.mrf.mxu0
        %795 = vmatprep.mubr.f32.mxu0 0.0
        %796 = vmatmul.mubr.f32.gmra.mxu0 %v720
        %v797 = vpop.f32.mrf.mxu0
        %v798 = vadd.f32 0.0, %v797
        %v799 = vpop.f32.mrf.mxu0
        %800 = vdwg.mxu0
        %v802 = vsel %vm630, %v598, 0
        %v805 = vsel %vm630, %v599, 0
        %v807 = vsel %vm630, %v609, 0
        %v809 = vsel %vm630, %v611, 0
        %811 = vmatprep.subr.mxu0 0.0
        %812 = vmatpush1.xpose.msra.mxu0 0.0
        %813 = vmatprep.subr.mxu0 0.0
        %814 = vmatpush1.xpose.msra.mxu0 0.0
        %815 = vmatprep.subr.mxu0 0.0
        %816 = vmatpush1.xpose.msra.mxu0 0.0
        %817 = vmatprep.subr.mxu0 0.0
        %818 = vmatpush1.xpose.msra.mxu0 0.0
        %819 = vmatprep.subr.mxu0 0.0
        %820 = vmatpush1.xpose.msra.mxu0 0.0
        %821 = vmatprep.subr.mxu0 0.0
        %822 = vmatpush1.xpose.msra.mxu0 0.0
        %823 = vmatprep.subr.mxu0 0.0
        %824 = vmatpush1.xpose.msra.mxu0 0.0
        %825 = vmatprep.subr.mxu0 0.0
        %826 = vmatpush1.xpose.msra.mxu0 0.0
        %827 = vmatprep.subr.mxu0 0.0
        %828 = vmatpush1.xpose.msra.mxu0 0.0
        %829 = vmatprep.subr.mxu0 0.0
        %830 = vmatpush1.xpose.msra.mxu0 0.0
        %831 = vmatprep.subr.mxu0 0.0
        %832 = vmatpush1.xpose.msra.mxu0 0.0
        %833 = vmatprep.subr.mxu0 0.0
        %834 = vmatpush1.xpose.msra.mxu0 0.0
        %835 = vmatprep.subr.mxu0 0.0
        %836 = vmatpush1.xpose.msra.mxu0 0.0
        %837 = vmatprep.subr.mxu0 0.0
        %838 = vmatpush1.xpose.msra.mxu0 0.0
        %839 = vmatprep.subr.mxu0 0.0
        %840 = vmatpush1.xpose.msra.mxu0 %v809
        %841 = vmatprep.subr.mxu0 0.0
        %842 = vmatpush1.xpose.msra.mxu0 %v807
        %843 = vmatprep.subr.mxu0 0.0
        %844 = vmatpush2.xpose.msra.mxu0 0.0
        %845 = vmatprep.subr.mxu0 0.0
        %846 = vmatpush2.xpose.msra.mxu0 0.0
        %847 = vmatprep.subr.mxu0 0.0
        %848 = vmatpush2.xpose.msra.mxu0 0.0
        %849 = vmatprep.subr.mxu0 0.0
        %850 = vmatpush2.xpose.msra.mxu0 0.0
        %851 = vmatprep.subr.mxu0 0.0
        %852 = vmatpush2.xpose.msra.mxu0 0.0
        %853 = vmatprep.subr.mxu0 0.0
        %854 = vmatpush2.xpose.msra.mxu0 0.0
        %855 = vmatprep.subr.mxu0 0.0
        %856 = vmatpush2.xpose.msra.mxu0 0.0
        %857 = vmatprep.subr.mxu0 0.0
        %858 = vmatpush2.xpose.msra.mxu0 0.0
        %859 = vmatprep.subr.mxu0 0.0
        %860 = vmatpush2.xpose.msra.mxu0 0.0
        %861 = vmatprep.subr.mxu0 0.0
        %862 = vmatpush2.xpose.msra.mxu0 0.0
        %863 = vmatprep.subr.mxu0 0.0
        %864 = vmatpush2.xpose.msra.mxu0 0.0
        %865 = vmatprep.subr.mxu0 0.0
        %866 = vmatpush2.xpose.msra.mxu0 0.0
        %867 = vmatprep.subr.mxu0 0.0
        %868 = vmatpush2.xpose.msra.mxu0 0.0
        %869 = vmatprep.subr.mxu0 0.0
        %870 = vmatpush2.xpose.msra.mxu0 0.0
        %871 = vmatprep.subr.mxu0 0.0
        %872 = vmatpush2.xpose.msra.mxu0 0.0
        %873 = vmatprep.subr.mxu0 0.0
        %874 = vmatpush2.xpose.msra.mxu0 0.0
        %875 = vmatprep.mubr.f32.mxu0 0.0
        %876 = vmatmul.mubr.f32.gmra.mxu0 %v802
        %v877 = vpop.f32.mrf.mxu0
        %v878 = vadd.f32 0.0, %v877
        %v879 = vpop.f32.mrf.mxu0
        %880 = vmatprep.mubr.f32.mxu0 0.0
        %881 = vmatmul.mubr.f32.gmra.mxu0 %v805
        %v882 = vpop.f32.mrf.mxu0
        %v883 = vadd.f32 0.0, %v882
        %v884 = vpop.f32.mrf.mxu0
        %885 = vdwg.mxu0
        %v887 = vsel %vm630, %v600, 0
        %v890 = vsel %vm630, %v601, 0
        %v892 = vsel %vm630, %v613, 0
        %v894 = vsel %vm630, %v615, 0
        %896 = vmatprep.subr.mxu0 0.0
        %897 = vmatpush1.xpose.msra.mxu0 0.0
        %898 = vmatprep.subr.mxu0 0.0
        %899 = vmatpush1.xpose.msra.mxu0 0.0
        %900 = vmatprep.subr.mxu0 0.0
        %901 = vmatpush1.xpose.msra.mxu0 0.0
        %902 = vmatprep.subr.mxu0 0.0
        %903 = vmatpush1.xpose.msra.mxu0 0.0
        %904 = vmatprep.subr.mxu0 0.0
        %905 = vmatpush1.xpose.msra.mxu0 0.0
        %906 = vmatprep.subr.mxu0 0.0
        %907 = vmatpush1.xpose.msra.mxu0 0.0
        %908 = vmatprep.subr.mxu0 0.0
        %909 = vmatpush1.xpose.msra.mxu0 0.0
        %910 = vmatprep.subr.mxu0 0.0
        %911 = vmatpush1.xpose.msra.mxu0 0.0
        %912 = vmatprep.subr.mxu0 0.0
        %913 = vmatpush1.xpose.msra.mxu0 0.0
        %914 = vmatprep.subr.mxu0 0.0
        %915 = vmatpush1.xpose.msra.mxu0 0.0
        %916 = vmatprep.subr.mxu0 0.0
        %917 = vmatpush1.xpose.msra.mxu0 0.0
        %918 = vmatprep.subr.mxu0 0.0
        %919 = vmatpush1.xpose.msra.mxu0 0.0
        %920 = vmatprep.subr.mxu0 0.0
        %921 = vmatpush1.xpose.msra.mxu0 0.0
        %922 = vmatprep.subr.mxu0 0.0
        %923 = vmatpush1.xpose.msra.mxu0 0.0
        %924 = vmatprep.subr.mxu0 0.0
        %925 = vmatpush1.xpose.msra.mxu0 %v894
        %926 = vmatprep.subr.mxu0 0.0
        %927 = vmatpush1.xpose.msra.mxu0 %v892
        %928 = vmatprep.subr.mxu0 0.0
        %929 = vmatpush2.xpose.msra.mxu0 0.0
        %930 = vmatprep.subr.mxu0 0.0
        %931 = vmatpush2.xpose.msra.mxu0 0.0
        %932 = vmatprep.subr.mxu0 0.0
        %933 = vmatpush2.xpose.msra.mxu0 0.0
        %934 = vmatprep.subr.mxu0 0.0
        %935 = vmatpush2.xpose.msra.mxu0 0.0
        %936 = vmatprep.subr.mxu0 0.0
        %937 = vmatpush2.xpose.msra.mxu0 0.0
        %938 = vmatprep.subr.mxu0 0.0
        %939 = vmatpush2.xpose.msra.mxu0 0.0
        %940 = vmatprep.subr.mxu0 0.0
        %941 = vmatpush2.xpose.msra.mxu0 0.0
        %942 = vmatprep.subr.mxu0 0.0
        %943 = vmatpush2.xpose.msra.mxu0 0.0
        %944 = vmatprep.subr.mxu0 0.0
        %945 = vmatpush2.xpose.msra.mxu0 0.0
        %946 = vmatprep.subr.mxu0 0.0
        %947 = vmatpush2.xpose.msra.mxu0 0.0
        %948 = vmatprep.subr.mxu0 0.0
        %949 = vmatpush2.xpose.msra.mxu0 0.0
        %950 = vmatprep.subr.mxu0 0.0
        %951 = vmatpush2.xpose.msra.mxu0 0.0
        %952 = vmatprep.subr.mxu0 0.0
        %953 = vmatpush2.xpose.msra.mxu0 0.0
        %954 = vmatprep.subr.mxu0 0.0
        %955 = vmatpush2.xpose.msra.mxu0 0.0
        %956 = vmatprep.subr.mxu0 0.0
        %957 = vmatpush2.xpose.msra.mxu0 0.0
        %958 = vmatprep.subr.mxu0 0.0
        %959 = vmatpush2.xpose.msra.mxu0 0.0
        %960 = vmatprep.mubr.f32.mxu0 0.0
        %961 = vmatmul.mubr.f32.gmra.mxu0 %v887
        %v962 = vpop.f32.mrf.mxu0
        %v963 = vadd.f32 0.0, %v962
        %v964 = vpop.f32.mrf.mxu0
        %965 = vmatprep.mubr.f32.mxu0 0.0
        %966 = vmatmul.mubr.f32.gmra.mxu0 %v890
        %v967 = vpop.f32.mrf.mxu0
        %v968 = vadd.f32 0.0, %v967
        %v969 = vpop.f32.mrf.mxu0
        %970 = vdwg.mxu0
        %vm971 = vcmask 130048
        %v972 = vsel %vm971, %v708, -inf
        %973 = vmax.xlane.f32.xlu0 %v972
        %v974 = vpop.xlane.xlu0 %973
        %v975 = vsel %vm971, %v713, -inf
        %976 = vmax.xlane.f32.xlu0 %v975
        %v977 = vpop.xlane.xlu0 %976
        %v978 = vsel %vm971, %v793, -inf
        %979 = vmax.xlane.f32.xlu0 %v978
        %v980 = vpop.xlane.xlu0 %979
        %v981 = vsel %vm971, %v798, -inf
        %982 = vmax.xlane.f32.xlu0 %v981
        %v983 = vpop.xlane.xlu0 %982
        %v984 = vsel %vm971, %v878, -inf
        %985 = vmax.xlane.f32.xlu0 %v984
        %v986 = vpop.xlane.xlu0 %985
        %v987 = vsel %vm971, %v883, -inf
        %988 = vmax.xlane.f32.xlu0 %v987
        %v989 = vpop.xlane.xlu0 %988
        %v990 = vsel %vm971, %v963, -inf
        %991 = vmax.xlane.f32.xlu0 %v990
        %v992 = vpop.xlane.xlu0 %991
        %v993 = vsel %vm971, %v968, -inf
        %994 = vmax.xlane.f32.xlu0 %v993
        %v995 = vpop.xlane.xlu0 %994
        %v996 = vsub.f32 %v708, %v974
        %v997 = vsub.f32 %v713, %v977
        %v998 = vsub.f32 %v793, %v980
        %v999 = vsub.f32 %v798, %v983
        %v1000 = vsub.f32 %v878, %v986
        %v1001 = vsub.f32 %v883, %v989
        %v1002 = vsub.f32 %v963, %v992
        %v1003 = vsub.f32 %v968, %v995
        %v1004 = vmul.f32 %v996, 1.442695
        %v1005 = vpow.pop %v1004
        %v1006 = vmul.f32 %v997, 1.442695
        %v1007 = vpow.pop %v1006
        %v1008 = vmul.f32 %v998, 1.442695
        %v1009 = vpow.pop %v1008
        %v1010 = vmul.f32 %v999, 1.442695
        %v1011 = vpow.pop %v1010
        %v1012 = vmul.f32 %v1000, 1.442695
        %v1013 = vpow.pop %v1012
        %v1014 = vmul.f32 %v1001, 1.442695
        %v1015 = vpow.pop %v1014
        %v1016 = vmul.f32 %v1002, 1.442695
        %v1017 = vpow.pop %v1016
        %v1018 = vmul.f32 %v1003, 1.442695
        %v1019 = vpow.pop %v1018
        %v1020 = vsel %vm971, %v1005, 0.0
        %1021 = vadd.xlane.f32.xlu0 %v1020
        %v1022 = vpop.xlane.xlu0 %1021
        %v1023 = vsel %vm971, %v1007, 0.0
        %1024 = vadd.xlane.f32.xlu0 %v1023
        %v1025 = vpop.xlane.xlu0 %1024
        %v1026 = vsel %vm971, %v1009, 0.0
        %1027 = vadd.xlane.f32.xlu0 %v1026
        %v1028 = vpop.xlane.xlu0 %1027
        %v1029 = vsel %vm971, %v1011, 0.0
        %1030 = vadd.xlane.f32.xlu0 %v1029
        %v1031 = vpop.xlane.xlu0 %1030
        %v1032 = vsel %vm971, %v1013, 0.0
        %1033 = vadd.xlane.f32.xlu0 %v1032
        %v1034 = vpop.xlane.xlu0 %1033
        %v1035 = vsel %vm971, %v1015, 0.0
        %1036 = vadd.xlane.f32.xlu0 %v1035
        %v1037 = vpop.xlane.xlu0 %1036
        %v1038 = vsel %vm971, %v1017, 0.0
        %1039 = vadd.xlane.f32.xlu0 %v1038
        %v1040 = vpop.xlane.xlu0 %1039
        %v1041 = vsel %vm971, %v1019, 0.0
        %1042 = vadd.xlane.f32.xlu0 %v1041
        %v1043 = vpop.xlane.xlu0 %1042
        %v1044 = vrcp.pop %v1022
        %v1045 = vmul.f32 %v1005, %v1044
        %v1046 = vrcp.pop %v1025
        %v1047 = vmul.f32 %v1007, %v1046
        %v1048 = vrcp.pop %v1028
        %v1049 = vmul.f32 %v1009, %v1048
        %v1050 = vrcp.pop %v1031
        %v1051 = vmul.f32 %v1011, %v1050
        %v1052 = vrcp.pop %v1034
        %v1053 = vmul.f32 %v1013, %v1052
        %v1054 = vrcp.pop %v1037
        %v1055 = vmul.f32 %v1015, %v1054
        %v1056 = vrcp.pop %v1040
        %v1057 = vmul.f32 %v1017, %v1056
        %v1058 = vrcp.pop %v1043
        %v1059 = vmul.f32 %v1019, %v1058
        %1060 = vrot.lane.b32.xlu0 %v592, 96
        %v1061 = vpop.permute.xlu0 %1060
        %1062 = vrot.lane.b32.xlu0 %v593, 96
        %v1063 = vpop.permute.xlu0 %1062
        %v1067 = vsel %vm971, %v1045, 0
        %v1070 = vsel %vm971, %v1047, 0
        %1072 = vmatprep.subr.mxu0 0.0
        %1073 = vmatpush1.msra.mxu0 0.0
        %1074 = vmatprep.subr.mxu0 0.0
        %1075 = vmatpush1.msra.mxu0 0.0
        %1076 = vmatprep.subr.mxu0 0.0
        %1077 = vmatpush1.msra.mxu0 0.0
        %1078 = vmatprep.subr.mxu0 0.0
        %1079 = vmatpush1.msra.mxu0 0.0
        %1080 = vmatprep.subr.mxu0 0.0
        %1081 = vmatpush1.msra.mxu0 0.0
        %1082 = vmatprep.subr.mxu0 0.0
        %1083 = vmatpush1.msra.mxu0 0.0
        %1084 = vmatprep.subr.mxu0 0.0
        %1085 = vmatpush1.msra.mxu0 0.0
        %1086 = vmatprep.subr.mxu0 0.0
        %1087 = vmatpush1.msra.mxu0 0.0
        %1088 = vmatprep.subr.mxu0 0.0
        %1089 = vmatpush1.msra.mxu0 0.0
        %1090 = vmatprep.subr.mxu0 0.0
        %1091 = vmatpush1.msra.mxu0 0.0
        %1092 = vmatprep.subr.mxu0 0.0
        %1093 = vmatpush1.msra.mxu0 0.0
        %1094 = vmatprep.subr.mxu0 0.0
        %1095 = vmatpush1.msra.mxu0 0.0
        %1096 = vmatprep.subr.mxu0 0.0
        %1097 = vmatpush1.msra.mxu0 0.0
        %1098 = vmatprep.subr.mxu0 0.0
        %1099 = vmatpush1.msra.mxu0 0.0
        %1100 = vmatprep.subr.mxu0 0.0
        %1101 = vmatpush1.msra.mxu0 %v1063
        %1102 = vmatprep.subr.mxu0 0.0
        %1103 = vmatpush1.msra.mxu0 %v1061
        %1104 = vmatprep.subr.mxu0 0.0
        %1105 = vmatpush2.msra.mxu0 0.0
        %1106 = vmatprep.subr.mxu0 0.0
        %1107 = vmatpush2.msra.mxu0 0.0
        %1108 = vmatprep.subr.mxu0 0.0
        %1109 = vmatpush2.msra.mxu0 0.0
        %1110 = vmatprep.subr.mxu0 0.0
        %1111 = vmatpush2.msra.mxu0 0.0
        %1112 = vmatprep.subr.mxu0 0.0
        %1113 = vmatpush2.msra.mxu0 0.0
        %1114 = vmatprep.subr.mxu0 0.0
        %1115 = vmatpush2.msra.mxu0 0.0
        %1116 = vmatprep.subr.mxu0 0.0
        %1117 = vmatpush2.msra.mxu0 0.0
        %1118 = vmatprep.subr.mxu0 0.0
        %1119 = vmatpush2.msra.mxu0 0.0
        %1120 = vmatprep.subr.mxu0 0.0
        %1121 = vmatpush2.msra.mxu0 0.0
        %1122 = vmatprep.subr.mxu0 0.0
        %1123 = vmatpush2.msra.mxu0 0.0
        %1124 = vmatprep.subr.mxu0 0.0
        %1125 = vmatpush2.msra.mxu0 0.0
        %1126 = vmatprep.subr.mxu0 0.0
        %1127 = vmatpush2.msra.mxu0 0.0
        %1128 = vmatprep.subr.mxu0 0.0
        %1129 = vmatpush2.msra.mxu0 0.0
        %1130 = vmatprep.subr.mxu0 0.0
        %1131 = vmatpush2.msra.mxu0 0.0
        %1132 = vmatprep.subr.mxu0 0.0
        %1133 = vmatpush2.msra.mxu0 0.0
        %1134 = vmatprep.subr.mxu0 0.0
        %1135 = vmatpush2.msra.mxu0 0.0
        %1136 = vmatprep.mubr.f32.mxu0 0.0
        %1137 = vmatmul.mubr.f32.gmra.mxu0 %v1067
        %v1138 = vpop.f32.mrf.mxu0
        %v1139 = vadd.f32 0.0, %v1138
        %v1140 = vpop.f32.mrf.mxu0
        %1141 = vmatprep.mubr.f32.mxu0 0.0
        %1142 = vmatmul.mubr.f32.gmra.mxu0 %v1070
        %v1143 = vpop.f32.mrf.mxu0
        %v1144 = vadd.f32 0.0, %v1143
        %v1145 = vpop.f32.mrf.mxu0
        %1146 = vdwg.mxu0
        %1147 = vrot.lane.b32.xlu0 %v619, 96
        %v1148 = vpop.permute.xlu0 %1147
        %1149 = vrot.lane.b32.xlu0 %v621, 96
        %v1150 = vpop.permute.xlu0 %1149
        %v1154 = vsel %vm971, %v1049, 0
        %v1157 = vsel %vm971, %v1051, 0
        %1159 = vmatprep.subr.mxu0 0.0
        %1160 = vmatpush1.msra.mxu0 0.0
        %1161 = vmatprep.subr.mxu0 0.0
        %1162 = vmatpush1.msra.mxu0 0.0
        %1163 = vmatprep.subr.mxu0 0.0
        %1164 = vmatpush1.msra.mxu0 0.0
        %1165 = vmatprep.subr.mxu0 0.0
        %1166 = vmatpush1.msra.mxu0 0.0
        %1167 = vmatprep.subr.mxu0 0.0
        %1168 = vmatpush1.msra.mxu0 0.0
        %1169 = vmatprep.subr.mxu0 0.0
        %1170 = vmatpush1.msra.mxu0 0.0
        %1171 = vmatprep.subr.mxu0 0.0
        %1172 = vmatpush1.msra.mxu0 0.0
        %1173 = vmatprep.subr.mxu0 0.0
        %1174 = vmatpush1.msra.mxu0 0.0
        %1175 = vmatprep.subr.mxu0 0.0
        %1176 = vmatpush1.msra.mxu0 0.0
        %1177 = vmatprep.subr.mxu0 0.0
        %1178 = vmatpush1.msra.mxu0 0.0
        %1179 = vmatprep.subr.mxu0 0.0
        %1180 = vmatpush1.msra.mxu0 0.0
        %1181 = vmatprep.subr.mxu0 0.0
        %1182 = vmatpush1.msra.mxu0 0.0
        %1183 = vmatprep.subr.mxu0 0.0
        %1184 = vmatpush1.msra.mxu0 0.0
        %1185 = vmatprep.subr.mxu0 0.0
        %1186 = vmatpush1.msra.mxu0 0.0
        %1187 = vmatprep.subr.mxu0 0.0
        %1188 = vmatpush1.msra.mxu0 %v1150
        %1189 = vmatprep.subr.mxu0 0.0
        %1190 = vmatpush1.msra.mxu0 %v1148
        %1191 = vmatprep.subr.mxu0 0.0
        %1192 = vmatpush2.msra.mxu0 0.0
        %1193 = vmatprep.subr.mxu0 0.0
        %1194 = vmatpush2.msra.mxu0 0.0
        %1195 = vmatprep.subr.mxu0 0.0
        %1196 = vmatpush2.msra.mxu0 0.0
        %1197 = vmatprep.subr.mxu0 0.0
        %1198 = vmatpush2.msra.mxu0 0.0
        %1199 = vmatprep.subr.mxu0 0.0
        %1200 = vmatpush2.msra.mxu0 0.0
        %1201 = vmatprep.subr.mxu0 0.0
        %1202 = vmatpush2.msra.mxu0 0.0
        %1203 = vmatprep.subr.mxu0 0.0
        %1204 = vmatpush2.msra.mxu0 0.0
        %1205 = vmatprep.subr.mxu0 0.0
        %1206 = vmatpush2.msra.mxu0 0.0
        %1207 = vmatprep.subr.mxu0 0.0
        %1208 = vmatpush2.msra.mxu0 0.0
        %1209 = vmatprep.subr.mxu0 0.0
        %1210 = vmatpush2.msra.mxu0 0.0
        %1211 = vmatprep.subr.mxu0 0.0
        %1212 = vmatpush2.msra.mxu0 0.0
        %1213 = vmatprep.subr.mxu0 0.0
        %1214 = vmatpush2.msra.mxu0 0.0
        %1215 = vmatprep.subr.mxu0 0.0
        %1216 = vmatpush2.msra.mxu0 0.0
        %1217 = vmatprep.subr.mxu0 0.0
        %1218 = vmatpush2.msra.mxu0 0.0
        %1219 = vmatprep.subr.mxu0 0.0
        %1220 = vmatpush2.msra.mxu0 0.0
        %1221 = vmatprep.subr.mxu0 0.0
        %1222 = vmatpush2.msra.mxu0 0.0
        %1223 = vmatprep.mubr.f32.mxu0 0.0
        %1224 = vmatmul.mubr.f32.gmra.mxu0 %v1154
        %v1225 = vpop.f32.mrf.mxu0
        %v1226 = vadd.f32 0.0, %v1225
        %v1227 = vpop.f32.mrf.mxu0
        %1228 = vmatprep.mubr.f32.mxu0 0.0
        %1229 = vmatmul.mubr.f32.gmra.mxu0 %v1157
        %v1230 = vpop.f32.mrf.mxu0
        %v1231 = vadd.f32 0.0, %v1230
        %v1232 = vpop.f32.mrf.mxu0
        %1233 = vdwg.mxu0
        %1234 = vrot.lane.b32.xlu0 %v623, 96
        %v1235 = vpop.permute.xlu0 %1234
        %1236 = vrot.lane.b32.xlu0 %v625, 96
        %v1237 = vpop.permute.xlu0 %1236
        %v1241 = vsel %vm971, %v1053, 0
        %v1244 = vsel %vm971, %v1055, 0
        %1246 = vmatprep.subr.mxu0 0.0
        %1247 = vmatpush1.msra.mxu0 0.0
        %1248 = vmatprep.subr.mxu0 0.0
        %1249 = vmatpush1.msra.mxu0 0.0
        %1250 = vmatprep.subr.mxu0 0.0
        %1251 = vmatpush1.msra.mxu0 0.0
        %1252 = vmatprep.subr.mxu0 0.0
        %1253 = vmatpush1.msra.mxu0 0.0
        %1254 = vmatprep.subr.mxu0 0.0
        %1255 = vmatpush1.msra.mxu0 0.0
        %1256 = vmatprep.subr.mxu0 0.0
        %1257 = vmatpush1.msra.mxu0 0.0
        %1258 = vmatprep.subr.mxu0 0.0
        %1259 = vmatpush1.msra.mxu0 0.0
        %1260 = vmatprep.subr.mxu0 0.0
        %1261 = vmatpush1.msra.mxu0 0.0
        %1262 = vmatprep.subr.mxu0 0.0
        %1263 = vmatpush1.msra.mxu0 0.0
        %1264 = vmatprep.subr.mxu0 0.0
        %1265 = vmatpush1.msra.mxu0 0.0
        %1266 = vmatprep.subr.mxu0 0.0
        %1267 = vmatpush1.msra.mxu0 0.0
        %1268 = vmatprep.subr.mxu0 0.0
        %1269 = vmatpush1.msra.mxu0 0.0
        %1270 = vmatprep.subr.mxu0 0.0
        %1271 = vmatpush1.msra.mxu0 0.0
        %1272 = vmatprep.subr.mxu0 0.0
        %1273 = vmatpush1.msra.mxu0 0.0
        %1274 = vmatprep.subr.mxu0 0.0
        %1275 = vmatpush1.msra.mxu0 %v1237
        %1276 = vmatprep.subr.mxu0 0.0
        %1277 = vmatpush1.msra.mxu0 %v1235
        %1278 = vmatprep.subr.mxu0 0.0
        %1279 = vmatpush2.msra.mxu0 0.0
        %1280 = vmatprep.subr.mxu0 0.0
        %1281 = vmatpush2.msra.mxu0 0.0
        %1282 = vmatprep.subr.mxu0 0.0
        %1283 = vmatpush2.msra.mxu0 0.0
        %1284 = vmatprep.subr.mxu0 0.0
        %1285 = vmatpush2.msra.mxu0 0.0
        %1286 = vmatprep.subr.mxu0 0.0
        %1287 = vmatpush2.msra.mxu0 0.0
        %1288 = vmatprep.subr.mxu0 0.0
        %1289 = vmatpush2.msra.mxu0 0.0
        %1290 = vmatprep.subr.mxu0 0.0
        %1291 = vmatpush2.msra.mxu0 0.0
        %1292 = vmatprep.subr.mxu0 0.0
        %1293 = vmatpush2.msra.mxu0 0.0
        %1294 = vmatprep.subr.mxu0 0.0
        %1295 = vmatpush2.msra.mxu0 0.0
        %1296 = vmatprep.subr.mxu0 0.0
        %1297 = vmatpush2.msra.mxu0 0.0
        %1298 = vmatprep.subr.mxu0 0.0
        %1299 = vmatpush2.msra.mxu0 0.0
        %1300 = vmatprep.subr.mxu0 0.0
        %1301 = vmatpush2.msra.mxu0 0.0
        %1302 = vmatprep.subr.mxu0 0.0
        %1303 = vmatpush2.msra.mxu0 0.0
        %1304 = vmatprep.subr.mxu0 0.0
        %1305 = vmatpush2.msra.mxu0 0.0
        %1306 = vmatprep.subr.mxu0 0.0
        %1307 = vmatpush2.msra.mxu0 0.0
        %1308 = vmatprep.subr.mxu0 0.0
        %1309 = vmatpush2.msra.mxu0 0.0
        %1310 = vmatprep.mubr.f32.mxu0 0.0
        %1311 = vmatmul.mubr.f32.gmra.mxu0 %v1241
        %v1312 = vpop.f32.mrf.mxu0
        %v1313 = vadd.f32 0.0, %v1312
        %v1314 = vpop.f32.mrf.mxu0
        %1315 = vmatprep.mubr.f32.mxu0 0.0
        %1316 = vmatmul.mubr.f32.gmra.mxu0 %v1244
        %v1317 = vpop.f32.mrf.mxu0
        %v1318 = vadd.f32 0.0, %v1317
        %v1319 = vpop.f32.mrf.mxu0
        %1320 = vdwg.mxu0
        %1321 = vrot.lane.b32.xlu0 %v627, 96
        %v1322 = vpop.permute.xlu0 %1321
        %1323 = vrot.lane.b32.xlu0 %v629, 96
        %v1324 = vpop.permute.xlu0 %1323
        %v1328 = vsel %vm971, %v1057, 0
        %v1331 = vsel %vm971, %v1059, 0
        %1333 = vmatprep.subr.mxu0 0.0
        %1334 = vmatpush1.msra.mxu0 0.0
        %1335 = vmatprep.subr.mxu0 0.0
        %1336 = vmatpush1.msra.mxu0 0.0
        %1337 = vmatprep.subr.mxu0 0.0
        %1338 = vmatpush1.msra.mxu0 0.0
        %1339 = vmatprep.subr.mxu0 0.0
        %1340 = vmatpush1.msra.mxu0 0.0
        %1341 = vmatprep.subr.mxu0 0.0
        %1342 = vmatpush1.msra.mxu0 0.0
        %1343 = vmatprep.subr.mxu0 0.0
        %1344 = vmatpush1.msra.mxu0 0.0
        %1345 = vmatprep.subr.mxu0 0.0
        %1346 = vmatpush1.msra.mxu0 0.0
        %1347 = vmatprep.subr.mxu0 0.0
        %1348 = vmatpush1.msra.mxu0 0.0
        %1349 = vmatprep.subr.mxu0 0.0
        %1350 = vmatpush1.msra.mxu0 0.0
        %1351 = vmatprep.subr.mxu0 0.0
        %1352 = vmatpush1.msra.mxu0 0.0
        %1353 = vmatprep.subr.mxu0 0.0
        %1354 = vmatpush1.msra.mxu0 0.0
        %1355 = vmatprep.subr.mxu0 0.0
        %1356 = vmatpush1.msra.mxu0 0.0
        %1357 = vmatprep.subr.mxu0 0.0
        %1358 = vmatpush1.msra.mxu0 0.0
        %1359 = vmatprep.subr.mxu0 0.0
        %1360 = vmatpush1.msra.mxu0 0.0
        %1361 = vmatprep.subr.mxu0 0.0
        %1362 = vmatpush1.msra.mxu0 %v1324
        %1363 = vmatprep.subr.mxu0 0.0
        %1364 = vmatpush1.msra.mxu0 %v1322
        %1365 = vmatprep.subr.mxu0 0.0
        %1366 = vmatpush2.msra.mxu0 0.0
        %1367 = vmatprep.subr.mxu0 0.0
        %1368 = vmatpush2.msra.mxu0 0.0
        %1369 = vmatprep.subr.mxu0 0.0
        %1370 = vmatpush2.msra.mxu0 0.0
        %1371 = vmatprep.subr.mxu0 0.0
        %1372 = vmatpush2.msra.mxu0 0.0
        %1373 = vmatprep.subr.mxu0 0.0
        %1374 = vmatpush2.msra.mxu0 0.0
        %1375 = vmatprep.subr.mxu0 0.0
        %1376 = vmatpush2.msra.mxu0 0.0
        %1377 = vmatprep.subr.mxu0 0.0
        %1378 = vmatpush2.msra.mxu0 0.0
        %1379 = vmatprep.subr.mxu0 0.0
        %1380 = vmatpush2.msra.mxu0 0.0
        %1381 = vmatprep.subr.mxu0 0.0
        %1382 = vmatpush2.msra.mxu0 0.0
        %1383 = vmatprep.subr.mxu0 0.0
        %1384 = vmatpush2.msra.mxu0 0.0
        %1385 = vmatprep.subr.mxu0 0.0
        %1386 = vmatpush2.msra.mxu0 0.0
        %1387 = vmatprep.subr.mxu0 0.0
        %1388 = vmatpush2.msra.mxu0 0.0
        %1389 = vmatprep.subr.mxu0 0.0
        %1390 = vmatpush2.msra.mxu0 0.0
        %1391 = vmatprep.subr.mxu0 0.0
        %1392 = vmatpush2.msra.mxu0 0.0
        %1393 = vmatprep.subr.mxu0 0.0
        %1394 = vmatpush2.msra.mxu0 0.0
        %1395 = vmatprep.subr.mxu0 0.0
        %1396 = vmatpush2.msra.mxu0 0.0
        %1397 = vmatprep.mubr.f32.mxu0 0.0
        %1398 = vmatmul.mubr.f32.gmra.mxu0 %v1328
        %v1399 = vpop.f32.mrf.mxu0
        %v1400 = vadd.f32 0.0, %v1399
        %v1401 = vpop.f32.mrf.mxu0
        %1402 = vmatprep.mubr.f32.mxu0 0.0
        %1403 = vmatmul.mubr.f32.gmra.mxu0 %v1331
        %v1404 = vpop.f32.mrf.mxu0
        %v1405 = vadd.f32 0.0, %v1404
        %v1406 = vpop.f32.mrf.mxu0
        %1407 = vdwg.mxu0
        %v1408 = vld [vmem:[%s8] sm:$0xff]
        %s1409 = scalar_lea.vmem %s8, 8
        %v1410 = vld [vmem:[%s1409] sm:$0xff]
        %v1412 = vsel %vm630, %v1226, 0
        %v1415 = vsel %vm630, %v1231, 0
        %1417 = vmatprep.subr.mxu0 0.0
        %1418 = vmatpush1.msra.mxu0 0.0
        %1419 = vmatprep.subr.mxu0 0.0
        %1420 = vmatpush1.msra.mxu0 0.0
        %1421 = vmatprep.subr.mxu0 0.0
        %1422 = vmatpush1.msra.mxu0 0.0
        %1423 = vmatprep.subr.mxu0 0.0
        %1424 = vmatpush1.msra.mxu0 0.0
        %1425 = vmatprep.subr.mxu0 0.0
        %1426 = vmatpush1.msra.mxu0 0.0
        %1427 = vmatprep.subr.mxu0 0.0
        %1428 = vmatpush1.msra.mxu0 0.0
        %1429 = vmatprep.subr.mxu0 0.0
        %1430 = vmatpush1.msra.mxu0 0.0
        %1431 = vmatprep.subr.mxu0 0.0
        %1432 = vmatpush1.msra.mxu0 0.0
        %1433 = vmatprep.subr.mxu0 0.0
        %1434 = vmatpush1.msra.mxu0 0.0
        %1435 = vmatprep.subr.mxu0 0.0
        %1436 = vmatpush1.msra.mxu0 0.0
        %1437 = vmatprep.subr.mxu0 0.0
        %1438 = vmatpush1.msra.mxu0 0.0
        %1439 = vmatprep.subr.mxu0 0.0
        %1440 = vmatpush1.msra.mxu0 0.0
        %1441 = vmatprep.subr.mxu0 0.0
        %1442 = vmatpush1.msra.mxu0 0.0
        %1443 = vmatprep.subr.mxu0 0.0
        %1444 = vmatpush1.msra.mxu0 0.0
        %1445 = vmatprep.subr.mxu0 0.0
        %1446 = vmatpush1.msra.mxu0 0.0
        %1447 = vmatprep.subr.mxu0 0.0
        %1448 = vmatpush1.msra.mxu0 %v1410
        %1449 = vmatprep.subr.mxu0 0.0
        %1450 = vmatpush2.msra.mxu0 0.0
        %1451 = vmatprep.subr.mxu0 0.0
        %1452 = vmatpush2.msra.mxu0 0.0
        %1453 = vmatprep.subr.mxu0 0.0
        %1454 = vmatpush2.msra.mxu0 0.0
        %1455 = vmatprep.subr.mxu0 0.0
        %1456 = vmatpush2.msra.mxu0 0.0
        %1457 = vmatprep.subr.mxu0 0.0
        %1458 = vmatpush2.msra.mxu0 0.0
        %1459 = vmatprep.subr.mxu0 0.0
        %1460 = vmatpush2.msra.mxu0 0.0
        %1461 = vmatprep.subr.mxu0 0.0
        %1462 = vmatpush2.msra.mxu0 0.0
        %1463 = vmatprep.subr.mxu0 0.0
        %1464 = vmatpush2.msra.mxu0 0.0
        %1465 = vmatprep.subr.mxu0 0.0
        %1466 = vmatpush2.msra.mxu0 0.0
        %1467 = vmatprep.subr.mxu0 0.0
        %1468 = vmatpush2.msra.mxu0 0.0
        %1469 = vmatprep.subr.mxu0 0.0
        %1470 = vmatpush2.msra.mxu0 0.0
        %1471 = vmatprep.subr.mxu0 0.0
        %1472 = vmatpush2.msra.mxu0 0.0
        %1473 = vmatprep.subr.mxu0 0.0
        %1474 = vmatpush2.msra.mxu0 0.0
        %1475 = vmatprep.subr.mxu0 0.0
        %1476 = vmatpush2.msra.mxu0 0.0
        %1477 = vmatprep.subr.mxu0 0.0
        %1478 = vmatpush2.msra.mxu0 0.0
        %1479 = vmatprep.subr.mxu0 0.0
        %1480 = vmatpush2.msra.mxu0 0.0
        %1481 = vmatprep.mubr.f32.mxu0 0.0
        %1482 = vmatmul.mubr.f32.gmra.mxu0 %v1412
        %v1483 = vpop.f32.mrf.mxu0
        %v1484 = vadd.f32 0.0, %v1483
        %v1485 = vpop.f32.mrf.mxu0
        %1486 = vmatprep.mubr.f32.mxu0 0.0
        %1487 = vmatmul.mubr.f32.gmra.mxu0 %v1415
        %v1488 = vpop.f32.mrf.mxu0
        %v1489 = vadd.f32 0.0, %v1488
        %v1490 = vpop.f32.mrf.mxu0
        %1491 = vdwg.mxu0
        %v1493 = vsel %vm630, %v1139, 0
        %v1496 = vsel %vm630, %v1144, 0
        %1498 = vmatprep.subr.mxu0 0.0
        %1499 = vmatpush1.msra.mxu0 0.0
        %1500 = vmatprep.subr.mxu0 0.0
        %1501 = vmatpush1.msra.mxu0 0.0
        %1502 = vmatprep.subr.mxu0 0.0
        %1503 = vmatpush1.msra.mxu0 0.0
        %1504 = vmatprep.subr.mxu0 0.0
        %1505 = vmatpush1.msra.mxu0 0.0
        %1506 = vmatprep.subr.mxu0 0.0
        %1507 = vmatpush1.msra.mxu0 0.0
        %1508 = vmatprep.subr.mxu0 0.0
        %1509 = vmatpush1.msra.mxu0 0.0
        %1510 = vmatprep.subr.mxu0 0.0
        %1511 = vmatpush1.msra.mxu0 0.0
        %1512 = vmatprep.subr.mxu0 0.0
        %1513 = vmatpush1.msra.mxu0 0.0
        %1514 = vmatprep.subr.mxu0 0.0
        %1515 = vmatpush1.msra.mxu0 0.0
        %1516 = vmatprep.subr.mxu0 0.0
        %1517 = vmatpush1.msra.mxu0 0.0
        %1518 = vmatprep.subr.mxu0 0.0
        %1519 = vmatpush1.msra.mxu0 0.0
        %1520 = vmatprep.subr.mxu0 0.0
        %1521 = vmatpush1.msra.mxu0 0.0
        %1522 = vmatprep.subr.mxu0 0.0
        %1523 = vmatpush1.msra.mxu0 0.0
        %1524 = vmatprep.subr.mxu0 0.0
        %1525 = vmatpush1.msra.mxu0 0.0
        %1526 = vmatprep.subr.mxu0 0.0
        %1527 = vmatpush1.msra.mxu0 0.0
        %1528 = vmatprep.subr.mxu0 0.0
        %1529 = vmatpush1.msra.mxu0 %v1408
        %1530 = vmatprep.subr.mxu0 0.0
        %1531 = vmatpush2.msra.mxu0 0.0
        %1532 = vmatprep.subr.mxu0 0.0
        %1533 = vmatpush2.msra.mxu0 0.0
        %1534 = vmatprep.subr.mxu0 0.0
        %1535 = vmatpush2.msra.mxu0 0.0
        %1536 = vmatprep.subr.mxu0 0.0
        %1537 = vmatpush2.msra.mxu0 0.0
        %1538 = vmatprep.subr.mxu0 0.0
        %1539 = vmatpush2.msra.mxu0 0.0
        %1540 = vmatprep.subr.mxu0 0.0
        %1541 = vmatpush2.msra.mxu0 0.0
        %1542 = vmatprep.subr.mxu0 0.0
        %1543 = vmatpush2.msra.mxu0 0.0
        %1544 = vmatprep.subr.mxu0 0.0
        %1545 = vmatpush2.msra.mxu0 0.0
        %1546 = vmatprep.subr.mxu0 0.0
        %1547 = vmatpush2.msra.mxu0 0.0
        %1548 = vmatprep.subr.mxu0 0.0
        %1549 = vmatpush2.msra.mxu0 0.0
        %1550 = vmatprep.subr.mxu0 0.0
        %1551 = vmatpush2.msra.mxu0 0.0
        %1552 = vmatprep.subr.mxu0 0.0
        %1553 = vmatpush2.msra.mxu0 0.0
        %1554 = vmatprep.subr.mxu0 0.0
        %1555 = vmatpush2.msra.mxu0 0.0
        %1556 = vmatprep.subr.mxu0 0.0
        %1557 = vmatpush2.msra.mxu0 0.0
        %1558 = vmatprep.subr.mxu0 0.0
        %1559 = vmatpush2.msra.mxu0 0.0
        %1560 = vmatprep.subr.mxu0 0.0
        %1561 = vmatpush2.msra.mxu0 0.0
        %1562 = vmatprep.mubr.f32.mxu0 0.0
        %1563 = vmatmul.mubr.f32.gmra.mxu0 %v1493
        %v1564 = vpop.f32.mrf.mxu0
        %v1565 = vadd.f32 %v1484, %v1564
        %v1566 = vpop.f32.mrf.mxu0
        %1567 = vmatprep.mubr.f32.mxu0 0.0
        %1568 = vmatmul.mubr.f32.gmra.mxu0 %v1496
        %v1569 = vpop.f32.mrf.mxu0
        %v1570 = vadd.f32 %v1489, %v1569
        %v1571 = vpop.f32.mrf.mxu0
        %1572 = vdwg.mxu0
        %s1573 = scalar_lea.vmem %s8, 16
        %v1574 = vld [vmem:[%s1573] sm:$0xff]
        %v1576 = vsel %vm630, %v1313, 0
        %v1579 = vsel %vm630, %v1318, 0
        %1581 = vmatprep.subr.mxu0 0.0
        %1582 = vmatpush1.msra.mxu0 0.0
        %1583 = vmatprep.subr.mxu0 0.0
        %1584 = vmatpush1.msra.mxu0 0.0
        %1585 = vmatprep.subr.mxu0 0.0
        %1586 = vmatpush1.msra.mxu0 0.0
        %1587 = vmatprep.subr.mxu0 0.0
        %1588 = vmatpush1.msra.mxu0 0.0
        %1589 = vmatprep.subr.mxu0 0.0
        %1590 = vmatpush1.msra.mxu0 0.0
        %1591 = vmatprep.subr.mxu0 0.0
        %1592 = vmatpush1.msra.mxu0 0.0
        %1593 = vmatprep.subr.mxu0 0.0
        %1594 = vmatpush1.msra.mxu0 0.0
        %1595 = vmatprep.subr.mxu0 0.0
        %1596 = vmatpush1.msra.mxu0 0.0
        %1597 = vmatprep.subr.mxu0 0.0
        %1598 = vmatpush1.msra.mxu0 0.0
        %1599 = vmatprep.subr.mxu0 0.0
        %1600 = vmatpush1.msra.mxu0 0.0
        %1601 = vmatprep.subr.mxu0 0.0
        %1602 = vmatpush1.msra.mxu0 0.0
        %1603 = vmatprep.subr.mxu0 0.0
        %1604 = vmatpush1.msra.mxu0 0.0
        %1605 = vmatprep.subr.mxu0 0.0
        %1606 = vmatpush1.msra.mxu0 0.0
        %1607 = vmatprep.subr.mxu0 0.0
        %1608 = vmatpush1.msra.mxu0 0.0
        %1609 = vmatprep.subr.mxu0 0.0
        %1610 = vmatpush1.msra.mxu0 0.0
        %1611 = vmatprep.subr.mxu0 0.0
        %1612 = vmatpush1.msra.mxu0 %v1574
        %1613 = vmatprep.subr.mxu0 0.0
        %1614 = vmatpush2.msra.mxu0 0.0
        %1615 = vmatprep.subr.mxu0 0.0
        %1616 = vmatpush2.msra.mxu0 0.0
        %1617 = vmatprep.subr.mxu0 0.0
        %1618 = vmatpush2.msra.mxu0 0.0
        %1619 = vmatprep.subr.mxu0 0.0
        %1620 = vmatpush2.msra.mxu0 0.0
        %1621 = vmatprep.subr.mxu0 0.0
        %1622 = vmatpush2.msra.mxu0 0.0
        %1623 = vmatprep.subr.mxu0 0.0
        %1624 = vmatpush2.msra.mxu0 0.0
        %1625 = vmatprep.subr.mxu0 0.0
        %1626 = vmatpush2.msra.mxu0 0.0
        %1627 = vmatprep.subr.mxu0 0.0
        %1628 = vmatpush2.msra.mxu0 0.0
        %1629 = vmatprep.subr.mxu0 0.0
        %1630 = vmatpush2.msra.mxu0 0.0
        %1631 = vmatprep.subr.mxu0 0.0
        %1632 = vmatpush2.msra.mxu0 0.0
        %1633 = vmatprep.subr.mxu0 0.0
        %1634 = vmatpush2.msra.mxu0 0.0
        %1635 = vmatprep.subr.mxu0 0.0
        %1636 = vmatpush2.msra.mxu0 0.0
        %1637 = vmatprep.subr.mxu0 0.0
        %1638 = vmatpush2.msra.mxu0 0.0
        %1639 = vmatprep.subr.mxu0 0.0
        %1640 = vmatpush2.msra.mxu0 0.0
        %1641 = vmatprep.subr.mxu0 0.0
        %1642 = vmatpush2.msra.mxu0 0.0
        %1643 = vmatprep.subr.mxu0 0.0
        %1644 = vmatpush2.msra.mxu0 0.0
        %1645 = vmatprep.mubr.f32.mxu0 0.0
        %1646 = vmatmul.mubr.f32.gmra.mxu0 %v1576
        %v1647 = vpop.f32.mrf.mxu0
        %v1648 = vadd.f32 0.0, %v1647
        %v1649 = vpop.f32.mrf.mxu0
        %1650 = vmatprep.mubr.f32.mxu0 0.0
        %1651 = vmatmul.mubr.f32.gmra.mxu0 %v1579
        %v1652 = vpop.f32.mrf.mxu0
        %v1653 = vadd.f32 0.0, %v1652
        %v1654 = vpop.f32.mrf.mxu0
        %1655 = vdwg.mxu0
        %v1656 = vadd.f32 %v1565, %v1648
        %v1657 = vadd.f32 %v1570, %v1653
        %s1658 = scalar_lea.vmem %s8, 24
        %v1659 = vld [vmem:[%s1658] sm:$0xff]
        %v1661 = vsel %vm630, %v1400, 0
        %v1664 = vsel %vm630, %v1405, 0
        %1666 = vmatprep.subr.mxu0 0.0
        %1667 = vmatpush1.msra.mxu0 0.0
        %1668 = vmatprep.subr.mxu0 0.0
        %1669 = vmatpush1.msra.mxu0 0.0
        %1670 = vmatprep.subr.mxu0 0.0
        %1671 = vmatpush1.msra.mxu0 0.0
        %1672 = vmatprep.subr.mxu0 0.0
        %1673 = vmatpush1.msra.mxu0 0.0
        %1674 = vmatprep.subr.mxu0 0.0
        %1675 = vmatpush1.msra.mxu0 0.0
        %1676 = vmatprep.subr.mxu0 0.0
        %1677 = vmatpush1.msra.mxu0 0.0
        %1678 = vmatprep.subr.mxu0 0.0
        %1679 = vmatpush1.msra.mxu0 0.0
        %1680 = vmatprep.subr.mxu0 0.0
        %1681 = vmatpush1.msra.mxu0 0.0
        %1682 = vmatprep.subr.mxu0 0.0
        %1683 = vmatpush1.msra.mxu0 0.0
        %1684 = vmatprep.subr.mxu0 0.0
        %1685 = vmatpush1.msra.mxu0 0.0
        %1686 = vmatprep.subr.mxu0 0.0
        %1687 = vmatpush1.msra.mxu0 0.0
        %1688 = vmatprep.subr.mxu0 0.0
        %1689 = vmatpush1.msra.mxu0 0.0
        %1690 = vmatprep.subr.mxu0 0.0
        %1691 = vmatpush1.msra.mxu0 0.0
        %1692 = vmatprep.subr.mxu0 0.0
        %1693 = vmatpush1.msra.mxu0 0.0
        %1694 = vmatprep.subr.mxu0 0.0
        %1695 = vmatpush1.msra.mxu0 0.0
        %1696 = vmatprep.subr.mxu0 0.0
        %1697 = vmatpush1.msra.mxu0 %v1659
        %1698 = vmatprep.subr.mxu0 0.0
        %1699 = vmatpush2.msra.mxu0 0.0
        %1700 = vmatprep.subr.mxu0 0.0
        %1701 = vmatpush2.msra.mxu0 0.0
        %1702 = vmatprep.subr.mxu0 0.0
        %1703 = vmatpush2.msra.mxu0 0.0
        %1704 = vmatprep.subr.mxu0 0.0
        %1705 = vmatpush2.msra.mxu0 0.0
        %1706 = vmatprep.subr.mxu0 0.0
        %1707 = vmatpush2.msra.mxu0 0.0
        %1708 = vmatprep.subr.mxu0 0.0
        %1709 = vmatpush2.msra.mxu0 0.0
        %1710 = vmatprep.subr.mxu0 0.0
        %1711 = vmatpush2.msra.mxu0 0.0
        %1712 = vmatprep.subr.mxu0 0.0
        %1713 = vmatpush2.msra.mxu0 0.0
        %1714 = vmatprep.subr.mxu0 0.0
        %1715 = vmatpush2.msra.mxu0 0.0
        %1716 = vmatprep.subr.mxu0 0.0
        %1717 = vmatpush2.msra.mxu0 0.0
        %1718 = vmatprep.subr.mxu0 0.0
        %1719 = vmatpush2.msra.mxu0 0.0
        %1720 = vmatprep.subr.mxu0 0.0
        %1721 = vmatpush2.msra.mxu0 0.0
        %1722 = vmatprep.subr.mxu0 0.0
        %1723 = vmatpush2.msra.mxu0 0.0
        %1724 = vmatprep.subr.mxu0 0.0
        %1725 = vmatpush2.msra.mxu0 0.0
        %1726 = vmatprep.subr.mxu0 0.0
        %1727 = vmatpush2.msra.mxu0 0.0
        %1728 = vmatprep.subr.mxu0 0.0
        %1729 = vmatpush2.msra.mxu0 0.0
        %1730 = vmatprep.mubr.f32.mxu0 0.0
        %1731 = vmatmul.mubr.f32.gmra.mxu0 %v1661
        %v1732 = vpop.f32.mrf.mxu0
        %v1733 = vadd.f32 0.0, %v1732
        %v1734 = vpop.f32.mrf.mxu0
        %1735 = vmatprep.mubr.f32.mxu0 0.0
        %1736 = vmatmul.mubr.f32.gmra.mxu0 %v1664
        %v1737 = vpop.f32.mrf.mxu0
        %v1738 = vadd.f32 0.0, %v1737
        %v1739 = vpop.f32.mrf.mxu0
        %1740 = vdwg.mxu0
        %v1741 = vadd.f32 %v1656, %v1733
        %v1742 = vadd.f32 %v1657, %v1738
        %v1743 = vld [vmem:[%s9] sm:$0x1]
        %v1745 = vlaneseq
        %v1746 = vshrl.u32 %v1745, 7
        %v1747 = vsub.s32 0, %v1746
        %v1748 = vrot.slane %v1743, %v1747
        %v1750 = vadd.f32 %v1741, %v1748
        %v1751 = vadd.f32 %v1742, %v1748
        %1752 = vst.msk [vmem:[%s352] sm:$0xff] %vm448, %v1750
        %1753 = vst.msk [vmem:[%s352 + $0x8] sm:$0xff] %vm448, %v1751
        %s1754 = sand.u32 %s247, 1
        %s1755 = scalar_lea.sflag [#allocation3], %s1754
        %s1756 = sand.u32 %s247, 1
        %s1757 = smul.addr %s1756, 16
        %s1758 = scalar_lea.vmem [#allocation2], %s1757
        // Predicated region
        $region61: #{tpu_custom_call.1} parent=59 // pred_check
          %p1759 = pneg %p257
        $region62: #{tpu_custom_call.1} parent=59 // pred_check_branch
          %1761 = sbr.rel (%p1759) target = $region64
        $region63: #{tpu_custom_call.1} parent=59 // pred_region
          %s1763 = ssub.s32 256, 256
          %1764 = vsyncadd %s1755, %s1763
          %s1765 = smul.addr %s24, 2
          %s1766 = smul.addr %s1765, 128
          %s1767 = scalar_lea.hbm %s10, %s1766
          %s1768 = sshll.u32 %s1758, 4
          %s1769 = int_to_ptr.vmem [resolvable:$true] %s1768
          %1774 = dma.vmem_to_hbm [thread:$0]  %s1769, 256, %s1767, %s1755, 128, 128, 8
        $region64: #{tpu_custom_call.1} parent=59 // pred_fallthru
          _
      $region60: #{tpu_custom_call.1} parent=5 // pred_fallthru
        _
      %p1775 = scmp.le.s32.totalorder 2, %s19
      // Predicated region
      $region65: #{tpu_custom_call.1} parent=5 // pred_check
        %p1776 = pneg %p1775
      $region66: #{tpu_custom_call.1} parent=5 // pred_check_branch
        %1778 = sbr.rel (%p1776) target = $region68
      $region67: #{tpu_custom_call.1} parent=5 // pred_region
        %s1779 = ssub.s32 %s19, 2
        // Predicated region
        $region69: #{tpu_custom_call.1} parent=67 // pred_check
          %p1780 = pneg %p263
        $region70: #{tpu_custom_call.1} parent=67 // pred_check_branch
          %1782 = sbr.rel (%p1780) target = $region72
        $region71: #{tpu_custom_call.1} parent=67 // pred_region
          %s1783 = sand.u32 %s248, 1
          %s1784 = scalar_lea.sflag [#allocation3], %s1783
          %s1785 = sand.u32 %s248, 1
          %s1786 = smul.addr %s1785, 16
          %s1787 = scalar_lea.vmem [#allocation2], %s1786
          %1788 = dma.done %s1784, 256
        $region72: #{tpu_custom_call.1} parent=67 // pred_fallthru
          _
      $region68: #{tpu_custom_call.1} parent=5 // pred_fallthru
        _
    $region6: #{tpu_custom_call.1} parent=1 // loop_footer
      %s23 = sadd.s32 1, %s19
    $region7: #{tpu_custom_call.1} parent=1 // loop_footer_branch
      %18 = sbr.rel target = $region3
    $region8: #{tpu_custom_call.1} parent=1 // loop_exit
      _
    %1789 = vsyncpa [#allocation3], 1
    %s1790 = scalar_lea.sflag [#allocation3], 1
    %1791 = vsyncpa %s1790, 1

// kernel: tpu_custom_call.1
$region0: #{tpu_custom_call.1}
  #allocation0 [shape = 'u32[]', space=smem, size = 0x4, offset = 0x4, fixed_abs, tag = 'smem constant byte address 0x4 - core index']
  #allocation1 [shape = 'u32[144,128]{1,0:T(1,128)}', space=vmem, size = 0x12000, scoped, tag = 'internal scratch']
  %s0 = inlined_call_operand.vmem [shape: f32[2,16,48], index: 0, kind: input, shape index: {}]
  %s1 = inlined_call_operand.vmem [shape: f32[48,32], index: 1, kind: input, shape index: {}]
  %s2 = inlined_call_operand.vmem [shape: f32[1,32], index: 2, kind: input, shape index: {}]
  %s3 = inlined_call_operand.vmem [shape: f32[1,32], index: 3, kind: input, shape index: {}]
  %s4 = inlined_call_operand.vmem [shape: f32[4,16,8], index: 4, kind: input, shape index: {}]
  %s5 = inlined_call_operand.vmem [shape: f32[32,64], index: 5, kind: input, shape index: {}]
  %s6 = inlined_call_operand.vmem [shape: f32[16,32], index: 6, kind: input, shape index: {}]
  %s7 = inlined_call_operand.vmem [shape: f32[1,32], index: 7, kind: input, shape index: {}]
  %s8 = inlined_call_operand.vmem [shape: f32[4,8,32], index: 8, kind: input, shape index: {}]
  %s9 = inlined_call_operand.vmem [shape: f32[1,32], index: 9, kind: input, shape index: {}]
  %s10 = inlined_call_operand.hbm [shape: f32[2,16,32], index: 10, kind: output, shape index: {}]
  %s11 = sld [smem:[#allocation0]]
  $region73: #{tpu_custom_call.1} parent=0
    _
  %s13 = ssub.s32 1, %s11
  %s14 = scalar_select 0, %s13, %s11
  $region1: #{tpu_custom_call.1} parent=0
    #allocation2 [shape = 'u8[16384]{0}', space=vmem, size = 0x4000, scoped, tag = 'output window, operand 0']
    #allocation3 [shape = 's32[2]{0}', space=sflag, size = 0x8, scoped, tag = 'scoped memory for tpu_custom_call.1']
    %15 = vsyncpa [#allocation3], 0
    %s16 = scalar_lea.sflag [#allocation3], 1
    %17 = vsyncpa %s16, 0
    loop: start=0, step=1, limit=4
    $region2: #{tpu_custom_call.1} parent=1 // loop_pre_header
      _
    $region3: #{tpu_custom_call.1} parent=1 // loop_header
      %s19 = sphi 0, %s23
      %p20 = scmp.ge.s32.totalorder %s19, 4
      %s29 = sphi 0, %s31
      %s32 = sphi 0, %s29
      %s33 = sphi 0, %s32
      %s49 = sphi 0, %s33
      %s53 = sphi 0, %s53
      %s55 = sphi 0, %s53
      %s56 = sphi 0, %s55
      %s70 = sphi 0, %s56
      %s74 = sphi 0, %s74
      %s76 = sphi 0, %s74
      %s77 = sphi 0, %s76
      %s91 = sphi 0, %s77
      %s95 = sphi 0, %s95
      %s97 = sphi 0, %s95
      %s98 = sphi 0, %s97
      %s112 = sphi 0, %s98
      %s116 = sphi 0, %s116
      %s118 = sphi 0, %s116
      %s119 = sphi 0, %s118
      %s133 = sphi 0, %s119
      %s137 = sphi 0, %s137
      %s139 = sphi 0, %s137
      %s140 = sphi 0, %s139
      %s154 = sphi 0, %s140
      %s158 = sphi 0, %s158
      %s160 = sphi 0, %s158
      %s161 = sphi 0, %s160
      %s175 = sphi 0, %s161
      %s179 = sphi 0, %s179
      %s181 = sphi 0, %s179
      %s182 = sphi 0, %s181
      %s196 = sphi 0, %s182
      %s200 = sphi 0, %s200
      %s202 = sphi 0, %s200
      %s203 = sphi 0, %s202
      %s217 = sphi 0, %s203
      %s221 = sphi 0, %s221
      %s223 = sphi 0, %s221
      %s224 = sphi 0, %s223
      %s238 = sphi 0, %s224
      %s244 = sphi 0, %s246
      %s247 = sphi 0, %s244
      %s248 = sphi 0, %s247
      %s264 = sphi 0, %s248
    $region4: #{tpu_custom_call.1} parent=1 // loop_header_branch
      %22 = sbr.rel (%p20) target = $region8
    $region5: #{tpu_custom_call.1} parent=1 // loop_body
      %s24 = ssub.s32 %s19, 1
      %s25 = ssub.s32 %s19, 2
      %s26 = sadd.s32 %s19, 1
      %s27 = ssub.s32 %s19, %s26
      %p28 = scmp.eq.s32.totalorder %s27, 0
      %s30 = sadd.s32 %s29, 1
      %s31 = scalar_select %p28, %s29, %s30
      %p34 = pneg %p28
      %p35 = scmp.eq.s32.totalorder %s19, 1
      %p36 = por %p34, %p35
      %p37 = scmp.ne.s32.totalorder %s29, %s32
      %p38 = scmp.eq.s32.totalorder %s19, 0
      %p39 = por %p37, %p38
      %p40 = scmp.ne.s32.totalorder %s29, %s32
      %p41 = scmp.eq.s32.totalorder %s24, 1
      %p42 = por %p40, %p41
      %p43 = scmp.ne.s32.totalorder %s32, %s33
      %p44 = scmp.eq.s32.totalorder %s24, 0
      %p45 = por %p43, %p44
      %p46 = scmp.ne.s32.totalorder %s32, %s33
      %p47 = scmp.eq.s32.totalorder %s25, 1
      %p48 = por %p46, %p47
      %p50 = scmp.ne.s32.totalorder %s33, %s49
      %p51 = scmp.eq.s32.totalorder %s25, 0
      %p52 = por %p50, %p51
      %s54 = sadd.s32 %s53, 1
      %p57 = scmp.eq.s32.totalorder %s19, 1
      %p58 = scmp.ne.s32.totalorder %s53, %s55
      %p59 = scmp.eq.s32.totalorder %s19, 0
      %p60 = por %p58, %p59
      %p61 = scmp.ne.s32.totalorder %s53, %s55
      %p62 = scmp.eq.s32.totalorder %s24, 1
      %p63 = por %p61, %p62
      %p64 = scmp.ne.s32.totalorder %s55, %s56
      %p65 = scmp.eq.s32.totalorder %s24, 0
      %p66 = por %p64, %p65
      %p67 = scmp.ne.s32.totalorder %s55, %s56
      %p68 = scmp.eq.s32.totalorder %s25, 1
      %p69 = por %p67, %p68
      %p71 = scmp.ne.s32.totalorder %s56, %s70
      %p72 = scmp.eq.s32.totalorder %s25, 0
      %p73 = por %p71, %p72
      %s75 = sadd.s32 %s74, 1
      %p78 = scmp.eq.s32.totalorder %s19, 1
      %p79 = scmp.ne.s32.totalorder %s74, %s76
      %p80 = scmp.eq.s32.totalorder %s19, 0
      %p81 = por %p79, %p80
      %p82 = scmp.ne.s32.totalorder %s74, %s76
      %p83 = scmp.eq.s32.totalorder %s24, 1
      %p84 = por %p82, %p83
      %p85 = scmp.ne.s32.totalorder %s76, %s77
      %p86 = scmp.eq.s32.totalorder %s24, 0
      %p87 = por %p85, %p86
      %p88 = scmp.ne.s32.totalorder %s76, %s77
      %p89 = scmp.eq.s32.totalorder %s25, 1
      %p90 = por %p88, %p89
      %p92 = scmp.ne.s32.totalorder %s77, %s91
      %p93 = scmp.eq.s32.totalorder %s25, 0
      %p94 = por %p92, %p93
      %s96 = sadd.s32 %s95, 1
      %p99 = scmp.eq.s32.totalorder %s19, 1
      %p100 = scmp.ne.s32.totalorder %s95, %s97
      %p101 = scmp.eq.s32.totalorder %s19, 0
      %p102 = por %p100, %p101
      %p103 = scmp.ne.s32.totalorder %s95, %s97
      %p104 = scmp.eq.s32.totalorder %s24, 1
      %p105 = por %p103, %p104
      %p106 = scmp.ne.s32.totalorder %s97, %s98
      %p107 = scmp.eq.s32.totalorder %s24, 0
      %p108 = por %p106, %p107
      %p109 = scmp.ne.s32.totalorder %s97, %s98
      %p110 = scmp.eq.s32.totalorder %s25, 1
      %p111 = por %p109, %p110
      %p113 = scmp.ne.s32.totalorder %s98, %s112
      %p114 = scmp.eq.s32.totalorder %s25, 0
      %p115 = por %p113, %p114
      %s117 = sadd.s32 %s116, 1
      %p120 = scmp.eq.s32.totalorder %s19, 1
      %p121 = scmp.ne.s32.totalorder %s116, %s118
      %p122 = scmp.eq.s32.totalorder %s19, 0
      %p123 = por %p121, %p122
      %p124 = scmp.ne.s32.totalorder %s116, %s118
      %p125 = scmp.eq.s32.totalorder %s24, 1
      %p126 = por %p124, %p125
      %p127 = scmp.ne.s32.totalorder %s118, %s119
      %p128 = scmp.eq.s32.totalorder %s24, 0
      %p129 = por %p127, %p128
      %p130 = scmp.ne.s32.totalorder %s118, %s119
      %p131 = scmp.eq.s32.totalorder %s25, 1
      %p132 = por %p130, %p131
      %p134 = scmp.ne.s32.totalorder %s119, %s133
      %p135 = scmp.eq.s32.totalorder %s25, 0
      %p136 = por %p134, %p135
      %s138 = sadd.s32 %s137, 1
      %p141 = scmp.eq.s32.totalorder %s19, 1
      %p142 = scmp.ne.s32.totalorder %s137, %s139
      %p143 = scmp.eq.s32.totalorder %s19, 0
      %p144 = por %p142, %p143
      %p145 = scmp.ne.s32.totalorder %s137, %s139
      %p146 = scmp.eq.s32.totalorder %s24, 1
      %p147 = por %p145, %p146
      %p148 = scmp.ne.s32.totalorder %s139, %s140
      %p149 = scmp.eq.s32.totalorder %s24, 0
      %p150 = por %p148, %p149
      %p151 = scmp.ne.s32.totalorder %s139, %s140
      %p152 = scmp.eq.s32.totalorder %s25, 1
      %p153 = por %p151, %p152
      %p155 = scmp.ne.s32.totalorder %s140, %s154
      %p156 = scmp.eq.s32.totalorder %s25, 0
      %p157 = por %p155, %p156
      %s159 = sadd.s32 %s158, 1
      %p162 = scmp.eq.s32.totalorder %s19, 1
      %p163 = scmp.ne.s32.totalorder %s158, %s160
      %p164 = scmp.eq.s32.totalorder %s19, 0
      %p165 = por %p163, %p164
      %p166 = scmp.ne.s32.totalorder %s158, %s160
      %p167 = scmp.eq.s32.totalorder %s24, 1
      %p168 = por %p166, %p167
      %p169 = scmp.ne.s32.totalorder %s160, %s161
      %p170 = scmp.eq.s32.totalorder %s24, 0
      %p171 = por %p169, %p170
      %p172 = scmp.ne.s32.totalorder %s160, %s161
      %p173 = scmp.eq.s32.totalorder %s25, 1
      %p174 = por %p172, %p173
      %p176 = scmp.ne.s32.totalorder %s161, %s175
      %p177 = scmp.eq.s32.totalorder %s25, 0
      %p178 = por %p176, %p177
      %s180 = sadd.s32 %s179, 1
      %p183 = scmp.eq.s32.totalorder %s19, 1
      %p184 = scmp.ne.s32.totalorder %s179, %s181
      %p185 = scmp.eq.s32.totalorder %s19, 0
      %p186 = por %p184, %p185
      %p187 = scmp.ne.s32.totalorder %s179, %s181
      %p188 = scmp.eq.s32.totalorder %s24, 1
      %p189 = por %p187, %p188
      %p190 = scmp.ne.s32.totalorder %s181, %s182
      %p191 = scmp.eq.s32.totalorder %s24, 0
      %p192 = por %p190, %p191
      %p193 = scmp.ne.s32.totalorder %s181, %s182
      %p194 = scmp.eq.s32.totalorder %s25, 1
      %p195 = por %p193, %p194
      %p197 = scmp.ne.s32.totalorder %s182, %s196
      %p198 = scmp.eq.s32.totalorder %s25, 0
      %p199 = por %p197, %p198
      %s201 = sadd.s32 %s200, 1
      %p204 = scmp.eq.s32.totalorder %s19, 1
      %p205 = scmp.ne.s32.totalorder %s200, %s202
      %p206 = scmp.eq.s32.totalorder %s19, 0
      %p207 = por %p205, %p206
      %p208 = scmp.ne.s32.totalorder %s200, %s202
      %p209 = scmp.eq.s32.totalorder %s24, 1
      %p210 = por %p208, %p209
      %p211 = scmp.ne.s32.totalorder %s202, %s203
      %p212 = scmp.eq.s32.totalorder %s24, 0
      %p213 = por %p211, %p212
      %p214 = scmp.ne.s32.totalorder %s202, %s203
      %p215 = scmp.eq.s32.totalorder %s25, 1
      %p216 = por %p214, %p215
      %p218 = scmp.ne.s32.totalorder %s203, %s217
      %p219 = scmp.eq.s32.totalorder %s25, 0
      %p220 = por %p218, %p219
      %s222 = sadd.s32 %s221, 1
      %p225 = scmp.eq.s32.totalorder %s19, 1
      %p226 = scmp.ne.s32.totalorder %s221, %s223
      %p227 = scmp.eq.s32.totalorder %s19, 0
      %p228 = por %p226, %p227
      %p229 = scmp.ne.s32.totalorder %s221, %s223
      %p230 = scmp.eq.s32.totalorder %s24, 1
      %p231 = por %p229, %p230
      %p232 = scmp.ne.s32.totalorder %s223, %s224
      %p233 = scmp.eq.s32.totalorder %s24, 0
      %p234 = por %p232, %p233
      %p235 = scmp.ne.s32.totalorder %s223, %s224
      %p236 = scmp.eq.s32.totalorder %s25, 1
      %p237 = por %p235, %p236
      %p239 = scmp.ne.s32.totalorder %s224, %s238
      %p240 = scmp.eq.s32.totalorder %s25, 0
      %p241 = por %p239, %p240
      %s242 = ssub.s32 %s19, %s26
      %p243 = scmp.eq.s32.totalorder %s242, 0
      %s245 = sadd.s32 %s244, 1
      %s246 = scalar_select %p243, %s244, %s245
      %p249 = pneg %p243
      %p250 = scmp.eq.s32.totalorder %s19, 1
      %p251 = por %p249, %p250
      %p252 = scmp.ne.s32.totalorder %s244, %s247
      %p253 = scmp.eq.s32.totalorder %s19, 0
      %p254 = por %p252, %p253
      %p255 = scmp.ne.s32.totalorder %s244, %s247
      %p256 = scmp.eq.s32.totalorder %s24, 1
      %p257 = por %p255, %p256
      %p258 = scmp.ne.s32.totalorder %s247, %s248
      %p259 = scmp.eq.s32.totalorder %s24, 0
      %p260 = por %p258, %p259
      %p261 = scmp.ne.s32.totalorder %s247, %s248
      %p262 = scmp.eq.s32.totalorder %s25, 1
      %p263 = por %p261, %p262
      %p265 = scmp.ne.s32.totalorder %s248, %s264
      %p266 = scmp.eq.s32.totalorder %s25, 0
      %p267 = por %p265, %p266
      %p268 = scmp.le.s32.totalorder 1, %s19
      %p269 = scmp.lt.s32.totalorder %s19, 3
      %p270 = pnand %p268, %p269
      %p271 = pneg %p270
      // Predicated region
      $region9: #{tpu_custom_call.1} parent=5 // pred_check
        _
      $region10: #{tpu_custom_call.1} parent=5 // pred_check_branch
        %273 = sbr.rel (%p270) target = $region12
      $region11: #{tpu_custom_call.1} parent=5 // pred_region
        %s274 = ssub.s32 %s19, 1
        // Predicated region
        $region13: #{tpu_custom_call.1} parent=11 // pred_check
          %p275 = pneg %p66
        $region14: #{tpu_custom_call.1} parent=11 // pred_check_branch
          %277 = sbr.rel (%p275) target = $region16
        $region15: #{tpu_custom_call.1} parent=11 // pred_region
          _
        $region16: #{tpu_custom_call.1} parent=11 // pred_fallthru
          _
        // Predicated region
        $region17: #{tpu_custom_call.1} parent=11 // pred_check
          %p278 = pneg %p87
        $region18: #{tpu_custom_call.1} parent=11 // pred_check_branch
          %280 = sbr.rel (%p278) target = $region20
        $region19: #{tpu_custom_call.1} parent=11 // pred_region
          _
        $region20: #{tpu_custom_call.1} parent=11 // pred_fallthru
          _
        // Predicated region
        $region21: #{tpu_custom_call.1} parent=11 // pred_check
          %p281 = pneg %p108
        $region22: #{tpu_custom_call.1} parent=11 // pred_check_branch
          %283 = sbr.rel (%p281) target = $region24
        $region23: #{tpu_custom_call.1} parent=11 // pred_region
          _
        $region24: #{tpu_custom_call.1} parent=11 // pred_fallthru
          _
        // Predicated region
        $region25: #{tpu_custom_call.1} parent=11 // pred_check
          %p284 = pneg %p129
        $region26: #{tpu_custom_call.1} parent=11 // pred_check_branch
          %286 = sbr.rel (%p284) target = $region28
        $region27: #{tpu_custom_call.1} parent=11 // pred_region
          _
        $region28: #{tpu_custom_call.1} parent=11 // pred_fallthru
          _
        // Predicated region
        $region29: #{tpu_custom_call.1} parent=11 // pred_check
          %p287 = pneg %p150
        $region30: #{tpu_custom_call.1} parent=11 // pred_check_branch
          %289 = sbr.rel (%p287) target = $region32
        $region31: #{tpu_custom_call.1} parent=11 // pred_region
          _
        $region32: #{tpu_custom_call.1} parent=11 // pred_fallthru
          _
        // Predicated region
        $region33: #{tpu_custom_call.1} parent=11 // pred_check
          %p290 = pneg %p171
        $region34: #{tpu_custom_call.1} parent=11 // pred_check_branch
          %292 = sbr.rel (%p290) target = $region36
        $region35: #{tpu_custom_call.1} parent=11 // pred_region
          _
        $region36: #{tpu_custom_call.1} parent=11 // pred_fallthru
          _
        // Predicated region
        $region37: #{tpu_custom_call.1} parent=11 // pred_check
          %p293 = pneg %p192
        $region38: #{tpu_custom_call.1} parent=11 // pred_check_branch
          %295 = sbr.rel (%p293) target = $region40
        $region39: #{tpu_custom_call.1} parent=11 // pred_region
          _
        $region40: #{tpu_custom_call.1} parent=11 // pred_fallthru
          _
        // Predicated region
        $region41: #{tpu_custom_call.1} parent=11 // pred_check
          %p296 = pneg %p213
        $region42: #{tpu_custom_call.1} parent=11 // pred_check_branch
          %298 = sbr.rel (%p296) target = $region44
        $region43: #{tpu_custom_call.1} parent=11 // pred_region
          _
        $region44: #{tpu_custom_call.1} parent=11 // pred_fallthru
          _
        // Predicated region
        $region45: #{tpu_custom_call.1} parent=11 // pred_check
          %p299 = pneg %p234
        $region46: #{tpu_custom_call.1} parent=11 // pred_check_branch
          %301 = sbr.rel (%p299) target = $region48
        $region47: #{tpu_custom_call.1} parent=11 // pred_region
          _
        $region48: #{tpu_custom_call.1} parent=11 // pred_fallthru
          _
      $region12: #{tpu_custom_call.1} parent=5 // pred_fallthru
        _
      %p302 = scmp.lt.s32.totalorder %s19, 2
      // Predicated region
      $region49: #{tpu_custom_call.1} parent=5 // pred_check
        %p303 = pneg %p302
      $region50: #{tpu_custom_call.1} parent=5 // pred_check_branch
        %305 = sbr.rel (%p303) target = $region52
      $region51: #{tpu_custom_call.1} parent=5 // pred_region
        // Predicated region
        $region53: #{tpu_custom_call.1} parent=51 // pred_check
          %p306 = pneg %p39
        $region54: #{tpu_custom_call.1} parent=51 // pred_check_branch
          %308 = sbr.rel (%p306) target = $region56
        $region55: #{tpu_custom_call.1} parent=51 // pred_region
          %p309 = scmp.lt.s32.totalorder %s19, 1
          %s310 = scalar_select %p309, %s19, 1
          %s311 = smul.addr %s310, 2
          %s312 = smul.addr %s311, 8
          %s313 = scalar_lea.vmem %s0, %s312
        $region56: #{tpu_custom_call.1} parent=51 // pred_fallthru
          _
      $region52: #{tpu_custom_call.1} parent=5 // pred_fallthru
        _
      %p314 = scmp.le.s32.totalorder 1, %s19
      %p315 = scmp.lt.s32.totalorder %s19, 3
      %p316 = pnand %p314, %p315
      %p317 = pneg %p316
      // Predicated region
      $region57: #{tpu_custom_call.1} parent=5 // pred_check
        _
      $region58: #{tpu_custom_call.1} parent=5 // pred_check_branch
        %319 = sbr.rel (%p316) target = $region60
      $region59: #{tpu_custom_call.1} parent=5 // pred_region
        %s320 = ssub.s32 %s19, 1
        %p321 = scmp.lt.s32.totalorder %s24, 1
        %s322 = scalar_select %p321, %s24, 1
        %s323 = smul.addr %s322, 2
        %s324 = smul.addr %s323, 8
        %s325 = scalar_lea.vmem %s0, %s324
        %p326 = pneg %p45
        %p327 = pneg %p42
        %p328 = pneg %p66
        %p329 = pneg %p63
        %p330 = pneg %p87
        %p331 = pneg %p84
        %p332 = pneg %p108
        %p333 = pneg %p105
        %p334 = pneg %p129
        %p335 = pneg %p126
        %p336 = pneg %p150
        %p337 = pneg %p147
        %p338 = pneg %p171
        %p339 = pneg %p168
        %p340 = pneg %p192
        %p341 = pneg %p189
        %p342 = pneg %p213
        %p343 = pneg %p210
        %p344 = pneg %p234
        %p345 = pneg %p231
        %p346 = pneg %p260
        %p347 = pneg %p257
        %s348 = sand.u32 %s247, 1
        %s349 = scalar_lea.sflag [#allocation3], %s348
        %s350 = sand.u32 %s247, 1
        %s351 = smul.addr %s350, 16
        %s352 = scalar_lea.vmem [#allocation2], %s351
        %p353 = scmp.lt.s32.totalorder %s24, 1
        %s354 = scalar_select %p353, %s24, 1
        %s355 = smul.addr %s354, 2
        %s356 = smul.addr %s355, 8
        %s357 = scalar_lea.vmem %s0, %s356
        %v358 = vld [vmem:[%s357] sm:$0xff]
        %v359 = vld [vmem:[%s357 + $0x8] sm:$0xff]
        %v360 = vld [vmem:[%s1] sm:$0xff]
        %v361 = vld [vmem:[%s1 + $0x8] sm:$0xff]
        %v362 = vld [vmem:[%s1 + $0x10] sm:$0xff]
        %v363 = vld [vmem:[%s1 + $0x18] sm:$0xff]
        %v364 = vld [vmem:[%s1 + $0x20] sm:$0xff]
        %v365 = vld [vmem:[%s1 + $0x28] sm:$0xff]
        %vm366 = vcmask 392192
        %v368 = vsel %vm366, %v358, 0
        %v371 = vsel %vm366, %v359, 0
        %373 = vmatprep.subr.mxu0 0.0
        %374 = vmatpush1.msra.mxu0 0.0
        %375 = vmatprep.subr.mxu0 0.0
        %376 = vmatpush1.msra.mxu0 0.0
        %377 = vmatprep.subr.mxu0 0.0
        %378 = vmatpush1.msra.mxu0 0.0
        %379 = vmatprep.subr.mxu0 0.0
        %380 = vmatpush1.msra.mxu0 0.0
        %381 = vmatprep.subr.mxu0 0.0
        %382 = vmatpush1.msra.mxu0 0.0
        %383 = vmatprep.subr.mxu0 0.0
        %384 = vmatpush1.msra.mxu0 0.0
        %385 = vmatprep.subr.mxu0 0.0
        %386 = vmatpush1.msra.mxu0 0.0
        %387 = vmatprep.subr.mxu0 0.0
        %388 = vmatpush1.msra.mxu0 0.0
        %389 = vmatprep.subr.mxu0 0.0
        %390 = vmatpush1.msra.mxu0 0.0
        %391 = vmatprep.subr.mxu0 0.0
        %392 = vmatpush1.msra.mxu0 0.0
        %393 = vmatprep.subr.mxu0 0.0
        %394 = vmatpush1.msra.mxu0 %v365
        %395 = vmatprep.subr.mxu0 0.0
        %396 = vmatpush1.msra.mxu0 %v364
        %397 = vmatprep.subr.mxu0 0.0
        %398 = vmatpush1.msra.mxu0 %v363
        %399 = vmatprep.subr.mxu0 0.0
        %400 = vmatpush1.msra.mxu0 %v362
        %401 = vmatprep.subr.mxu0 0.0
        %402 = vmatpush1.msra.mxu0 %v361
        %403 = vmatprep.subr.mxu0 0.0
        %404 = vmatpush1.msra.mxu0 %v360
        %405 = vmatprep.subr.mxu0 0.0
        %406 = vmatpush2.msra.mxu0 0.0
        %407 = vmatprep.subr.mxu0 0.0
        %408 = vmatpush2.msra.mxu0 0.0
        %409 = vmatprep.subr.mxu0 0.0
        %410 = vmatpush2.msra.mxu0 0.0
        %411 = vmatprep.subr.mxu0 0.0
        %412 = vmatpush2.msra.mxu0 0.0
        %413 = vmatprep.subr.mxu0 0.0
        %414 = vmatpush2.msra.mxu0 0.0
        %415 = vmatprep.subr.mxu0 0.0
        %416 = vmatpush2.msra.mxu0 0.0
        %417 = vmatprep.subr.mxu0 0.0
        %418 = vmatpush2.msra.mxu0 0.0
        %419 = vmatprep.subr.mxu0 0.0
        %420 = vmatpush2.msra.mxu0 0.0
        %421 = vmatprep.subr.mxu0 0.0
        %422 = vmatpush2.msra.mxu0 0.0
        %423 = vmatprep.subr.mxu0 0.0
        %424 = vmatpush2.msra.mxu0 0.0
        %425 = vmatprep.subr.mxu0 0.0
        %426 = vmatpush2.msra.mxu0 0.0
        %427 = vmatprep.subr.mxu0 0.0
        %428 = vmatpush2.msra.mxu0 0.0
        %429 = vmatprep.subr.mxu0 0.0
        %430 = vmatpush2.msra.mxu0 0.0
        %431 = vmatprep.subr.mxu0 0.0
        %432 = vmatpush2.msra.mxu0 0.0
        %433 = vmatprep.subr.mxu0 0.0
        %434 = vmatpush2.msra.mxu0 0.0
        %435 = vmatprep.subr.mxu0 0.0
        %436 = vmatpush2.msra.mxu0 0.0
        %437 = vmatprep.mubr.f32.mxu0 0.0
        %438 = vmatmul.mubr.f32.gmra.mxu0 %v368
        %v439 = vpop.f32.mrf.mxu0
        %v440 = vadd.f32 0.0, %v439
        %v441 = vpop.f32.mrf.mxu0
        %442 = vmatprep.mubr.f32.mxu0 0.0
        %443 = vmatmul.mubr.f32.gmra.mxu0 %v371
        %v444 = vpop.f32.mrf.mxu0
        %v445 = vadd.f32 0.0, %v444
        %v446 = vpop.f32.mrf.mxu0
        %447 = vdwg.mxu0
        %vm448 = vcmask 261120
        %v449 = vsel %vm448, %v440, 0.0
        %450 = vadd.xlane.f32.xlu0 %v449
        %v451 = vpop.xlane.xlu0 %450
        %v452 = vsel %vm448, %v445, 0.0
        %453 = vadd.xlane.f32.xlu0 %v452
        %v454 = vpop.xlane.xlu0 %453
        %v455 = vrcp.pop 32.0
        %v456 = vmul.f32 %v451, %v455
        %v457 = vmul.f32 %v454, %v455
        %v458 = vsub.f32 %v440, %v456
        %v459 = vsub.f32 %v445, %v457
        %v460 = vmul.f32 %v458, %v458
        %v461 = vmul.f32 %v459, %v459
        %v462 = vsel %vm448, %v460, 0.0
        %463 = vadd.xlane.f32.xlu0 %v462
        %v464 = vpop.xlane.xlu0 %463
        %v465 = vsel %vm448, %v461, 0.0
        %466 = vadd.xlane.f32.xlu0 %v465
        %v467 = vpop.xlane.xlu0 %466
        %v468 = vmul.f32 %v464, %v455
        %v469 = vmul.f32 %v467, %v455
        %v470 = vadd.f32 %v468, 1e-05
        %v471 = vadd.f32 %v469, 1e-05
        %v472 = vrsqrt.pop %v470
        %v473 = vrsqrt.pop %v471
        %v474 = vmul.f32 %v458, %v472
        %v475 = vmul.f32 %v459, %v473
        %v476 = vld [vmem:[%s2] sm:$0x1]
        %v478 = vlaneseq
        %v479 = vshrl.u32 %v478, 7
        %v480 = vsub.s32 0, %v479
        %v481 = vrot.slane %v476, %v480
        %v483 = vmul.f32 %v474, %v481
        %v484 = vmul.f32 %v475, %v481
        %v485 = vld [vmem:[%s3] sm:$0x1]
        %v487 = vlaneseq
        %v488 = vshrl.u32 %v487, 7
        %v489 = vsub.s32 0, %v488
        %v490 = vrot.slane %v485, %v489
        %v492 = vadd.f32 %v483, %v490
        %v493 = vadd.f32 %v484, %v490
        %v494 = vld [vmem:[%s5] sm:$0xff]
        %v495 = vld [vmem:[%s5 + $0x8] sm:$0xff]
        %v496 = vld [vmem:[%s5 + $0x10] sm:$0xff]
        %v497 = vld [vmem:[%s5 + $0x18] sm:$0xff]
        %v499 = vsel %vm448, %v492, 0
        %v502 = vsel %vm448, %v493, 0
        %504 = vmatprep.subr.mxu0 0.0
        %505 = vmatpush1.msra.mxu0 0.0
        %506 = vmatprep.subr.mxu0 0.0
        %507 = vmatpush1.msra.mxu0 0.0
        %508 = vmatprep.subr.mxu0 0.0
        %509 = vmatpush1.msra.mxu0 0.0
        %510 = vmatprep.subr.mxu0 0.0
        %511 = vmatpush1.msra.mxu0 0.0
        %512 = vmatprep.subr.mxu0 0.0
        %513 = vmatpush1.msra.mxu0 0.0
        %514 = vmatprep.subr.mxu0 0.0
        %515 = vmatpush1.msra.mxu0 0.0
        %516 = vmatprep.subr.mxu0 0.0
        %517 = vmatpush1.msra.mxu0 0.0
        %518 = vmatprep.subr.mxu0 0.0
        %519 = vmatpush1.msra.mxu0 0.0
        %520 = vmatprep.subr.mxu0 0.0
        %521 = vmatpush1.msra.mxu0 0.0
        %522 = vmatprep.subr.mxu0 0.0
        %523 = vmatpush1.msra.mxu0 0.0
        %524 = vmatprep.subr.mxu0 0.0
        %525 = vmatpush1.msra.mxu0 0.0
        %526 = vmatprep.subr.mxu0 0.0
        %527 = vmatpush1.msra.mxu0 0.0
        %528 = vmatprep.subr.mxu0 0.0
        %529 = vmatpush1.msra.mxu0 %v497
        %530 = vmatprep.subr.mxu0 0.0
        %531 = vmatpush1.msra.mxu0 %v496
        %532 = vmatprep.subr.mxu0 0.0
        %533 = vmatpush1.msra.mxu0 %v495
        %534 = vmatprep.subr.mxu0 0.0
        %535 = vmatpush1.msra.mxu0 %v494
        %536 = vmatprep.subr.mxu0 0.0
        %537 = vmatpush2.msra.mxu0 0.0
        %538 = vmatprep.subr.mxu0 0.0
        %539 = vmatpush2.msra.mxu0 0.0
        %540 = vmatprep.subr.mxu0 0.0
        %541 = vmatpush2.msra.mxu0 0.0
        %542 = vmatprep.subr.mxu0 0.0
        %543 = vmatpush2.msra.mxu0 0.0
        %544 = vmatprep.subr.mxu0 0.0
        %545 = vmatpush2.msra.mxu0 0.0
        %546 = vmatprep.subr.mxu0 0.0
        %547 = vmatpush2.msra.mxu0 0.0
        %548 = vmatprep.subr.mxu0 0.0
        %549 = vmatpush2.msra.mxu0 0.0
        %550 = vmatprep.subr.mxu0 0.0
        %551 = vmatpush2.msra.mxu0 0.0
        %552 = vmatprep.subr.mxu0 0.0
        %553 = vmatpush2.msra.mxu0 0.0
        %554 = vmatprep.subr.mxu0 0.0
        %555 = vmatpush2.msra.mxu0 0.0
        %556 = vmatprep.subr.mxu0 0.0
        %557 = vmatpush2.msra.mxu0 0.0
        %558 = vmatprep.subr.mxu0 0.0
        %559 = vmatpush2.msra.mxu0 0.0
        %560 = vmatprep.subr.mxu0 0.0
        %561 = vmatpush2.msra.mxu0 0.0
        %562 = vmatprep.subr.mxu0 0.0
        %563 = vmatpush2.msra.mxu0 0.0
        %564 = vmatprep.subr.mxu0 0.0
        %565 = vmatpush2.msra.mxu0 0.0
        %566 = vmatprep.subr.mxu0 0.0
        %567 = vmatpush2.msra.mxu0 0.0
        %568 = vmatprep.mubr.f32.mxu0 0.0
        %569 = vmatmul.mubr.f32.gmra.mxu0 %v499
        %v570 = vpop.f32.mrf.mxu0
        %v571 = vadd.f32 0.0, %v570
        %v572 = vpop.f32.mrf.mxu0
        %573 = vmatprep.mubr.f32.mxu0 0.0
        %574 = vmatmul.mubr.f32.gmra.mxu0 %v502
        %v575 = vpop.f32.mrf.mxu0
        %v576 = vadd.f32 0.0, %v575
        %v577 = vpop.f32.mrf.mxu0
        %578 = vdwg.mxu0
        %v579 = vld [vmem:[%s6] sm:$0xff]
        %v580 = vld [vmem:[%s6 + $0x8] sm:$0xff]
        %v581 = vadd.f32 %v571, %v579
        %v582 = vadd.f32 %v576, %v580
        %v583 = vld [vmem:[%s7] sm:$0x1]
        %v585 = vlaneseq
        %v586 = vshrl.u32 %v585, 7
        %v587 = vsub.s32 0, %v586
        %v588 = vrot.slane %v583, %v587
        %589 = vrot.lane.b32.xlu0 %v588, 32
        %v590 = vpop.permute.xlu0 %589
        %v592 = vadd.f32 %v571, %v590
        %v593 = vadd.f32 %v576, %v590
        %v594 = vld [vmem:[%s4] sm:$0xff]
        %v595 = vld [vmem:[%s4 + $0x8] sm:$0xff]
        %v596 = vld [vmem:[%s4 + $0x10] sm:$0xff]
        %v597 = vld [vmem:[%s4 + $0x18] sm:$0xff]
        %v598 = vld [vmem:[%s4 + $0x20] sm:$0xff]
        %v599 = vld [vmem:[%s4 + $0x28] sm:$0xff]
        %v600 = vld [vmem:[%s4 + $0x30] sm:$0xff]
        %v601 = vld [vmem:[%s4 + $0x38] sm:$0xff]
        %604 = vrot.lane.b32.xlu0 %v581, 120
        %v605 = vpop.permute.xlu0 %604
        %606 = vrot.lane.b32.xlu0 %v582, 120
        %v607 = vpop.permute.xlu0 %606
        %608 = vrot.lane.b32.xlu0 %v581, 112
        %v609 = vpop.permute.xlu0 %608
        %610 = vrot.lane.b32.xlu0 %v582, 112
        %v611 = vpop.permute.xlu0 %610
        %612 = vrot.lane.b32.xlu0 %v581, 104
        %v613 = vpop.permute.xlu0 %612
        %614 = vrot.lane.b32.xlu0 %v582, 104
        %v615 = vpop.permute.xlu0 %614
        %618 = vrot.lane.b32.xlu0 %v592, 120
        %v619 = vpop.permute.xlu0 %618
        %620 = vrot.lane.b32.xlu0 %v593, 120
        %v621 = vpop.permute.xlu0 %620
        %622 = vrot.lane.b32.xlu0 %v592, 112
        %v623 = vpop.permute.xlu0 %622
        %624 = vrot.lane.b32.xlu0 %v593, 112
        %v625 = vpop.permute.xlu0 %624
        %626 = vrot.lane.b32.xlu0 %v592, 104
        %v627 = vpop.permute.xlu0 %626
        %628 = vrot.lane.b32.xlu0 %v593, 104
        %v629 = vpop.permute.xlu0 %628
        %vm630 = vcmask 64512
        %v632 = vsel %vm630, %v594, 0
        %v635 = vsel %vm630, %v595, 0
        %v637 = vsel %vm630, %v581, 0
        %v639 = vsel %vm630, %v582, 0
        %641 = vmatprep.subr.mxu0 0.0
        %642 = vmatpush1.xpose.msra.mxu0 0.0
        %643 = vmatprep.subr.mxu0 0.0
        %644 = vmatpush1.xpose.msra.mxu0 0.0
        %645 = vmatprep.subr.mxu0 0.0
        %646 = vmatpush1.xpose.msra.mxu0 0.0
        %647 = vmatprep.subr.mxu0 0.0
        %648 = vmatpush1.xpose.msra.mxu0 0.0
        %649 = vmatprep.subr.mxu0 0.0
        %650 = vmatpush1.xpose.msra.mxu0 0.0
        %651 = vmatprep.subr.mxu0 0.0
        %652 = vmatpush1.xpose.msra.mxu0 0.0
        %653 = vmatprep.subr.mxu0 0.0
        %654 = vmatpush1.xpose.msra.mxu0 0.0
        %655 = vmatprep.subr.mxu0 0.0
        %656 = vmatpush1.xpose.msra.mxu0 0.0
        %657 = vmatprep.subr.mxu0 0.0
        %658 = vmatpush1.xpose.msra.mxu0 0.0
        %659 = vmatprep.subr.mxu0 0.0
        %660 = vmatpush1.xpose.msra.mxu0 0.0
        %661 = vmatprep.subr.mxu0 0.0
        %662 = vmatpush1.xpose.msra.mxu0 0.0
        %663 = vmatprep.subr.mxu0 0.0
        %664 = vmatpush1.xpose.msra.mxu0 0.0
        %665 = vmatprep.subr.mxu0 0.0
        %666 = vmatpush1.xpose.msra.mxu0 0.0
        %667 = vmatprep.subr.mxu0 0.0
        %668 = vmatpush1.xpose.msra.mxu0 0.0
        %669 = vmatprep.subr.mxu0 0.0
        %670 = vmatpush1.xpose.msra.mxu0 %v639
        %671 = vmatprep.subr.mxu0 0.0
        %672 = vmatpush1.xpose.msra.mxu0 %v637
        %673 = vmatprep.subr.mxu0 0.0
        %674 = vmatpush2.xpose.msra.mxu0 0.0
        %675 = vmatprep.subr.mxu0 0.0
        %676 = vmatpush2.xpose.msra.mxu0 0.0
        %677 = vmatprep.subr.mxu0 0.0
        %678 = vmatpush2.xpose.msra.mxu0 0.0
        %679 = vmatprep.subr.mxu0 0.0
        %680 = vmatpush2.xpose.msra.mxu0 0.0
        %681 = vmatprep.subr.mxu0 0.0
        %682 = vmatpush2.xpose.msra.mxu0 0.0
        %683 = vmatprep.subr.mxu0 0.0
        %684 = vmatpush2.xpose.msra.mxu0 0.0
        %685 = vmatprep.subr.mxu0 0.0
        %686 = vmatpush2.xpose.msra.mxu0 0.0
        %687 = vmatprep.subr.mxu0 0.0
        %688 = vmatpush2.xpose.msra.mxu0 0.0
        %689 = vmatprep.subr.mxu0 0.0
        %690 = vmatpush2.xpose.msra.mxu0 0.0
        %691 = vmatprep.subr.mxu0 0.0
        %692 = vmatpush2.xpose.msra.mxu0 0.0
        %693 = vmatprep.subr.mxu0 0.0
        %694 = vmatpush2.xpose.msra.mxu0 0.0
        %695 = vmatprep.subr.mxu0 0.0
        %696 = vmatpush2.xpose.msra.mxu0 0.0
        %697 = vmatprep.subr.mxu0 0.0
        %698 = vmatpush2.xpose.msra.mxu0 0.0
        %699 = vmatprep.subr.mxu0 0.0
        %700 = vmatpush2.xpose.msra.mxu0 0.0
        %701 = vmatprep.subr.mxu0 0.0
        %702 = vmatpush2.xpose.msra.mxu0 0.0
        %703 = vmatprep.subr.mxu0 0.0
        %704 = vmatpush2.xpose.msra.mxu0 0.0
        %705 = vmatprep.mubr.f32.mxu0 0.0
        %706 = vmatmul.mubr.f32.gmra.mxu0 %v632
        %v707 = vpop.f32.mrf.mxu0
        %v708 = vadd.f32 0.0, %v707
        %v709 = vpop.f32.mrf.mxu0
        %710 = vmatprep.mubr.f32.mxu0 0.0
        %711 = vmatmul.mubr.f32.gmra.mxu0 %v635
        %v712 = vpop.f32.mrf.mxu0
        %v713 = vadd.f32 0.0, %v712
        %v714 = vpop.f32.mrf.mxu0
        %715 = vdwg.mxu0
        %v717 = vsel %vm630, %v596, 0
        %v720 = vsel %vm630, %v597, 0
        %v722 = vsel %vm630, %v605, 0
        %v724 = vsel %vm630, %v607, 0
        %726 = vmatprep.subr.mxu0 0.0
        %727 = vmatpush1.xpose.msra.mxu0 0.0
        %728 = vmatprep.subr.mxu0 0.0
        %729 = vmatpush1.xpose.msra.mxu0 0.0
        %730 = vmatprep.subr.mxu0 0.0
        %731 = vmatpush1.xpose.msra.mxu0 0.0
        %732 = vmatprep.subr.mxu0 0.0
        %733 = vmatpush1.xpose.msra.mxu0 0.0
        %734 = vmatprep.subr.mxu0 0.0
        %735 = vmatpush1.xpose.msra.mxu0 0.0
        %736 = vmatprep.subr.mxu0 0.0
        %737 = vmatpush1.xpose.msra.mxu0 0.0
        %738 = vmatprep.subr.mxu0 0.0
        %739 = vmatpush1.xpose.msra.mxu0 0.0
        %740 = vmatprep.subr.mxu0 0.0
        %741 = vmatpush1.xpose.msra.mxu0 0.0
        %742 = vmatprep.subr.mxu0 0.0
        %743 = vmatpush1.xpose.msra.mxu0 0.0
        %744 = vmatprep.subr.mxu0 0.0
        %745 = vmatpush1.xpose.msra.mxu0 0.0
        %746 = vmatprep.subr.mxu0 0.0
        %747 = vmatpush1.xpose.msra.mxu0 0.0
        %748 = vmatprep.subr.mxu0 0.0
        %749 = vmatpush1.xpose.msra.mxu0 0.0
        %750 = vmatprep.subr.mxu0 0.0
        %751 = vmatpush1.xpose.msra.mxu0 0.0
        %752 = vmatprep.subr.mxu0 0.0
        %753 = vmatpush1.xpose.msra.mxu0 0.0
        %754 = vmatprep.subr.mxu0 0.0
        %755 = vmatpush1.xpose.msra.mxu0 %v724
        %756 = vmatprep.subr.mxu0 0.0
        %757 = vmatpush1.xpose.msra.mxu0 %v722
        %758 = vmatprep.subr.mxu0 0.0
        %759 = vmatpush2.xpose.msra.mxu0 0.0
        %760 = vmatprep.subr.mxu0 0.0
        %761 = vmatpush2.xpose.msra.mxu0 0.0
        %762 = vmatprep.subr.mxu0 0.0
        %763 = vmatpush2.xpose.msra.mxu0 0.0
        %764 = vmatprep.subr.mxu0 0.0
        %765 = vmatpush2.xpose.msra.mxu0 0.0
        %766 = vmatprep.subr.mxu0 0.0
        %767 = vmatpush2.xpose.msra.mxu0 0.0
        %768 = vmatprep.subr.mxu0 0.0
        %769 = vmatpush2.xpose.msra.mxu0 0.0
        %770 = vmatprep.subr.mxu0 0.0
        %771 = vmatpush2.xpose.msra.mxu0 0.0
        %772 = vmatprep.subr.mxu0 0.0
        %773 = vmatpush2.xpose.msra.mxu0 0.0
        %774 = vmatprep.subr.mxu0 0.0
        %775 = vmatpush2.xpose.msra.mxu0 0.0
        %776 = vmatprep.subr.mxu0 0.0
        %777 = vmatpush2.xpose.msra.mxu0 0.0
        %778 = vmatprep.subr.mxu0 0.0
        %779 = vmatpush2.xpose.msra.mxu0 0.0
        %780 = vmatprep.subr.mxu0 0.0
        %781 = vmatpush2.xpose.msra.mxu0 0.0
        %782 = vmatprep.subr.mxu0 0.0
        %783 = vmatpush2.xpose.msra.mxu0 0.0
        %784 = vmatprep.subr.mxu0 0.0
        %785 = vmatpush2.xpose.msra.mxu0 0.0
        %786 = vmatprep.subr.mxu0 0.0
        %787 = vmatpush2.xpose.msra.mxu0 0.0
        %788 = vmatprep.subr.mxu0 0.0
        %789 = vmatpush2.xpose.msra.mxu0 0.0
        %790 = vmatprep.mubr.f32.mxu0 0.0
        %791 = vmatmul.mubr.f32.gmra.mxu0 %v717
        %v792 = vpop.f32.mrf.mxu0
        %v793 = vadd.f32 0.0, %v792
        %v794 = vpop.f32.mrf.mxu0
        %795 = vmatprep.mubr.f32.mxu0 0.0
        %796 = vmatmul.mubr.f32.gmra.mxu0 %v720
        %v797 = vpop.f32.mrf.mxu0
        %v798 = vadd.f32 0.0, %v797
        %v799 = vpop.f32.mrf.mxu0
        %800 = vdwg.mxu0
        %v802 = vsel %vm630, %v598, 0
        %v805 = vsel %vm630, %v599, 0
        %v807 = vsel %vm630, %v609, 0
        %v809 = vsel %vm630, %v611, 0
        %811 = vmatprep.subr.mxu0 0.0
        %812 = vmatpush1.xpose.msra.mxu0 0.0
        %813 = vmatprep.subr.mxu0 0.0
        %814 = vmatpush1.xpose.msra.mxu0 0.0
        %815 = vmatprep.subr.mxu0 0.0
        %816 = vmatpush1.xpose.msra.mxu0 0.0
        %817 = vmatprep.subr.mxu0 0.0
        %818 = vmatpush1.xpose.msra.mxu0 0.0
        %819 = vmatprep.subr.mxu0 0.0
        %820 = vmatpush1.xpose.msra.mxu0 0.0
        %821 = vmatprep.subr.mxu0 0.0
        %822 = vmatpush1.xpose.msra.mxu0 0.0
        %823 = vmatprep.subr.mxu0 0.0
        %824 = vmatpush1.xpose.msra.mxu0 0.0
        %825 = vmatprep.subr.mxu0 0.0
        %826 = vmatpush1.xpose.msra.mxu0 0.0
        %827 = vmatprep.subr.mxu0 0.0
        %828 = vmatpush1.xpose.msra.mxu0 0.0
        %829 = vmatprep.subr.mxu0 0.0
        %830 = vmatpush1.xpose.msra.mxu0 0.0
        %831 = vmatprep.subr.mxu0 0.0
        %832 = vmatpush1.xpose.msra.mxu0 0.0
        %833 = vmatprep.subr.mxu0 0.0
        %834 = vmatpush1.xpose.msra.mxu0 0.0
        %835 = vmatprep.subr.mxu0 0.0
        %836 = vmatpush1.xpose.msra.mxu0 0.0
        %837 = vmatprep.subr.mxu0 0.0
        %838 = vmatpush1.xpose.msra.mxu0 0.0
        %839 = vmatprep.subr.mxu0 0.0
        %840 = vmatpush1.xpose.msra.mxu0 %v809
        %841 = vmatprep.subr.mxu0 0.0
        %842 = vmatpush1.xpose.msra.mxu0 %v807
        %843 = vmatprep.subr.mxu0 0.0
        %844 = vmatpush2.xpose.msra.mxu0 0.0
        %845 = vmatprep.subr.mxu0 0.0
        %846 = vmatpush2.xpose.msra.mxu0 0.0
        %847 = vmatprep.subr.mxu0 0.0
        %848 = vmatpush2.xpose.msra.mxu0 0.0
        %849 = vmatprep.subr.mxu0 0.0
        %850 = vmatpush2.xpose.msra.mxu0 0.0
        %851 = vmatprep.subr.mxu0 0.0
        %852 = vmatpush2.xpose.msra.mxu0 0.0
        %853 = vmatprep.subr.mxu0 0.0
        %854 = vmatpush2.xpose.msra.mxu0 0.0
        %855 = vmatprep.subr.mxu0 0.0
        %856 = vmatpush2.xpose.msra.mxu0 0.0
        %857 = vmatprep.subr.mxu0 0.0
        %858 = vmatpush2.xpose.msra.mxu0 0.0
        %859 = vmatprep.subr.mxu0 0.0
        %860 = vmatpush2.xpose.msra.mxu0 0.0
        %861 = vmatprep.subr.mxu0 0.0
        %862 = vmatpush2.xpose.msra.mxu0 0.0
        %863 = vmatprep.subr.mxu0 0.0
        %864 = vmatpush2.xpose.msra.mxu0 0.0
        %865 = vmatprep.subr.mxu0 0.0
        %866 = vmatpush2.xpose.msra.mxu0 0.0
        %867 = vmatprep.subr.mxu0 0.0
        %868 = vmatpush2.xpose.msra.mxu0 0.0
        %869 = vmatprep.subr.mxu0 0.0
        %870 = vmatpush2.xpose.msra.mxu0 0.0
        %871 = vmatprep.subr.mxu0 0.0
        %872 = vmatpush2.xpose.msra.mxu0 0.0
        %873 = vmatprep.subr.mxu0 0.0
        %874 = vmatpush2.xpose.msra.mxu0 0.0
        %875 = vmatprep.mubr.f32.mxu0 0.0
        %876 = vmatmul.mubr.f32.gmra.mxu0 %v802
        %v877 = vpop.f32.mrf.mxu0
        %v878 = vadd.f32 0.0, %v877
        %v879 = vpop.f32.mrf.mxu0
        %880 = vmatprep.mubr.f32.mxu0 0.0
        %881 = vmatmul.mubr.f32.gmra.mxu0 %v805
        %v882 = vpop.f32.mrf.mxu0
        %v883 = vadd.f32 0.0, %v882
        %v884 = vpop.f32.mrf.mxu0
        %885 = vdwg.mxu0
        %v887 = vsel %vm630, %v600, 0
        %v890 = vsel %vm630, %v601, 0
        %v892 = vsel %vm630, %v613, 0
        %v894 = vsel %vm630, %v615, 0
        %896 = vmatprep.subr.mxu0 0.0
        %897 = vmatpush1.xpose.msra.mxu0 0.0
        %898 = vmatprep.subr.mxu0 0.0
        %899 = vmatpush1.xpose.msra.mxu0 0.0
        %900 = vmatprep.subr.mxu0 0.0
        %901 = vmatpush1.xpose.msra.mxu0 0.0
        %902 = vmatprep.subr.mxu0 0.0
        %903 = vmatpush1.xpose.msra.mxu0 0.0
        %904 = vmatprep.subr.mxu0 0.0
        %905 = vmatpush1.xpose.msra.mxu0 0.0
        %906 = vmatprep.subr.mxu0 0.0
        %907 = vmatpush1.xpose.msra.mxu0 0.0
        %908 = vmatprep.subr.mxu0 0.0
        %909 = vmatpush1.xpose.msra.mxu0 0.0
        %910 = vmatprep.subr.mxu0 0.0
        %911 = vmatpush1.xpose.msra.mxu0 0.0
        %912 = vmatprep.subr.mxu0 0.0
        %913 = vmatpush1.xpose.msra.mxu0 0.0
        %914 = vmatprep.subr.mxu0 0.0
        %915 = vmatpush1.xpose.msra.mxu0 0.0
        %916 = vmatprep.subr.mxu0 0.0
        %917 = vmatpush1.xpose.msra.mxu0 0.0
        %918 = vmatprep.subr.mxu0 0.0
        %919 = vmatpush1.xpose.msra.mxu0 0.0
        %920 = vmatprep.subr.mxu0 0.0
        %921 = vmatpush1.xpose.msra.mxu0 0.0
        %922 = vmatprep.subr.mxu0 0.0
        %923 = vmatpush1.xpose.msra.mxu0 0.0
        %924 = vmatprep.subr.mxu0 0.0
        %925 = vmatpush1.xpose.msra.mxu0 %v894
        %926 = vmatprep.subr.mxu0 0.0
        %927 = vmatpush1.xpose.msra.mxu0 %v892
        %928 = vmatprep.subr.mxu0 0.0
        %929 = vmatpush2.xpose.msra.mxu0 0.0
        %930 = vmatprep.subr.mxu0 0.0
        %931 = vmatpush2.xpose.msra.mxu0 0.0
        %932 = vmatprep.subr.mxu0 0.0
        %933 = vmatpush2.xpose.msra.mxu0 0.0
        %934 = vmatprep.subr.mxu0 0.0
        %935 = vmatpush2.xpose.msra.mxu0 0.0
        %936 = vmatprep.subr.mxu0 0.0
        %937 = vmatpush2.xpose.msra.mxu0 0.0
        %938 = vmatprep.subr.mxu0 0.0
        %939 = vmatpush2.xpose.msra.mxu0 0.0
        %940 = vmatprep.subr.mxu0 0.0
        %941 = vmatpush2.xpose.msra.mxu0 0.0
        %942 = vmatprep.subr.mxu0 0.0
        %943 = vmatpush2.xpose.msra.mxu0 0.0
        %944 = vmatprep.subr.mxu0 0.0
        %945 = vmatpush2.xpose.msra.mxu0 0.0
        %946 = vmatprep.subr.mxu0 0.0
        %947 = vmatpush2.xpose.msra.mxu0 0.0
        %948 = vmatprep.subr.mxu0 0.0
        %949 = vmatpush2.xpose.msra.mxu0 0.0
        %950 = vmatprep.subr.mxu0 0.0
        %951 = vmatpush2.xpose.msra.mxu0 0.0
        %952 = vmatprep.subr.mxu0 0.0
        %953 = vmatpush2.xpose.msra.mxu0 0.0
        %954 = vmatprep.subr.mxu0 0.0
        %955 = vmatpush2.xpose.msra.mxu0 0.0
        %956 = vmatprep.subr.mxu0 0.0
        %957 = vmatpush2.xpose.msra.mxu0 0.0
        %958 = vmatprep.subr.mxu0 0.0
        %959 = vmatpush2.xpose.msra.mxu0 0.0
        %960 = vmatprep.mubr.f32.mxu0 0.0
        %961 = vmatmul.mubr.f32.gmra.mxu0 %v887
        %v962 = vpop.f32.mrf.mxu0
        %v963 = vadd.f32 0.0, %v962
        %v964 = vpop.f32.mrf.mxu0
        %965 = vmatprep.mubr.f32.mxu0 0.0
        %966 = vmatmul.mubr.f32.gmra.mxu0 %v890
        %v967 = vpop.f32.mrf.mxu0
        %v968 = vadd.f32 0.0, %v967
        %v969 = vpop.f32.mrf.mxu0
        %970 = vdwg.mxu0
        %vm971 = vcmask 130048
        %v972 = vsel %vm971, %v708, -inf
        %973 = vmax.xlane.f32.xlu0 %v972
        %v974 = vpop.xlane.xlu0 %973
        %v975 = vsel %vm971, %v713, -inf
        %976 = vmax.xlane.f32.xlu0 %v975
        %v977 = vpop.xlane.xlu0 %976
        %v978 = vsel %vm971, %v793, -inf
        %979 = vmax.xlane.f32.xlu0 %v978
        %v980 = vpop.xlane.xlu0 %979
        %v981 = vsel %vm971, %v798, -inf
        %982 = vmax.xlane.f32.xlu0 %v981
        %v983 = vpop.xlane.xlu0 %982
        %v984 = vsel %vm971, %v878, -inf
        %985 = vmax.xlane.f32.xlu0 %v984
        %v986 = vpop.xlane.xlu0 %985
        %v987 = vsel %vm971, %v883, -inf
        %988 = vmax.xlane.f32.xlu0 %v987
        %v989 = vpop.xlane.xlu0 %988
        %v990 = vsel %vm971, %v963, -inf
        %991 = vmax.xlane.f32.xlu0 %v990
        %v992 = vpop.xlane.xlu0 %991
        %v993 = vsel %vm971, %v968, -inf
        %994 = vmax.xlane.f32.xlu0 %v993
        %v995 = vpop.xlane.xlu0 %994
        %v996 = vsub.f32 %v708, %v974
        %v997 = vsub.f32 %v713, %v977
        %v998 = vsub.f32 %v793, %v980
        %v999 = vsub.f32 %v798, %v983
        %v1000 = vsub.f32 %v878, %v986
        %v1001 = vsub.f32 %v883, %v989
        %v1002 = vsub.f32 %v963, %v992
        %v1003 = vsub.f32 %v968, %v995
        %v1004 = vmul.f32 %v996, 1.442695
        %v1005 = vpow.pop %v1004
        %v1006 = vmul.f32 %v997, 1.442695
        %v1007 = vpow.pop %v1006
        %v1008 = vmul.f32 %v998, 1.442695
        %v1009 = vpow.pop %v1008
        %v1010 = vmul.f32 %v999, 1.442695
        %v1011 = vpow.pop %v1010
        %v1012 = vmul.f32 %v1000, 1.442695
        %v1013 = vpow.pop %v1012
        %v1014 = vmul.f32 %v1001, 1.442695
        %v1015 = vpow.pop %v1014
        %v1016 = vmul.f32 %v1002, 1.442695
        %v1017 = vpow.pop %v1016
        %v1018 = vmul.f32 %v1003, 1.442695
        %v1019 = vpow.pop %v1018
        %v1020 = vsel %vm971, %v1005, 0.0
        %1021 = vadd.xlane.f32.xlu0 %v1020
        %v1022 = vpop.xlane.xlu0 %1021
        %v1023 = vsel %vm971, %v1007, 0.0
        %1024 = vadd.xlane.f32.xlu0 %v1023
        %v1025 = vpop.xlane.xlu0 %1024
        %v1026 = vsel %vm971, %v1009, 0.0
        %1027 = vadd.xlane.f32.xlu0 %v1026
        %v1028 = vpop.xlane.xlu0 %1027
        %v1029 = vsel %vm971, %v1011, 0.0
        %1030 = vadd.xlane.f32.xlu0 %v1029
        %v1031 = vpop.xlane.xlu0 %1030
        %v1032 = vsel %vm971, %v1013, 0.0
        %1033 = vadd.xlane.f32.xlu0 %v1032
        %v1034 = vpop.xlane.xlu0 %1033
        %v1035 = vsel %vm971, %v1015, 0.0
        %1036 = vadd.xlane.f32.xlu0 %v1035
        %v1037 = vpop.xlane.xlu0 %1036
        %v1038 = vsel %vm971, %v1017, 0.0
        %1039 = vadd.xlane.f32.xlu0 %v1038
        %v1040 = vpop.xlane.xlu0 %1039
        %v1041 = vsel %vm971, %v1019, 0.0
        %1042 = vadd.xlane.f32.xlu0 %v1041
        %v1043 = vpop.xlane.xlu0 %1042
        %v1044 = vrcp.pop %v1022
        %v1045 = vmul.f32 %v1005, %v1044
        %v1046 = vrcp.pop %v1025
        %v1047 = vmul.f32 %v1007, %v1046
        %v1048 = vrcp.pop %v1028
        %v1049 = vmul.f32 %v1009, %v1048
        %v1050 = vrcp.pop %v1031
        %v1051 = vmul.f32 %v1011, %v1050
        %v1052 = vrcp.pop %v1034
        %v1053 = vmul.f32 %v1013, %v1052
        %v1054 = vrcp.pop %v1037
        %v1055 = vmul.f32 %v1015, %v1054
        %v1056 = vrcp.pop %v1040
        %v1057 = vmul.f32 %v1017, %v1056
        %v1058 = vrcp.pop %v1043
        %v1059 = vmul.f32 %v1019, %v1058
        %1060 = vrot.lane.b32.xlu0 %v592, 96
        %v1061 = vpop.permute.xlu0 %1060
        %1062 = vrot.lane.b32.xlu0 %v593, 96
        %v1063 = vpop.permute.xlu0 %1062
        %v1067 = vsel %vm971, %v1045, 0
        %v1070 = vsel %vm971, %v1047, 0
        %1072 = vmatprep.subr.mxu0 0.0
        %1073 = vmatpush1.msra.mxu0 0.0
        %1074 = vmatprep.subr.mxu0 0.0
        %1075 = vmatpush1.msra.mxu0 0.0
        %1076 = vmatprep.subr.mxu0 0.0
        %1077 = vmatpush1.msra.mxu0 0.0
        %1078 = vmatprep.subr.mxu0 0.0
        %1079 = vmatpush1.msra.mxu0 0.0
        %1080 = vmatprep.subr.mxu0 0.0
        %1081 = vmatpush1.msra.mxu0 0.0
        %1082 = vmatprep.subr.mxu0 0.0
        %1083 = vmatpush1.msra.mxu0 0.0
        %1084 = vmatprep.subr.mxu0 0.0
        %1085 = vmatpush1.msra.mxu0 0.0
        %1086 = vmatprep.subr.mxu0 0.0
        %1087 = vmatpush1.msra.mxu0 0.0
        %1088 = vmatprep.subr.mxu0 0.0
        %1089 = vmatpush1.msra.mxu0 0.0
        %1090 = vmatprep.subr.mxu0 0.0
        %1091 = vmatpush1.msra.mxu0 0.0
        %1092 = vmatprep.subr.mxu0 0.0
        %1093 = vmatpush1.msra.mxu0 0.0
        %1094 = vmatprep.subr.mxu0 0.0
        %1095 = vmatpush1.msra.mxu0 0.0
        %1096 = vmatprep.subr.mxu0 0.0
        %1097 = vmatpush1.msra.mxu0 0.0
        %1098 = vmatprep.subr.mxu0 0.0
        %1099 = vmatpush1.msra.mxu0 0.0
        %1100 = vmatprep.subr.mxu0 0.0
        %1101 = vmatpush1.msra.mxu0 %v1063
        %1102 = vmatprep.subr.mxu0 0.0
        %1103 = vmatpush1.msra.mxu0 %v1061
        %1104 = vmatprep.subr.mxu0 0.0
        %1105 = vmatpush2.msra.mxu0 0.0
        %1106 = vmatprep.subr.mxu0 0.0
        %1107 = vmatpush2.msra.mxu0 0.0
        %1108 = vmatprep.subr.mxu0 0.0
        %1109 = vmatpush2.msra.mxu0 0.0
        %1110 = vmatprep.subr.mxu0 0.0
        %1111 = vmatpush2.msra.mxu0 0.0
        %1112 = vmatprep.subr.mxu0 0.0
        %1113 = vmatpush2.msra.mxu0 0.0
        %1114 = vmatprep.subr.mxu0 0.0
        %1115 = vmatpush2.msra.mxu0 0.0
        %1116 = vmatprep.subr.mxu0 0.0
        %1117 = vmatpush2.msra.mxu0 0.0
        %1118 = vmatprep.subr.mxu0 0.0
        %1119 = vmatpush2.msra.mxu0 0.0
        %1120 = vmatprep.subr.mxu0 0.0
        %1121 = vmatpush2.msra.mxu0 0.0
        %1122 = vmatprep.subr.mxu0 0.0
        %1123 = vmatpush2.msra.mxu0 0.0
        %1124 = vmatprep.subr.mxu0 0.0
        %1125 = vmatpush2.msra.mxu0 0.0
        %1126 = vmatprep.subr.mxu0 0.0
        %1127 = vmatpush2.msra.mxu0 0.0
        %1128 = vmatprep.subr.mxu0 0.0
        %1129 = vmatpush2.msra.mxu0 0.0
        %1130 = vmatprep.subr.mxu0 0.0
        %1131 = vmatpush2.msra.mxu0 0.0
        %1132 = vmatprep.subr.mxu0 0.0
        %1133 = vmatpush2.msra.mxu0 0.0
        %1134 = vmatprep.subr.mxu0 0.0
        %1135 = vmatpush2.msra.mxu0 0.0
        %1136 = vmatprep.mubr.f32.mxu0 0.0
        %1137 = vmatmul.mubr.f32.gmra.mxu0 %v1067
        %v1138 = vpop.f32.mrf.mxu0
        %v1139 = vadd.f32 0.0, %v1138
        %v1140 = vpop.f32.mrf.mxu0
        %1141 = vmatprep.mubr.f32.mxu0 0.0
        %1142 = vmatmul.mubr.f32.gmra.mxu0 %v1070
        %v1143 = vpop.f32.mrf.mxu0
        %v1144 = vadd.f32 0.0, %v1143
        %v1145 = vpop.f32.mrf.mxu0
        %1146 = vdwg.mxu0
        %1147 = vrot.lane.b32.xlu0 %v619, 96
        %v1148 = vpop.permute.xlu0 %1147
        %1149 = vrot.lane.b32.xlu0 %v621, 96
        %v1150 = vpop.permute.xlu0 %1149
        %v1154 = vsel %vm971, %v1049, 0
        %v1157 = vsel %vm971, %v1051, 0
        %1159 = vmatprep.subr.mxu0 0.0
        %1160 = vmatpush1.msra.mxu0 0.0
        %1161 = vmatprep.subr.mxu0 0.0
        %1162 = vmatpush1.msra.mxu0 0.0
        %1163 = vmatprep.subr.mxu0 0.0
        %1164 = vmatpush1.msra.mxu0 0.0
        %1165 = vmatprep.subr.mxu0 0.0
        %1166 = vmatpush1.msra.mxu0 0.0
        %1167 = vmatprep.subr.mxu0 0.0
        %1168 = vmatpush1.msra.mxu0 0.0
        %1169 = vmatprep.subr.mxu0 0.0
        %1170 = vmatpush1.msra.mxu0 0.0
        %1171 = vmatprep.subr.mxu0 0.0
        %1172 = vmatpush1.msra.mxu0 0.0
        %1173 = vmatprep.subr.mxu0 0.0
        %1174 = vmatpush1.msra.mxu0 0.0
        %1175 = vmatprep.subr.mxu0 0.0
        %1176 = vmatpush1.msra.mxu0 0.0
        %1177 = vmatprep.subr.mxu0 0.0
        %1178 = vmatpush1.msra.mxu0 0.0
        %1179 = vmatprep.subr.mxu0 0.0
        %1180 = vmatpush1.msra.mxu0 0.0
        %1181 = vmatprep.subr.mxu0 0.0
        %1182 = vmatpush1.msra.mxu0 0.0
        %1183 = vmatprep.subr.mxu0 0.0
        %1184 = vmatpush1.msra.mxu0 0.0
        %1185 = vmatprep.subr.mxu0 0.0
        %1186 = vmatpush1.msra.mxu0 0.0
        %1187 = vmatprep.subr.mxu0 0.0
        %1188 = vmatpush1.msra.mxu0 %v1150
        %1189 = vmatprep.subr.mxu0 0.0
        %1190 = vmatpush1.msra.mxu0 %v1148
        %1191 = vmatprep.subr.mxu0 0.0
        %1192 = vmatpush2.msra.mxu0 0.0
        %1193 = vmatprep.subr.mxu0 0.0
        %1194 = vmatpush2.msra.mxu0 0.0
        %1195 = vmatprep.subr.mxu0 0.0
        %1196 = vmatpush2.msra.mxu0 0.0
        %1197 = vmatprep.subr.mxu0 0.0
        %1198 = vmatpush2.msra.mxu0 0.0
        %1199 = vmatprep.subr.mxu0 0.0
        %1200 = vmatpush2.msra.mxu0 0.0
        %1201 = vmatprep.subr.mxu0 0.0
        %1202 = vmatpush2.msra.mxu0 0.0
        %1203 = vmatprep.subr.mxu0 0.0
        %1204 = vmatpush2.msra.mxu0 0.0
        %1205 = vmatprep.subr.mxu0 0.0
        %1206 = vmatpush2.msra.mxu0 0.0
        %1207 = vmatprep.subr.mxu0 0.0
        %1208 = vmatpush2.msra.mxu0 0.0
        %1209 = vmatprep.subr.mxu0 0.0
        %1210 = vmatpush2.msra.mxu0 0.0
        %1211 = vmatprep.subr.mxu0 0.0
        %1212 = vmatpush2.msra.mxu0 0.0
        %1213 = vmatprep.subr.mxu0 0.0
        %1214 = vmatpush2.msra.mxu0 0.0
        %1215 = vmatprep.subr.mxu0 0.0
        %1216 = vmatpush2.msra.mxu0 0.0
        %1217 = vmatprep.subr.mxu0 0.0
        %1218 = vmatpush2.msra.mxu0 0.0
        %1219 = vmatprep.subr.mxu0 0.0
        %1220 = vmatpush2.msra.mxu0 0.0
        %1221 = vmatprep.subr.mxu0 0.0
        %1222 = vmatpush2.msra.mxu0 0.0
        %1223 = vmatprep.mubr.f32.mxu0 0.0
        %1224 = vmatmul.mubr.f32.gmra.mxu0 %v1154
        %v1225 = vpop.f32.mrf.mxu0
        %v1226 = vadd.f32 0.0, %v1225
        %v1227 = vpop.f32.mrf.mxu0
        %1228 = vmatprep.mubr.f32.mxu0 0.0
        %1229 = vmatmul.mubr.f32.gmra.mxu0 %v1157
        %v1230 = vpop.f32.mrf.mxu0
        %v1231 = vadd.f32 0.0, %v1230
        %v1232 = vpop.f32.mrf.mxu0
        %1233 = vdwg.mxu0
        %1234 = vrot.lane.b32.xlu0 %v623, 96
        %v1235 = vpop.permute.xlu0 %1234
        %1236 = vrot.lane.b32.xlu0 %v625, 96
        %v1237 = vpop.permute.xlu0 %1236
        %v1241 = vsel %vm971, %v1053, 0
        %v1244 = vsel %vm971, %v1055, 0
        %1246 = vmatprep.subr.mxu0 0.0
        %1247 = vmatpush1.msra.mxu0 0.0
        %1248 = vmatprep.subr.mxu0 0.0
        %1249 = vmatpush1.msra.mxu0 0.0
        %1250 = vmatprep.subr.mxu0 0.0
        %1251 = vmatpush1.msra.mxu0 0.0
        %1252 = vmatprep.subr.mxu0 0.0
        %1253 = vmatpush1.msra.mxu0 0.0
        %1254 = vmatprep.subr.mxu0 0.0
        %1255 = vmatpush1.msra.mxu0 0.0
        %1256 = vmatprep.subr.mxu0 0.0
        %1257 = vmatpush1.msra.mxu0 0.0
        %1258 = vmatprep.subr.mxu0 0.0
        %1259 = vmatpush1.msra.mxu0 0.0
        %1260 = vmatprep.subr.mxu0 0.0
        %1261 = vmatpush1.msra.mxu0 0.0
        %1262 = vmatprep.subr.mxu0 0.0
        %1263 = vmatpush1.msra.mxu0 0.0
        %1264 = vmatprep.subr.mxu0 0.0
        %1265 = vmatpush1.msra.mxu0 0.0
        %1266 = vmatprep.subr.mxu0 0.0
        %1267 = vmatpush1.msra.mxu0 0.0
        %1268 = vmatprep.subr.mxu0 0.0
        %1269 = vmatpush1.msra.mxu0 0.0
        %1270 = vmatprep.subr.mxu0 0.0
        %1271 = vmatpush1.msra.mxu0 0.0
        %1272 = vmatprep.subr.mxu0 0.0
        %1273 = vmatpush1.msra.mxu0 0.0
        %1274 = vmatprep.subr.mxu0 0.0
        %1275 = vmatpush1.msra.mxu0 %v1237
        %1276 = vmatprep.subr.mxu0 0.0
        %1277 = vmatpush1.msra.mxu0 %v1235
        %1278 = vmatprep.subr.mxu0 0.0
        %1279 = vmatpush2.msra.mxu0 0.0
        %1280 = vmatprep.subr.mxu0 0.0
        %1281 = vmatpush2.msra.mxu0 0.0
        %1282 = vmatprep.subr.mxu0 0.0
        %1283 = vmatpush2.msra.mxu0 0.0
        %1284 = vmatprep.subr.mxu0 0.0
        %1285 = vmatpush2.msra.mxu0 0.0
        %1286 = vmatprep.subr.mxu0 0.0
        %1287 = vmatpush2.msra.mxu0 0.0
        %1288 = vmatprep.subr.mxu0 0.0
        %1289 = vmatpush2.msra.mxu0 0.0
        %1290 = vmatprep.subr.mxu0 0.0
        %1291 = vmatpush2.msra.mxu0 0.0
        %1292 = vmatprep.subr.mxu0 0.0
        %1293 = vmatpush2.msra.mxu0 0.0
        %1294 = vmatprep.subr.mxu0 0.0
        %1295 = vmatpush2.msra.mxu0 0.0
        %1296 = vmatprep.subr.mxu0 0.0
        %1297 = vmatpush2.msra.mxu0 0.0
        %1298 = vmatprep.subr.mxu0 0.0
        %1299 = vmatpush2.msra.mxu0 0.0
        %1300 = vmatprep.subr.mxu0 0.0
        %1301 = vmatpush2.msra.mxu0 0.0
        %1302 = vmatprep.subr.mxu0 0.0
        %1303 = vmatpush2.msra.mxu0 0.0
        %1304 = vmatprep.subr.mxu0 0.0
        %1305 = vmatpush2.msra.mxu0 0.0
        %1306 = vmatprep.subr.mxu0 0.0
        %1307 = vmatpush2.msra.mxu0 0.0
        %1308 = vmatprep.subr.mxu0 0.0
        %1309 = vmatpush2.msra.mxu0 0.0
        %1310 = vmatprep.mubr.f32.mxu0 0.0
        %1311 = vmatmul.mubr.f32.gmra.mxu0 %v1241
        %v1312 = vpop.f32.mrf.mxu0
        %v1313 = vadd.f32 0.0, %v1312
        %v1314 = vpop.f32.mrf.mxu0
        %1315 = vmatprep.mubr.f32.mxu0 0.0
        %1316 = vmatmul.mubr.f32.gmra.mxu0 %v1244
        %v1317 = vpop.f32.mrf.mxu0
        %v1318 = vadd.f32 0.0, %v1317
        %v1319 = vpop.f32.mrf.mxu0
        %1320 = vdwg.mxu0
        %1321 = vrot.lane.b32.xlu0 %v627, 96
        %v1322 = vpop.permute.xlu0 %1321
        %1323 = vrot.lane.b32.xlu0 %v629, 96
        %v1324 = vpop.permute.xlu0 %1323
        %v1328 = vsel %vm971, %v1057, 0
        %v1331 = vsel %vm971, %v1059, 0
        %1333 = vmatprep.subr.mxu0 0.0
        %1334 = vmatpush1.msra.mxu0 0.0
        %1335 = vmatprep.subr.mxu0 0.0
        %1336 = vmatpush1.msra.mxu0 0.0
        %1337 = vmatprep.subr.mxu0 0.0
        %1338 = vmatpush1.msra.mxu0 0.0
        %1339 = vmatprep.subr.mxu0 0.0
        %1340 = vmatpush1.msra.mxu0 0.0
        %1341 = vmatprep.subr.mxu0 0.0
        %1342 = vmatpush1.msra.mxu0 0.0
        %1343 = vmatprep.subr.mxu0 0.0
        %1344 = vmatpush1.msra.mxu0 0.0
        %1345 = vmatprep.subr.mxu0 0.0
        %1346 = vmatpush1.msra.mxu0 0.0
        %1347 = vmatprep.subr.mxu0 0.0
        %1348 = vmatpush1.msra.mxu0 0.0
        %1349 = vmatprep.subr.mxu0 0.0
        %1350 = vmatpush1.msra.mxu0 0.0
        %1351 = vmatprep.subr.mxu0 0.0
        %1352 = vmatpush1.msra.mxu0 0.0
        %1353 = vmatprep.subr.mxu0 0.0
        %1354 = vmatpush1.msra.mxu0 0.0
        %1355 = vmatprep.subr.mxu0 0.0
        %1356 = vmatpush1.msra.mxu0 0.0
        %1357 = vmatprep.subr.mxu0 0.0
        %1358 = vmatpush1.msra.mxu0 0.0
        %1359 = vmatprep.subr.mxu0 0.0
        %1360 = vmatpush1.msra.mxu0 0.0
        %1361 = vmatprep.subr.mxu0 0.0
        %1362 = vmatpush1.msra.mxu0 %v1324
        %1363 = vmatprep.subr.mxu0 0.0
        %1364 = vmatpush1.msra.mxu0 %v1322
        %1365 = vmatprep.subr.mxu0 0.0
        %1366 = vmatpush2.msra.mxu0 0.0
        %1367 = vmatprep.subr.mxu0 0.0
        %1368 = vmatpush2.msra.mxu0 0.0
        %1369 = vmatprep.subr.mxu0 0.0
        %1370 = vmatpush2.msra.mxu0 0.0
        %1371 = vmatprep.subr.mxu0 0.0
        %1372 = vmatpush2.msra.mxu0 0.0
        %1373 = vmatprep.subr.mxu0 0.0
        %1374 = vmatpush2.msra.mxu0 0.0
        %1375 = vmatprep.subr.mxu0 0.0
        %1376 = vmatpush2.msra.mxu0 0.0
        %1377 = vmatprep.subr.mxu0 0.0
        %1378 = vmatpush2.msra.mxu0 0.0
        %1379 = vmatprep.subr.mxu0 0.0
        %1380 = vmatpush2.msra.mxu0 0.0
        %1381 = vmatprep.subr.mxu0 0.0
        %1382 = vmatpush2.msra.mxu0 0.0
        %1383 = vmatprep.subr.mxu0 0.0
        %1384 = vmatpush2.msra.mxu0 0.0
        %1385 = vmatprep.subr.mxu0 0.0
        %1386 = vmatpush2.msra.mxu0 0.0
        %1387 = vmatprep.subr.mxu0 0.0
        %1388 = vmatpush2.msra.mxu0 0.0
        %1389 = vmatprep.subr.mxu0 0.0
        %1390 = vmatpush2.msra.mxu0 0.0
        %1391 = vmatprep.subr.mxu0 0.0
        %1392 = vmatpush2.msra.mxu0 0.0
        %1393 = vmatprep.subr.mxu0 0.0
        %1394 = vmatpush2.msra.mxu0 0.0
        %1395 = vmatprep.subr.mxu0 0.0
        %1396 = vmatpush2.msra.mxu0 0.0
        %1397 = vmatprep.mubr.f32.mxu0 0.0
        %1398 = vmatmul.mubr.f32.gmra.mxu0 %v1328
        %v1399 = vpop.f32.mrf.mxu0
        %v1400 = vadd.f32 0.0, %v1399
        %v1401 = vpop.f32.mrf.mxu0
        %1402 = vmatprep.mubr.f32.mxu0 0.0
        %1403 = vmatmul.mubr.f32.gmra.mxu0 %v1331
        %v1404 = vpop.f32.mrf.mxu0
        %v1405 = vadd.f32 0.0, %v1404
        %v1406 = vpop.f32.mrf.mxu0
        %1407 = vdwg.mxu0
        %v1408 = vld [vmem:[%s8] sm:$0xff]
        %s1409 = scalar_lea.vmem %s8, 8
        %v1410 = vld [vmem:[%s1409] sm:$0xff]
        %v1412 = vsel %vm630, %v1226, 0
        %v1415 = vsel %vm630, %v1231, 0
        %1417 = vmatprep.subr.mxu0 0.0
        %1418 = vmatpush1.msra.mxu0 0.0
        %1419 = vmatprep.subr.mxu0 0.0
        %1420 = vmatpush1.msra.mxu0 0.0
        %1421 = vmatprep.subr.mxu0 0.0
        %1422 = vmatpush1.msra.mxu0 0.0
        %1423 = vmatprep.subr.mxu0 0.0
        %1424 = vmatpush1.msra.mxu0 0.0
        %1425 = vmatprep.subr.mxu0 0.0
        %1426 = vmatpush1.msra.mxu0 0.0
        %1427 = vmatprep.subr.mxu0 0.0
        %1428 = vmatpush1.msra.mxu0 0.0
        %1429 = vmatprep.subr.mxu0 0.0
        %1430 = vmatpush1.msra.mxu0 0.0
        %1431 = vmatprep.subr.mxu0 0.0
        %1432 = vmatpush1.msra.mxu0 0.0
        %1433 = vmatprep.subr.mxu0 0.0
        %1434 = vmatpush1.msra.mxu0 0.0
        %1435 = vmatprep.subr.mxu0 0.0
        %1436 = vmatpush1.msra.mxu0 0.0
        %1437 = vmatprep.subr.mxu0 0.0
        %1438 = vmatpush1.msra.mxu0 0.0
        %1439 = vmatprep.subr.mxu0 0.0
        %1440 = vmatpush1.msra.mxu0 0.0
        %1441 = vmatprep.subr.mxu0 0.0
        %1442 = vmatpush1.msra.mxu0 0.0
        %1443 = vmatprep.subr.mxu0 0.0
        %1444 = vmatpush1.msra.mxu0 0.0
        %1445 = vmatprep.subr.mxu0 0.0
        %1446 = vmatpush1.msra.mxu0 0.0
        %1447 = vmatprep.subr.mxu0 0.0
        %1448 = vmatpush1.msra.mxu0 %v1410
        %1449 = vmatprep.subr.mxu0 0.0
        %1450 = vmatpush2.msra.mxu0 0.0
        %1451 = vmatprep.subr.mxu0 0.0
        %1452 = vmatpush2.msra.mxu0 0.0
        %1453 = vmatprep.subr.mxu0 0.0
        %1454 = vmatpush2.msra.mxu0 0.0
        %1455 = vmatprep.subr.mxu0 0.0
        %1456 = vmatpush2.msra.mxu0 0.0
        %1457 = vmatprep.subr.mxu0 0.0
        %1458 = vmatpush2.msra.mxu0 0.0
        %1459 = vmatprep.subr.mxu0 0.0
        %1460 = vmatpush2.msra.mxu0 0.0
        %1461 = vmatprep.subr.mxu0 0.0
        %1462 = vmatpush2.msra.mxu0 0.0
        %1463 = vmatprep.subr.mxu0 0.0
        %1464 = vmatpush2.msra.mxu0 0.0
        %1465 = vmatprep.subr.mxu0 0.0
        %1466 = vmatpush2.msra.mxu0 0.0
        %1467 = vmatprep.subr.mxu0 0.0
        %1468 = vmatpush2.msra.mxu0 0.0
        %1469 = vmatprep.subr.mxu0 0.0
        %1470 = vmatpush2.msra.mxu0 0.0
        %1471 = vmatprep.subr.mxu0 0.0
        %1472 = vmatpush2.msra.mxu0 0.0
        %1473 = vmatprep.subr.mxu0 0.0
        %1474 = vmatpush2.msra.mxu0 0.0
        %1475 = vmatprep.subr.mxu0 0.0
        %1476 = vmatpush2.msra.mxu0 0.0
        %1477 = vmatprep.subr.mxu0 0.0
        %1478 = vmatpush2.msra.mxu0 0.0
        %1479 = vmatprep.subr.mxu0 0.0
        %1480 = vmatpush2.msra.mxu0 0.0
        %1481 = vmatprep.mubr.f32.mxu0 0.0
        %1482 = vmatmul.mubr.f32.gmra.mxu0 %v1412
        %v1483 = vpop.f32.mrf.mxu0
        %v1484 = vadd.f32 0.0, %v1483
        %v1485 = vpop.f32.mrf.mxu0
        %1486 = vmatprep.mubr.f32.mxu0 0.0
        %1487 = vmatmul.mubr.f32.gmra.mxu0 %v1415
        %v1488 = vpop.f32.mrf.mxu0
        %v1489 = vadd.f32 0.0, %v1488
        %v1490 = vpop.f32.mrf.mxu0
        %1491 = vdwg.mxu0
        %v1493 = vsel %vm630, %v1139, 0
        %v1496 = vsel %vm630, %v1144, 0
        %1498 = vmatprep.subr.mxu0 0.0
        %1499 = vmatpush1.msra.mxu0 0.0
        %1500 = vmatprep.subr.mxu0 0.0
        %1501 = vmatpush1.msra.mxu0 0.0
        %1502 = vmatprep.subr.mxu0 0.0
        %1503 = vmatpush1.msra.mxu0 0.0
        %1504 = vmatprep.subr.mxu0 0.0
        %1505 = vmatpush1.msra.mxu0 0.0
        %1506 = vmatprep.subr.mxu0 0.0
        %1507 = vmatpush1.msra.mxu0 0.0
        %1508 = vmatprep.subr.mxu0 0.0
        %1509 = vmatpush1.msra.mxu0 0.0
        %1510 = vmatprep.subr.mxu0 0.0
        %1511 = vmatpush1.msra.mxu0 0.0
        %1512 = vmatprep.subr.mxu0 0.0
        %1513 = vmatpush1.msra.mxu0 0.0
        %1514 = vmatprep.subr.mxu0 0.0
        %1515 = vmatpush1.msra.mxu0 0.0
        %1516 = vmatprep.subr.mxu0 0.0
        %1517 = vmatpush1.msra.mxu0 0.0
        %1518 = vmatprep.subr.mxu0 0.0
        %1519 = vmatpush1.msra.mxu0 0.0
        %1520 = vmatprep.subr.mxu0 0.0
        %1521 = vmatpush1.msra.mxu0 0.0
        %1522 = vmatprep.subr.mxu0 0.0
        %1523 = vmatpush1.msra.mxu0 0.0
        %1524 = vmatprep.subr.mxu0 0.0
        %1525 = vmatpush1.msra.mxu0 0.0
        %1526 = vmatprep.subr.mxu0 0.0
        %1527 = vmatpush1.msra.mxu0 0.0
        %1528 = vmatprep.subr.mxu0 0.0
        %1529 = vmatpush1.msra.mxu0 %v1408
        %1530 = vmatprep.subr.mxu0 0.0
        %1531 = vmatpush2.msra.mxu0 0.0
        %1532 = vmatprep.subr.mxu0 0.0
        %1533 = vmatpush2.msra.mxu0 0.0
        %1534 = vmatprep.subr.mxu0 0.0
        %1535 = vmatpush2.msra.mxu0 0.0
        %1536 = vmatprep.subr.mxu0 0.0
        %1537 = vmatpush2.msra.mxu0 0.0
        %1538 = vmatprep.subr.mxu0 0.0
        %1539 = vmatpush2.msra.mxu0 0.0
        %1540 = vmatprep.subr.mxu0 0.0
        %1541 = vmatpush2.msra.mxu0 0.0
        %1542 = vmatprep.subr.mxu0 0.0
        %1543 = vmatpush2.msra.mxu0 0.0
        %1544 = vmatprep.subr.mxu0 0.0
        %1545 = vmatpush2.msra.mxu0 0.0
        %1546 = vmatprep.subr.mxu0 0.0
        %1547 = vmatpush2.msra.mxu0 0.0
        %1548 = vmatprep.subr.mxu0 0.0
        %1549 = vmatpush2.msra.mxu0 0.0
        %1550 = vmatprep.subr.mxu0 0.0
        %1551 = vmatpush2.msra.mxu0 0.0
        %1552 = vmatprep.subr.mxu0 0.0
        %1553 = vmatpush2.msra.mxu0 0.0
        %1554 = vmatprep.subr.mxu0 0.0
        %1555 = vmatpush2.msra.mxu0 0.0
        %1556 = vmatprep.subr.mxu0 0.0
        %1557 = vmatpush2.msra.mxu0 0.0
        %1558 = vmatprep.subr.mxu0 0.0
        %1559 = vmatpush2.msra.mxu0 0.0
        %1560 = vmatprep.subr.mxu0 0.0
        %1561 = vmatpush2.msra.mxu0 0.0
        %1562 = vmatprep.mubr.f32.mxu0 0.0
        %1563 = vmatmul.mubr.f32.gmra.mxu0 %v1493
        %v1564 = vpop.f32.mrf.mxu0
        %v1565 = vadd.f32 %v1484, %v1564
        %v1566 = vpop.f32.mrf.mxu0
        %1567 = vmatprep.mubr.f32.mxu0 0.0
        %1568 = vmatmul.mubr.f32.gmra.mxu0 %v1496
        %v1569 = vpop.f32.mrf.mxu0
        %v1570 = vadd.f32 %v1489, %v1569
        %v1571 = vpop.f32.mrf.mxu0
        %1572 = vdwg.mxu0
        %s1573 = scalar_lea.vmem %s8, 16
        %v1574 = vld [vmem:[%s1573] sm:$0xff]
        %v1576 = vsel %vm630, %v1313, 0
        %v1579 = vsel %vm630, %v1318, 0
        %1581 = vmatprep.subr.mxu0 0.0
        %1582 = vmatpush1.msra.mxu0 0.0
        %1583 = vmatprep.subr.mxu0 0.0
        %1584 = vmatpush1.msra.mxu0 0.0
        %1585 = vmatprep.subr.mxu0 0.0
        %1586 = vmatpush1.msra.mxu0 0.0
        %1587 = vmatprep.subr.mxu0 0.0
        %1588 = vmatpush1.msra.mxu0 0.0
        %1589 = vmatprep.subr.mxu0 0.0
        %1590 = vmatpush1.msra.mxu0 0.0
        %1591 = vmatprep.subr.mxu0 0.0
        %1592 = vmatpush1.msra.mxu0 0.0
        %1593 = vmatprep.subr.mxu0 0.0
        %1594 = vmatpush1.msra.mxu0 0.0
        %1595 = vmatprep.subr.mxu0 0.0
        %1596 = vmatpush1.msra.mxu0 0.0
        %1597 = vmatprep.subr.mxu0 0.0
        %1598 = vmatpush1.msra.mxu0 0.0
        %1599 = vmatprep.subr.mxu0 0.0
        %1600 = vmatpush1.msra.mxu0 0.0
        %1601 = vmatprep.subr.mxu0 0.0
        %1602 = vmatpush1.msra.mxu0 0.0
        %1603 = vmatprep.subr.mxu0 0.0
        %1604 = vmatpush1.msra.mxu0 0.0
        %1605 = vmatprep.subr.mxu0 0.0
        %1606 = vmatpush1.msra.mxu0 0.0
        %1607 = vmatprep.subr.mxu0 0.0
        %1608 = vmatpush1.msra.mxu0 0.0
        %1609 = vmatprep.subr.mxu0 0.0
        %1610 = vmatpush1.msra.mxu0 0.0
        %1611 = vmatprep.subr.mxu0 0.0
        %1612 = vmatpush1.msra.mxu0 %v1574
        %1613 = vmatprep.subr.mxu0 0.0
        %1614 = vmatpush2.msra.mxu0 0.0
        %1615 = vmatprep.subr.mxu0 0.0
        %1616 = vmatpush2.msra.mxu0 0.0
        %1617 = vmatprep.subr.mxu0 0.0
        %1618 = vmatpush2.msra.mxu0 0.0
        %1619 = vmatprep.subr.mxu0 0.0
        %1620 = vmatpush2.msra.mxu0 0.0
        %1621 = vmatprep.subr.mxu0 0.0
        %1622 = vmatpush2.msra.mxu0 0.0
        %1623 = vmatprep.subr.mxu0 0.0
        %1624 = vmatpush2.msra.mxu0 0.0
        %1625 = vmatprep.subr.mxu0 0.0
        %1626 = vmatpush2.msra.mxu0 0.0
        %1627 = vmatprep.subr.mxu0 0.0
        %1628 = vmatpush2.msra.mxu0 0.0
        %1629 = vmatprep.subr.mxu0 0.0
        %1630 = vmatpush2.msra.mxu0 0.0
        %1631 = vmatprep.subr.mxu0 0.0
        %1632 = vmatpush2.msra.mxu0 0.0
        %1633 = vmatprep.subr.mxu0 0.0
        %1634 = vmatpush2.msra.mxu0 0.0
        %1635 = vmatprep.subr.mxu0 0.0
        %1636 = vmatpush2.msra.mxu0 0.0
        %1637 = vmatprep.subr.mxu0 0.0
        %1638 = vmatpush2.msra.mxu0 0.0
        %1639 = vmatprep.subr.mxu0 0.0
        %1640 = vmatpush2.msra.mxu0 0.0
        %1641 = vmatprep.subr.mxu0 0.0
        %1642 = vmatpush2.msra.mxu0 0.0
        %1643 = vmatprep.subr.mxu0 0.0
        %1644 = vmatpush2.msra.mxu0 0.0
        %1645 = vmatprep.mubr.f32.mxu0 0.0
        %1646 = vmatmul.mubr.f32.gmra.mxu0 %v1576
        %v1647 = vpop.f32.mrf.mxu0
        %v1648 = vadd.f32 0.0, %v1647
        %v1649 = vpop.f32.mrf.mxu0
        %1650 = vmatprep.mubr.f32.mxu0 0.0
        %1651 = vmatmul.mubr.f32.gmra.mxu0 %v1579
        %v1652 = vpop.f32.mrf.mxu0
        %v1653 = vadd.f32 0.0, %v1652
        %v1654 = vpop.f32.mrf.mxu0
        %1655 = vdwg.mxu0
        %v1656 = vadd.f32 %v1565, %v1648
        %v1657 = vadd.f32 %v1570, %v1653
        %s1658 = scalar_lea.vmem %s8, 24
        %v1659 = vld [vmem:[%s1658] sm:$0xff]
        %v1661 = vsel %vm630, %v1400, 0
        %v1664 = vsel %vm630, %v1405, 0
        %1666 = vmatprep.subr.mxu0 0.0
        %1667 = vmatpush1.msra.mxu0 0.0
        %1668 = vmatprep.subr.mxu0 0.0
        %1669 = vmatpush1.msra.mxu0 0.0
        %1670 = vmatprep.subr.mxu0 0.0
        %1671 = vmatpush1.msra.mxu0 0.0
        %1672 = vmatprep.subr.mxu0 0.0
        %1673 = vmatpush1.msra.mxu0 0.0
        %1674 = vmatprep.subr.mxu0 0.0
        %1675 = vmatpush1.msra.mxu0 0.0
        %1676 = vmatprep.subr.mxu0 0.0
        %1677 = vmatpush1.msra.mxu0 0.0
        %1678 = vmatprep.subr.mxu0 0.0
        %1679 = vmatpush1.msra.mxu0 0.0
        %1680 = vmatprep.subr.mxu0 0.0
        %1681 = vmatpush1.msra.mxu0 0.0
        %1682 = vmatprep.subr.mxu0 0.0
        %1683 = vmatpush1.msra.mxu0 0.0
        %1684 = vmatprep.subr.mxu0 0.0
        %1685 = vmatpush1.msra.mxu0 0.0
        %1686 = vmatprep.subr.mxu0 0.0
        %1687 = vmatpush1.msra.mxu0 0.0
        %1688 = vmatprep.subr.mxu0 0.0
        %1689 = vmatpush1.msra.mxu0 0.0
        %1690 = vmatprep.subr.mxu0 0.0
        %1691 = vmatpush1.msra.mxu0 0.0
        %1692 = vmatprep.subr.mxu0 0.0
        %1693 = vmatpush1.msra.mxu0 0.0
        %1694 = vmatprep.subr.mxu0 0.0
        %1695 = vmatpush1.msra.mxu0 0.0
        %1696 = vmatprep.subr.mxu0 0.0
        %1697 = vmatpush1.msra.mxu0 %v1659
        %1698 = vmatprep.subr.mxu0 0.0
        %1699 = vmatpush2.msra.mxu0 0.0
        %1700 = vmatprep.subr.mxu0 0.0
        %1701 = vmatpush2.msra.mxu0 0.0
        %1702 = vmatprep.subr.mxu0 0.0
        %1703 = vmatpush2.msra.mxu0 0.0
        %1704 = vmatprep.subr.mxu0 0.0
        %1705 = vmatpush2.msra.mxu0 0.0
        %1706 = vmatprep.subr.mxu0 0.0
        %1707 = vmatpush2.msra.mxu0 0.0
        %1708 = vmatprep.subr.mxu0 0.0
        %1709 = vmatpush2.msra.mxu0 0.0
        %1710 = vmatprep.subr.mxu0 0.0
        %1711 = vmatpush2.msra.mxu0 0.0
        %1712 = vmatprep.subr.mxu0 0.0
        %1713 = vmatpush2.msra.mxu0 0.0
        %1714 = vmatprep.subr.mxu0 0.0
        %1715 = vmatpush2.msra.mxu0 0.0
        %1716 = vmatprep.subr.mxu0 0.0
        %1717 = vmatpush2.msra.mxu0 0.0
        %1718 = vmatprep.subr.mxu0 0.0
        %1719 = vmatpush2.msra.mxu0 0.0
        %1720 = vmatprep.subr.mxu0 0.0
        %1721 = vmatpush2.msra.mxu0 0.0
        %1722 = vmatprep.subr.mxu0 0.0
        %1723 = vmatpush2.msra.mxu0 0.0
        %1724 = vmatprep.subr.mxu0 0.0
        %1725 = vmatpush2.msra.mxu0 0.0
        %1726 = vmatprep.subr.mxu0 0.0
        %1727 = vmatpush2.msra.mxu0 0.0
        %1728 = vmatprep.subr.mxu0 0.0
        %1729 = vmatpush2.msra.mxu0 0.0
        %1730 = vmatprep.mubr.f32.mxu0 0.0
        %1731 = vmatmul.mubr.f32.gmra.mxu0 %v1661
        %v1732 = vpop.f32.mrf.mxu0
        %v1733 = vadd.f32 0.0, %v1732
        %v1734 = vpop.f32.mrf.mxu0
        %1735 = vmatprep.mubr.f32.mxu0 0.0
        %1736 = vmatmul.mubr.f32.gmra.mxu0 %v1664
        %v1737 = vpop.f32.mrf.mxu0
        %v1738 = vadd.f32 0.0, %v1737
        %v1739 = vpop.f32.mrf.mxu0
        %1740 = vdwg.mxu0
        %v1741 = vadd.f32 %v1656, %v1733
        %v1742 = vadd.f32 %v1657, %v1738
        %v1743 = vld [vmem:[%s9] sm:$0x1]
        %v1745 = vlaneseq
        %v1746 = vshrl.u32 %v1745, 7
        %v1747 = vsub.s32 0, %v1746
        %v1748 = vrot.slane %v1743, %v1747
        %v1750 = vadd.f32 %v1741, %v1748
        %v1751 = vadd.f32 %v1742, %v1748
        %1752 = vst.msk [vmem:[%s352] sm:$0xff] %vm448, %v1750
        %1753 = vst.msk [vmem:[%s352 + $0x8] sm:$0xff] %vm448, %v1751
        %s1754 = sand.u32 %s247, 1
        %s1755 = scalar_lea.sflag [#allocation3], %s1754
        %s1756 = sand.u32 %s247, 1
        %s1757 = smul.addr %s1756, 16
        %s1758 = scalar_lea.vmem [#allocation2], %s1757
        // Predicated region
        $region61: #{tpu_custom_call.1} parent=59 // pred_check
          %p1759 = pneg %p257
        $region62: #{tpu_custom_call.1} parent=59 // pred_check_branch
          %1761 = sbr.rel (%p1759) target = $region64
        $region63: #{tpu_custom_call.1} parent=59 // pred_region
          %s1763 = ssub.s32 256, 256
          %1764 = vsyncadd %s1755, %s1763
          %s1765 = smul.addr %s24, 2
          %s1766 = smul.addr %s1765, 128
          %s1767 = scalar_lea.hbm %s10, %s1766
          %s1768 = sshll.u32 %s1758, 4
          %s1769 = int_to_ptr.vmem [resolvable:$true] %s1768
          %1774 = dma.vmem_to_hbm [thread:$0]  %s1769, 256, %s1767, %s1755, 128, 128, 8
        $region64: #{tpu_custom_call.1} parent=59 // pred_fallthru
          _
      $region60: #{tpu_custom_call.1} parent=5 // pred_fallthru
        _
      %p1775 = scmp.le.s32.totalorder 2, %s19
      // Predicated region
      $region65: #{tpu_custom_call.1} parent=5 // pred_check
        %p1776 = pneg %p1775
      $region66: #{tpu_custom_call.1} parent=5 // pred_check_branch
        %1778 = sbr.rel (%p1776) target = $region68
      $region67: #{tpu_custom_call.1} parent=5 // pred_region
        %s1779 = ssub.s32 %s19, 2
        // Predicated region
        $region69: #{tpu_custom_call.1} parent=67 // pred_check
          %p1780 = pneg %p263
        $region70: #{tpu_custom_call.1} parent=67 // pred_check_branch
          %1782 = sbr.rel (%p1780) target = $region72
        $region71: #{tpu_custom_call.1} parent=67 // pred_region
          %s1783 = sand.u32 %s248, 1
          %s1784 = scalar_lea.sflag [#allocation3], %s1783
          %s1785 = sand.u32 %s248, 1
          %s1786 = smul.addr %s1785, 16
          %s1787 = scalar_lea.vmem [#allocation2], %s1786
          %1788 = dma.done %s1784, 256
        $region72: #{tpu_custom_call.1} parent=67 // pred_fallthru
          _
      $region68: #{tpu_custom_call.1} parent=5 // pred_fallthru
        _
    $region6: #{tpu_custom_call.1} parent=1 // loop_footer
      %s23 = sadd.s32 1, %s19
    $region7: #{tpu_custom_call.1} parent=1 // loop_footer_branch
      %18 = sbr.rel target = $region3
    $region8: #{tpu_custom_call.1} parent=1 // loop_exit
      _
    %1789 = vsyncpa [#allocation3], 1
    %s1790 = scalar_lea.sflag [#allocation3], 1
    %1791 = vsyncpa %s1790, 1

</llo_original>
